<compile_context>
chip_gen: v7x
topology: tpu7x:2x2x1
jax: 0.10.0
libtpu: 0.0.40
codegen_flags: <defaults>
</compile_context>

<pallas_src>
import functools

import jax
import jax.numpy as jnp
from jax.experimental import pallas as pl
from jax.experimental.pallas import tpu as pltpu

# ---------------- synthetic BERT config (small) ----------------
VOCAB = 100
VOCAB_PAD = 128                  # word-embedding table padded to 128 rows (lane-friendly one-hot)
TYPE_VOCAB = 2
MAX_POS = 32
HIDDEN = 32
N_HEADS = 2
HEAD_DIM = HIDDEN // N_HEADS
FFN = 64
N_LAYERS = 2
NUM_CLASS = 5
N_PAD = 128                      # lane-dense padded classifier width
LN_EPS = 1e-12
ATTN_SCALE = 1.0 / (HEAD_DIM ** 0.5)


def _ln(x, g, b):
    """LayerNorm over the last axis in f32 (g/b broadcast from (1, H))."""
    mu = jnp.mean(x, axis=-1, keepdims=True)
    xc = x - mu
    var = jnp.mean(xc * xc, axis=-1, keepdims=True)
    return xc * jax.lax.rsqrt(var + LN_EPS) * g + b


# ---------------- single fused Pallas kernel ----------------
def _fused_bert_kernel(ids_ref, len_ref, idx_ref,
                       wemb_ref, pt_ref, eg_ref, eb_ref,
                       wqkv_ref, bqkv_ref, wo_ref, bo_ref, ln1g_ref, ln1b_ref,
                       w1_ref, b1_ref, w2_ref, b2_ref, ln2g_ref, ln2b_ref,
                       mw1_ref, mb1_ref, mw2_ref, mb2_ref,
                       o_ref, *, B, S):
    H, D = HIDDEN, HEAD_DIM
    BS = B * S
    R = o_ref.shape[0]                                   # B * (S - 2)

    # ---- embeddings: word lookup as an exact one-hot matmul on the MXU (no dynamic gather)
    word_oh = (jax.lax.broadcasted_iota(jnp.int32, (BS, VOCAB_PAD), 1)
               == ids_ref[...]).astype(jnp.float32)                          # (BS, 128)
    emb = jnp.dot(word_oh, wemb_ref[...], preferred_element_type=jnp.float32)  # (BS, H)
    # + position + token-type embeddings (pre-summed at pack time, broadcast over batch)
    emb = (emb.reshape(B, S, H) + pt_ref[0:S, :][None, :, :]).reshape(BS, H)
    x = _ln(emb, eg_ref[...], eb_ref[...])                                    # (BS, H) f32

    # ---- additive attention bias from seq_len_to_mask(input_len)
    col = jax.lax.broadcasted_iota(jnp.int32, (B, S), 1)
    bias = jnp.where(col < len_ref[...], 0.0, -10000.0).astype(jnp.float32)[:, None, :]  # (B,1,S)

    # ---- encoder layers, fully unrolled (N_LAYERS = 2), all weights already in VMEM
    for l in range(N_LAYERS):
        # fused QKV projection: one (BS, H) x (H, 3H) matmul, bf16 operands, f32 acc
        qkv = jnp.dot(x.astype(jnp.bfloat16), wqkv_ref[l],
                      preferred_element_type=jnp.float32) + bqkv_ref[l]       # (BS, 3H)

        ctx_parts = []
        for h in range(N_HEADS):                         # heads handled via lane slices
            qh = qkv[:, h * D:(h + 1) * D].reshape(B, S, D).astype(jnp.bfloat16)
            kh = qkv[:, H + h * D:H + (h + 1) * D].reshape(B, S, D).astype(jnp.bfloat16)
            vh = qkv[:, 2 * H + h * D:2 * H + (h + 1) * D].reshape(B, S, D).astype(jnp.bfloat16)
            s = jnp.einsum('bqd,bkd->bqk', qh, kh,
                           preferred_element_type=jnp.float32) * ATTN_SCALE + bias
            s = s - jnp.max(s, axis=-1, keepdims=True)   # stable softmax in f32
            p = jnp.exp(s)
            p = p * pl.reciprocal(jnp.sum(p, axis=-1, keepdims=True), approx=True)
            oh = jnp.einsum('bqk,bkd->bqd', p.astype(jnp.bfloat16), vh,
                            preferred_element_type=jnp.float32)
            ctx_parts.append(oh.reshape(BS, D))
        ctx = jnp.concatenate(ctx_parts, axis=-1)                             # (BS, H)

        attn_out = jnp.dot(ctx.astype(jnp.bfloat16), wo_ref[l],
                           preferred_element_type=jnp.float32) + bo_ref[l]
        x = _ln(x + attn_out, ln1g_ref[l], ln1b_ref[l])

        hmid = jax.nn.gelu(
            jnp.dot(x.astype(jnp.bfloat16), w1_ref[l],
                    preferred_element_type=jnp.float32) + b1_ref[l],
            approximate=True)
        ffn = jnp.dot(hmid.astype(jnp.bfloat16), w2_ref[l],
                      preferred_element_type=jnp.float32) + b2_ref[l]
        x = _ln(x + ffn, ln2g_ref[l], ln2b_ref[l])

    # ---- first-BPE gather as an exact one-hot matmul on the MXU (no dynamic VMEM gather)
    sel = (jax.lax.broadcasted_iota(jnp.int32, (R, BS), 1) == idx_ref[...]).astype(jnp.float32)
    g = jnp.dot(sel, x, preferred_element_type=jnp.float32)                   # (R, H)

    # ---- MLP head: Linear(H,H) -> Dropout(0.3) -> Linear(H, NUM_CLASS padded to 128 lanes)
    h1 = jnp.dot(g.astype(jnp.bfloat16), mw1_ref[...],
                 preferred_element_type=jnp.float32) + mb1_ref[...]
    # TODO(synk): Dropout(p=0.3) is identity in eval mode; training-mode RNG dropout not implemented.
    pred = jnp.dot(h1.astype(jnp.bfloat16), mw2_ref[...],
                   preferred_element_type=jnp.float32) + mb2_ref[...]         # (R, 128)
    o_ref[...] = pred.astype(o_ref.dtype)


# ---------------- parameter packing (runs ONCE, outside the jitted forward) ----------------
def pack_params(p):
    def stack(fn):
        return jnp.stack([fn(l) for l in p["layers"]], axis=0)

    return dict(
        wemb=jnp.zeros((VOCAB_PAD, HIDDEN), jnp.float32).at[:VOCAB].set(p["word_emb"]),
        pt=(p["pos_emb"] + p["type_emb"][0][None, :]).astype(jnp.float32),    # (MAX_POS, H)
        eg=p["emb_ln_g"][None, :], eb=p["emb_ln_b"][None, :],
        wqkv=stack(lambda l: jnp.concatenate([l["wq"], l["wk"], l["wv"]], axis=1)
                   ).astype(jnp.bfloat16),                                    # (L, H, 3H)
        bqkv=stack(lambda l: jnp.concatenate([l["bq"], l["bk"], l["bv"]])[None, :]),
        wo=stack(lambda l: l["wo"]).astype(jnp.bfloat16),
        bo=stack(lambda l: l["bo"][None, :]),
        ln1g=stack(lambda l: l["attn_ln_g"][None, :]),
        ln1b=stack(lambda l: l["attn_ln_b"][None, :]),
        w1=stack(lambda l: l["w1"]).astype(jnp.bfloat16),
        b1=stack(lambda l: l["b1"][None, :]),
        w2=stack(lambda l: l["w2"]).astype(jnp.bfloat16),
        b2=stack(lambda l: l["b2"][None, :]),
        ln2g=stack(lambda l: l["ffn_ln_g"][None, :]),
        ln2b=stack(lambda l: l["ffn_ln_b"][None, :]),
        mw1=p["mlp_w1"].astype(jnp.bfloat16),
        mb1=p["mlp_b1"][None, :],
        mw2=jnp.zeros((HIDDEN, N_PAD), jnp.float32).at[:, :NUM_CLASS]
            .set(p["mlp_w2"]).astype(jnp.bfloat16),
        mb2=jnp.zeros((1, N_PAD), jnp.float32).at[0, :NUM_CLASS].set(p["mlp_b2"]),
    )


def _vmem_spec(a):
    nd = a.ndim
    return pl.BlockSpec(a.shape, lambda i, _nd=nd: (0,) * _nd)


# ---------------- BertNER forward (inference mode) ----------------
@jax.jit
def bert_ner_forward(packed, input_ids, input_len, first):
    B, S = input_ids.shape
    R = B * (S - 2)

    # only trivial integer plumbing left outside the kernel
    ids = input_ids.reshape(B * S, 1).astype(jnp.int32)                       # (BS, 1)
    lens = input_len.reshape(B, 1).astype(jnp.int32)                          # (B, 1)
    flat_idx = (jnp.arange(B, dtype=jnp.int32)[:, None] * S + first.astype(jnp.int32))
    flat_idx = flat_idx[:, 1:-1].reshape(R, 1)                                # (R, 1)

    inputs = [ids, lens, flat_idx,
              packed["wemb"], packed["pt"], packed["eg"], packed["eb"],
              packed["wqkv"], packed["bqkv"], packed["wo"], packed["bo"],
              packed["ln1g"], packed["ln1b"], packed["w1"], packed["b1"],
              packed["w2"], packed["b2"], packed["ln2g"], packed["ln2b"],
              packed["mw1"], packed["mb1"], packed["mw2"], packed["mb2"]]

    kern = functools.partial(_fused_bert_kernel, B=B, S=S)
    out = pl.pallas_call(
        kern,
        grid=(1,),
        in_specs=[_vmem_spec(a) for a in inputs],
        out_specs=pl.BlockSpec((R, N_PAD), lambda i: (0, 0)),
        out_shape=jax.ShapeDtypeStruct((R, N_PAD), jnp.float32),
        compiler_params=pltpu.CompilerParams(dimension_semantics=("arbitrary",)),
    )(*inputs)

    pred = out[:, :NUM_CLASS].reshape(B, S - 2, NUM_CLASS)
    return {"pred": pred}


# ---------------- deterministic parameter init ----------------
def init_params(key):
    def nrm(k, shape, scale=0.02):
        return (scale * jax.random.normal(k, shape)).astype(jnp.float32)

    keys = iter(jax.random.split(key, 128))
    zeros = lambda *s: jnp.zeros(s, jnp.float32)
    ones = lambda *s: jnp.ones(s, jnp.float32)

    p = {
        "word_emb": nrm(next(keys), (VOCAB, HIDDEN)),
        "pos_emb": nrm(next(keys), (MAX_POS, HIDDEN)),
        "type_emb": nrm(next(keys), (TYPE_VOCAB, HIDDEN)),
        "emb_ln_g": ones(HIDDEN), "emb_ln_b": zeros(HIDDEN),
        "layers": [],
        "mlp_w1": nrm(next(keys), (HIDDEN, HIDDEN)), "mlp_b1": zeros(HIDDEN),
        "mlp_w2": nrm(next(keys), (HIDDEN, NUM_CLASS)), "mlp_b2": zeros(NUM_CLASS),
    }
    for _ in range(N_LAYERS):
        p["layers"].append({
            "wq": nrm(next(keys), (HIDDEN, HIDDEN)), "bq": zeros(HIDDEN),
            "wk": nrm(next(keys), (HIDDEN, HIDDEN)), "bk": zeros(HIDDEN),
            "wv": nrm(next(keys), (HIDDEN, HIDDEN)), "bv": zeros(HIDDEN),
            "wo": nrm(next(keys), (HIDDEN, HIDDEN)), "bo": zeros(HIDDEN),
            "attn_ln_g": ones(HIDDEN), "attn_ln_b": zeros(HIDDEN),
            "w1": nrm(next(keys), (HIDDEN, FFN)), "b1": zeros(FFN),
            "w2": nrm(next(keys), (FFN, HIDDEN)), "b2": zeros(HIDDEN),
            "ffn_ln_g": ones(HIDDEN), "ffn_ln_b": zeros(HIDDEN),
        })
    return p


# ---------------- pure-JAX f32 reference (same synthetic BERT) ----------------
def bert_ner_reference(params, input_ids, input_len, first):
    B, S = input_ids.shape
    H = HIDDEN
    mask = jnp.arange(S)[None, :] < input_len[:, None]
    bias = jnp.where(mask, 0.0, -10000.0).astype(jnp.float32)
    x = (params["word_emb"][input_ids]
         + params["pos_emb"][jnp.arange(S)][None, :, :]
         + params["type_emb"][0][None, None, :]).astype(jnp.float32)

    def ln(v, g, b):
        mu = jnp.mean(v, -1, keepdims=True)
        vc = v - mu
        var = jnp.mean(vc * vc, -1, keepdims=True)
        return vc * jax.lax.rsqrt(var + LN_EPS) * g + b

    x = ln(x, params["emb_ln_g"], params["emb_ln_b"])
    for l in params["layers"]:
        q = x @ l["wq"] + l["bq"]
        k = x @ l["wk"] + l["bk"]
        v = x @ l["wv"] + l["bv"]
        heads = lambda t: t.reshape(B, S, N_HEADS, HEAD_DIM).transpose(0, 2, 1, 3)
        qh, kh, vh = heads(q), heads(k), heads(v)
        s = jnp.einsum('bhqd,bhkd->bhqk', qh, kh) * ATTN_SCALE + bias[:, None, None, :]
        p = jax.nn.softmax(s, axis=-1)
        ctx = jnp.einsum('bhqk,bhkd->bhqd', p, vh).transpose(0, 2, 1, 3).reshape(B, S, H)
        x = ln(x + ctx @ l["wo"] + l["bo"], l["attn_ln_g"], l["attn_ln_b"])
        hmid = jax.nn.gelu(x @ l["w1"] + l["b1"], approximate=True)
        x = ln(x + hmid @ l["w2"] + l["b2"], l["ffn_ln_g"], l["ffn_ln_b"])

    idx = jnp.broadcast_to(first[:, :, None], (B, S, H))
    g = jnp.take_along_axis(x, idx, axis=1)[:, 1:-1]
    h1 = g @ params["mlp_w1"] + params["mlp_b1"]
    return h1 @ params["mlp_w2"] + params["mlp_b2"]


if __name__ == "__main__":
    key = jax.random.PRNGKey(0)
    k_param, k_ids, k_first = jax.random.split(key, 3)

    B, S = 2, 8
    params = init_params(k_param)
    packed = pack_params(params)      # one-time packing, outside the jitted forward
    input_ids = jax.random.randint(k_ids, (B, S), 0, VOCAB, dtype=jnp.int32)
    input_len = jnp.array([S, S - 2], dtype=jnp.int32)
    first = jax.random.randint(k_first, (B, S), 0, S, dtype=jnp.int32)

    out = bert_ner_forward(packed, input_ids, input_len, first)
    pred = jax.block_until_ready(out["pred"])
    assert pred.shape == (B, S - 2, NUM_CLASS)
    assert bool(jnp.all(jnp.isfinite(pred)))

    pred_ref = bert_ner_reference(params, input_ids, input_len, first)
    max_diff = float(jnp.max(jnp.abs(pred - pred_ref)))
    assert max_diff < 1e-2, f"max_diff={max_diff}"
    print("KERNEL_OK")
</pallas_src>

<mosaic_0001>
module attributes {stable_mosaic.version = 11 : i64} {
  func.func @_fused_bert_kernel(%arg0: i32, %arg1: memref<16x1xi32, #tpu.memory_space<vmem>>, %arg2: memref<2x1xi32, #tpu.memory_space<vmem>>, %arg3: memref<12x1xi32, #tpu.memory_space<vmem>>, %arg4: memref<128x32xf32, #tpu.memory_space<vmem>>, %arg5: memref<32x32xf32, #tpu.memory_space<vmem>>, %arg6: memref<1x32xf32, #tpu.memory_space<vmem>>, %arg7: memref<1x32xf32, #tpu.memory_space<vmem>>, %arg8: memref<2x32x96xbf16, #tpu.memory_space<vmem>>, %arg9: memref<2x1x96xf32, #tpu.memory_space<vmem>>, %arg10: memref<2x32x32xbf16, #tpu.memory_space<vmem>>, %arg11: memref<2x1x32xf32, #tpu.memory_space<vmem>>, %arg12: memref<2x1x32xf32, #tpu.memory_space<vmem>>, %arg13: memref<2x1x32xf32, #tpu.memory_space<vmem>>, %arg14: memref<2x32x64xbf16, #tpu.memory_space<vmem>>, %arg15: memref<2x1x64xf32, #tpu.memory_space<vmem>>, %arg16: memref<2x64x32xbf16, #tpu.memory_space<vmem>>, %arg17: memref<2x1x32xf32, #tpu.memory_space<vmem>>, %arg18: memref<2x1x32xf32, #tpu.memory_space<vmem>>, %arg19: memref<2x1x32xf32, #tpu.memory_space<vmem>>, %arg20: memref<32x32xbf16, #tpu.memory_space<vmem>>, %arg21: memref<1x32xf32, #tpu.memory_space<vmem>>, %arg22: memref<32x128xbf16, #tpu.memory_space<vmem>>, %arg23: memref<1x128xf32, #tpu.memory_space<vmem>>, %arg24: memref<12x128xf32, #tpu.memory_space<vmem>>) attributes {dimension_semantics = [#tpu.dimension_semantics<arbitrary>], iteration_bounds = array<i64: 1>, scalar_prefetch = 0 : i64, scratch_operands = 0 : i64, tpu.core_type = #tpu.core_type<tc>, window_params = [{pipeline_mode = #tpu.pipeline_mode<synchronous>, transform_indices = @transform_0, window_bounds = array<i64: 16, 1>}, {pipeline_mode = #tpu.pipeline_mode<synchronous>, transform_indices = @transform_1, window_bounds = array<i64: 2, 1>}, {pipeline_mode = #tpu.pipeline_mode<synchronous>, transform_indices = @transform_2, window_bounds = array<i64: 12, 1>}, {pipeline_mode = #tpu.pipeline_mode<synchronous>, transform_indices = @transform_3, window_bounds = array<i64: 128, 32>}, {pipeline_mode = #tpu.pipeline_mode<synchronous>, transform_indices = @transform_4, window_bounds = array<i64: 32, 32>}, {pipeline_mode = #tpu.pipeline_mode<synchronous>, transform_indices = @transform_5, window_bounds = array<i64: 1, 32>}, {pipeline_mode = #tpu.pipeline_mode<synchronous>, transform_indices = @transform_6, window_bounds = array<i64: 1, 32>}, {pipeline_mode = #tpu.pipeline_mode<synchronous>, transform_indices = @transform_7, window_bounds = array<i64: 2, 32, 96>}, {pipeline_mode = #tpu.pipeline_mode<synchronous>, transform_indices = @transform_8, window_bounds = array<i64: 2, 1, 96>}, {pipeline_mode = #tpu.pipeline_mode<synchronous>, transform_indices = @transform_9, window_bounds = array<i64: 2, 32, 32>}, {pipeline_mode = #tpu.pipeline_mode<synchronous>, transform_indices = @transform_10, window_bounds = array<i64: 2, 1, 32>}, {pipeline_mode = #tpu.pipeline_mode<synchronous>, transform_indices = @transform_11, window_bounds = array<i64: 2, 1, 32>}, {pipeline_mode = #tpu.pipeline_mode<synchronous>, transform_indices = @transform_12, window_bounds = array<i64: 2, 1, 32>}, {pipeline_mode = #tpu.pipeline_mode<synchronous>, transform_indices = @transform_13, window_bounds = array<i64: 2, 32, 64>}, {pipeline_mode = #tpu.pipeline_mode<synchronous>, transform_indices = @transform_14, window_bounds = array<i64: 2, 1, 64>}, {pipeline_mode = #tpu.pipeline_mode<synchronous>, transform_indices = @transform_15, window_bounds = array<i64: 2, 64, 32>}, {pipeline_mode = #tpu.pipeline_mode<synchronous>, transform_indices = @transform_16, window_bounds = array<i64: 2, 1, 32>}, {pipeline_mode = #tpu.pipeline_mode<synchronous>, transform_indices = @transform_17, window_bounds = array<i64: 2, 1, 32>}, {pipeline_mode = #tpu.pipeline_mode<synchronous>, transform_indices = @transform_18, window_bounds = array<i64: 2, 1, 32>}, {pipeline_mode = #tpu.pipeline_mode<synchronous>, transform_indices = @transform_19, window_bounds = array<i64: 32, 32>}, {pipeline_mode = #tpu.pipeline_mode<synchronous>, transform_indices = @transform_20, window_bounds = array<i64: 1, 32>}, {pipeline_mode = #tpu.pipeline_mode<synchronous>, transform_indices = @transform_21, window_bounds = array<i64: 32, 128>}, {pipeline_mode = #tpu.pipeline_mode<synchronous>, transform_indices = @transform_22, window_bounds = array<i64: 1, 128>}, {pipeline_mode = #tpu.pipeline_mode<synchronous>, transform_indices = @transform_23, window_bounds = array<i64: 12, 128>}]} {
    %0 = tpu.iota {dimensions = array<i32: 1>} : vector<16x128xi32>
    %c0 = arith.constant 0 : index
    %c0_0 = arith.constant 0 : index
    %1 = vector.load %arg1[%c0, %c0_0] : memref<16x1xi32, #tpu.memory_space<vmem>>, vector<16x1xi32>
    %2 = vector.broadcast %1 : vector<16x1xi32> to vector<16x128xi32>
    %3 = arith.cmpi eq, %0, %2 : vector<16x128xi32>
    %4 = arith.extui %3 : vector<16x128xi1> to vector<16x128xi32>
    %5 = arith.sitofp %4 : vector<16x128xi32> to vector<16x128xf32>
    %c0_1 = arith.constant 0 : index
    %c0_2 = arith.constant 0 : index
    %6 = vector.load %arg4[%c0_1, %c0_2] : memref<128x32xf32, #tpu.memory_space<vmem>>, vector<128x32xf32>
    %cst = arith.constant dense<0.000000e+00> : vector<16x32xf32>
    %7 = tpu.matmul %5, %6, %cst {dimension_numbers = #tpu.dot_dimension_numbers<[1], [0], [0], [1], [0, 0, 1, 1], [], []>} : vector<16x128xf32>, vector<128x32xf32>, vector<16x32xf32> -> vector<16x32xf32>
    %8 = vector.shape_cast %7 : vector<16x32xf32> to vector<2x8x32xf32>
    %c0_3 = arith.constant 0 : index
    %c0_4 = arith.constant 0 : index
    %9 = vector.load %arg5[%c0_3, %c0_4] : memref<32x32xf32, #tpu.memory_space<vmem>>, vector<8x32xf32>
    %10 = vector.shape_cast %9 : vector<8x32xf32> to vector<1x8x32xf32>
    %11 = vector.broadcast %10 : vector<1x8x32xf32> to vector<2x8x32xf32>
    %12 = arith.addf %8, %11 : vector<2x8x32xf32>
    %13 = vector.shape_cast %12 : vector<2x8x32xf32> to vector<16x32xf32>
    %c0_5 = arith.constant 0 : index
    %c0_6 = arith.constant 0 : index
    %14 = vector.load %arg6[%c0_5, %c0_6] : memref<1x32xf32, #tpu.memory_space<vmem>>, vector<1x32xf32>
    %c0_7 = arith.constant 0 : index
    %c0_8 = arith.constant 0 : index
    %15 = vector.load %arg7[%c0_7, %c0_8] : memref<1x32xf32, #tpu.memory_space<vmem>>, vector<1x32xf32>
    %cst_9 = arith.constant dense<0.000000e+00> : vector<16xf32>
    %16 = vector.multi_reduction <add>, %13, %cst_9 [1] : vector<16x32xf32> to vector<16xf32>
    %17 = vector.shape_cast %16 : vector<16xf32> to vector<16x1xf32>
    %cst_10 = arith.constant 3.200000e+01 : f32
    %18 = vector.broadcast %cst_10 : f32 to vector<16x1xf32>
    %19 = arith.divf %17, %18 : vector<16x1xf32>
    %20 = vector.broadcast %19 : vector<16x1xf32> to vector<16x32xf32>
    %21 = arith.subf %13, %20 : vector<16x32xf32>
    %22 = arith.mulf %21, %21 : vector<16x32xf32>
    %cst_11 = arith.constant dense<0.000000e+00> : vector<16xf32>
    %23 = vector.multi_reduction <add>, %22, %cst_11 [1] : vector<16x32xf32> to vector<16xf32>
    %24 = vector.shape_cast %23 : vector<16xf32> to vector<16x1xf32>
    %cst_12 = arith.constant 3.200000e+01 : f32
    %25 = vector.broadcast %cst_12 : f32 to vector<16x1xf32>
    %26 = arith.divf %24, %25 : vector<16x1xf32>
    %cst_13 = arith.constant 9.99999996E-13 : f32
    %27 = vector.broadcast %cst_13 : f32 to vector<16x1xf32>
    %28 = arith.addf %26, %27 : vector<16x1xf32>
    %29 = math.rsqrt %28 : vector<16x1xf32>
    %30 = vector.broadcast %29 : vector<16x1xf32> to vector<16x32xf32>
    %31 = arith.mulf %21, %30 : vector<16x32xf32>
    %32 = vector.broadcast %14 : vector<1x32xf32> to vector<16x32xf32>
    %33 = arith.mulf %31, %32 : vector<16x32xf32>
    %34 = vector.broadcast %15 : vector<1x32xf32> to vector<16x32xf32>
    %35 = arith.addf %33, %34 : vector<16x32xf32>
    %36 = tpu.iota {dimensions = array<i32: 1>} : vector<2x8xi32>
    %c0_14 = arith.constant 0 : index
    %c0_15 = arith.constant 0 : index
    %37 = vector.load %arg2[%c0_14, %c0_15] : memref<2x1xi32, #tpu.memory_space<vmem>>, vector<2x1xi32>
    %38 = vector.broadcast %37 : vector<2x1xi32> to vector<2x8xi32>
    %39 = arith.cmpi slt, %36, %38 : vector<2x8xi32>
    %cst_16 = arith.constant 0.000000e+00 : f32
    %cst_17 = arith.constant -1.000000e+04 : f32
    %40 = vector.broadcast %cst_16 : f32 to vector<2x8xf32>
    %41 = vector.broadcast %cst_17 : f32 to vector<2x8xf32>
    %42 = arith.select %39, %40, %41 : vector<2x8xi1>, vector<2x8xf32>
    %43 = vector.shape_cast %42 : vector<2x8xf32> to vector<2x1x8xf32>
    %44 = arith.truncf %35 : vector<16x32xf32> to vector<16x32xbf16>
    %c0_18 = arith.constant 0 : index
    %c0_19 = arith.constant 0 : index
    %c0_20 = arith.constant 0 : index
    %45 = vector.load %arg8[%c0_18, %c0_19, %c0_20] : memref<2x32x96xbf16, #tpu.memory_space<vmem>>, vector<1x32x96xbf16>
    %46 = vector.shape_cast %45 : vector<1x32x96xbf16> to vector<32x96xbf16>
    %cst_21 = arith.constant dense<0.000000e+00> : vector<16x96xf32>
    %47 = tpu.matmul %44, %46, %cst_21 {dimension_numbers = #tpu.dot_dimension_numbers<[1], [0], [0], [1], [0, 0, 1, 1], [], []>} : vector<16x32xbf16>, vector<32x96xbf16>, vector<16x96xf32> -> vector<16x96xf32>
    %c0_22 = arith.constant 0 : index
    %c0_23 = arith.constant 0 : index
    %c0_24 = arith.constant 0 : index
    %48 = vector.load %arg9[%c0_22, %c0_23, %c0_24] : memref<2x1x96xf32, #tpu.memory_space<vmem>>, vector<1x1x96xf32>
    %49 = vector.shape_cast %48 : vector<1x1x96xf32> to vector<1x96xf32>
    %50 = vector.broadcast %49 : vector<1x96xf32> to vector<16x96xf32>
    %51 = arith.addf %47, %50 : vector<16x96xf32>
    %52 = vector.extract_strided_slice %51 {offsets = [0, 0], sizes = [16, 16], strides = [1, 1]} : vector<16x96xf32> to vector<16x16xf32>
    %53 = vector.shape_cast %52 : vector<16x16xf32> to vector<2x8x16xf32>
    %54 = arith.truncf %53 : vector<2x8x16xf32> to vector<2x8x16xbf16>
    %55 = vector.extract_strided_slice %51 {offsets = [0, 32], sizes = [16, 16], strides = [1, 1]} : vector<16x96xf32> to vector<16x16xf32>
    %56 = vector.shape_cast %55 : vector<16x16xf32> to vector<2x8x16xf32>
    %57 = arith.truncf %56 : vector<2x8x16xf32> to vector<2x8x16xbf16>
    %58 = vector.extract_strided_slice %51 {offsets = [0, 64], sizes = [16, 16], strides = [1, 1]} : vector<16x96xf32> to vector<16x16xf32>
    %59 = vector.shape_cast %58 : vector<16x16xf32> to vector<2x8x16xf32>
    %60 = arith.truncf %59 : vector<2x8x16xf32> to vector<2x8x16xbf16>
    "tpu.trace_start"() <{level = 10 : i32, message = "bqd,bkd->bqk"}> : () -> ()
    %cst_25 = arith.constant dense<0.000000e+00> : vector<2x8x8xf32>
    %61 = tpu.matmul %54, %57, %cst_25 {dimension_numbers = #tpu.dot_dimension_numbers<[2], [2], [1], [1], [0, 0, 0, 1, 1, 1], [0], [0]>} : vector<2x8x16xbf16>, vector<2x8x16xbf16>, vector<2x8x8xf32> -> vector<2x8x8xf32>
    "tpu.trace_stop"() : () -> ()
    %cst_26 = arith.constant 2.500000e-01 : f32
    %62 = vector.broadcast %cst_26 : f32 to vector<2x8x8xf32>
    %63 = arith.mulf %61, %62 : vector<2x8x8xf32>
    %64 = vector.broadcast %43 : vector<2x1x8xf32> to vector<2x8x8xf32>
    %65 = arith.addf %63, %64 : vector<2x8x8xf32>
    %cst_27 = arith.constant dense<0xFF800000> : vector<2x8xf32>
    %66 = vector.multi_reduction <maximumf>, %65, %cst_27 [2] : vector<2x8x8xf32> to vector<2x8xf32>
    %67 = vector.shape_cast %66 : vector<2x8xf32> to vector<2x8x1xf32>
    %68 = vector.broadcast %67 : vector<2x8x1xf32> to vector<2x8x8xf32>
    %69 = arith.subf %65, %68 : vector<2x8x8xf32>
    %70 = math.exp %69 : vector<2x8x8xf32>
    %cst_28 = arith.constant dense<0.000000e+00> : vector<2x8xf32>
    %71 = vector.multi_reduction <add>, %70, %cst_28 [2] : vector<2x8x8xf32> to vector<2x8xf32>
    %72 = vector.shape_cast %71 : vector<2x8xf32> to vector<2x8x1xf32>
    %73 = tpu.reciprocal %72 {approx = true} : vector<2x8x1xf32> -> vector<2x8x1xf32>
    %74 = vector.broadcast %73 : vector<2x8x1xf32> to vector<2x8x8xf32>
    %75 = arith.mulf %70, %74 : vector<2x8x8xf32>
    %76 = arith.truncf %75 : vector<2x8x8xf32> to vector<2x8x8xbf16>
    "tpu.trace_start"() <{level = 10 : i32, message = "bqk,bkd->bqd"}> : () -> ()
    %cst_29 = arith.constant dense<0.000000e+00> : vector<2x8x16xf32>
    %77 = tpu.matmul %76, %60, %cst_29 {dimension_numbers = #tpu.dot_dimension_numbers<[2], [1], [1], [2], [0, 0, 0, 1, 1, 2], [0], [0]>} : vector<2x8x8xbf16>, vector<2x8x16xbf16>, vector<2x8x16xf32> -> vector<2x8x16xf32>
    "tpu.trace_stop"() : () -> ()
    %78 = vector.shape_cast %77 : vector<2x8x16xf32> to vector<16x16xf32>
    %79 = vector.extract_strided_slice %51 {offsets = [0, 16], sizes = [16, 16], strides = [1, 1]} : vector<16x96xf32> to vector<16x16xf32>
    %80 = vector.shape_cast %79 : vector<16x16xf32> to vector<2x8x16xf32>
    %81 = arith.truncf %80 : vector<2x8x16xf32> to vector<2x8x16xbf16>
    %82 = vector.extract_strided_slice %51 {offsets = [0, 48], sizes = [16, 16], strides = [1, 1]} : vector<16x96xf32> to vector<16x16xf32>
    %83 = vector.shape_cast %82 : vector<16x16xf32> to vector<2x8x16xf32>
    %84 = arith.truncf %83 : vector<2x8x16xf32> to vector<2x8x16xbf16>
    %85 = vector.extract_strided_slice %51 {offsets = [0, 80], sizes = [16, 16], strides = [1, 1]} : vector<16x96xf32> to vector<16x16xf32>
    %86 = vector.shape_cast %85 : vector<16x16xf32> to vector<2x8x16xf32>
    %87 = arith.truncf %86 : vector<2x8x16xf32> to vector<2x8x16xbf16>
    "tpu.trace_start"() <{level = 10 : i32, message = "bqd,bkd->bqk"}> : () -> ()
    %cst_30 = arith.constant dense<0.000000e+00> : vector<2x8x8xf32>
    %88 = tpu.matmul %81, %84, %cst_30 {dimension_numbers = #tpu.dot_dimension_numbers<[2], [2], [1], [1], [0, 0, 0, 1, 1, 1], [0], [0]>} : vector<2x8x16xbf16>, vector<2x8x16xbf16>, vector<2x8x8xf32> -> vector<2x8x8xf32>
    "tpu.trace_stop"() : () -> ()
    %cst_31 = arith.constant 2.500000e-01 : f32
    %89 = vector.broadcast %cst_31 : f32 to vector<2x8x8xf32>
    %90 = arith.mulf %88, %89 : vector<2x8x8xf32>
    %91 = vector.broadcast %43 : vector<2x1x8xf32> to vector<2x8x8xf32>
    %92 = arith.addf %90, %91 : vector<2x8x8xf32>
    %cst_32 = arith.constant dense<0xFF800000> : vector<2x8xf32>
    %93 = vector.multi_reduction <maximumf>, %92, %cst_32 [2] : vector<2x8x8xf32> to vector<2x8xf32>
    %94 = vector.shape_cast %93 : vector<2x8xf32> to vector<2x8x1xf32>
    %95 = vector.broadcast %94 : vector<2x8x1xf32> to vector<2x8x8xf32>
    %96 = arith.subf %92, %95 : vector<2x8x8xf32>
    %97 = math.exp %96 : vector<2x8x8xf32>
    %cst_33 = arith.constant dense<0.000000e+00> : vector<2x8xf32>
    %98 = vector.multi_reduction <add>, %97, %cst_33 [2] : vector<2x8x8xf32> to vector<2x8xf32>
    %99 = vector.shape_cast %98 : vector<2x8xf32> to vector<2x8x1xf32>
    %100 = tpu.reciprocal %99 {approx = true} : vector<2x8x1xf32> -> vector<2x8x1xf32>
    %101 = vector.broadcast %100 : vector<2x8x1xf32> to vector<2x8x8xf32>
    %102 = arith.mulf %97, %101 : vector<2x8x8xf32>
    %103 = arith.truncf %102 : vector<2x8x8xf32> to vector<2x8x8xbf16>
    "tpu.trace_start"() <{level = 10 : i32, message = "bqk,bkd->bqd"}> : () -> ()
    %cst_34 = arith.constant dense<0.000000e+00> : vector<2x8x16xf32>
    %104 = tpu.matmul %103, %87, %cst_34 {dimension_numbers = #tpu.dot_dimension_numbers<[2], [1], [1], [2], [0, 0, 0, 1, 1, 2], [0], [0]>} : vector<2x8x8xbf16>, vector<2x8x16xbf16>, vector<2x8x16xf32> -> vector<2x8x16xf32>
    "tpu.trace_stop"() : () -> ()
    %105 = vector.shape_cast %104 : vector<2x8x16xf32> to vector<16x16xf32>
    %106 = tpu.concatenate %78, %105 in 1 : vector<16x16xf32>, vector<16x16xf32> -> vector<16x32xf32>
    %107 = arith.truncf %106 : vector<16x32xf32> to vector<16x32xbf16>
    %c0_35 = arith.constant 0 : index
    %c0_36 = arith.constant 0 : index
    %c0_37 = arith.constant 0 : index
    %108 = vector.load %arg10[%c0_35, %c0_36, %c0_37] : memref<2x32x32xbf16, #tpu.memory_space<vmem>>, vector<1x32x32xbf16>
    %109 = vector.shape_cast %108 : vector<1x32x32xbf16> to vector<32x32xbf16>
    %cst_38 = arith.constant dense<0.000000e+00> : vector<16x32xf32>
    %110 = tpu.matmul %107, %109, %cst_38 {dimension_numbers = #tpu.dot_dimension_numbers<[1], [0], [0], [1], [0, 0, 1, 1], [], []>} : vector<16x32xbf16>, vector<32x32xbf16>, vector<16x32xf32> -> vector<16x32xf32>
    %c0_39 = arith.constant 0 : index
    %c0_40 = arith.constant 0 : index
    %c0_41 = arith.constant 0 : index
    %111 = vector.load %arg11[%c0_39, %c0_40, %c0_41] : memref<2x1x32xf32, #tpu.memory_space<vmem>>, vector<1x1x32xf32>
    %112 = vector.shape_cast %111 : vector<1x1x32xf32> to vector<1x32xf32>
    %113 = vector.broadcast %112 : vector<1x32xf32> to vector<16x32xf32>
    %114 = arith.addf %110, %113 : vector<16x32xf32>
    %115 = arith.addf %35, %114 : vector<16x32xf32>
    %c0_42 = arith.constant 0 : index
    %c0_43 = arith.constant 0 : index
    %c0_44 = arith.constant 0 : index
    %116 = vector.load %arg12[%c0_42, %c0_43, %c0_44] : memref<2x1x32xf32, #tpu.memory_space<vmem>>, vector<1x1x32xf32>
    %117 = vector.shape_cast %116 : vector<1x1x32xf32> to vector<1x32xf32>
    %c0_45 = arith.constant 0 : index
    %c0_46 = arith.constant 0 : index
    %c0_47 = arith.constant 0 : index
    %118 = vector.load %arg13[%c0_45, %c0_46, %c0_47] : memref<2x1x32xf32, #tpu.memory_space<vmem>>, vector<1x1x32xf32>
    %119 = vector.shape_cast %118 : vector<1x1x32xf32> to vector<1x32xf32>
    %cst_48 = arith.constant dense<0.000000e+00> : vector<16xf32>
    %120 = vector.multi_reduction <add>, %115, %cst_48 [1] : vector<16x32xf32> to vector<16xf32>
    %121 = vector.shape_cast %120 : vector<16xf32> to vector<16x1xf32>
    %cst_49 = arith.constant 3.200000e+01 : f32
    %122 = vector.broadcast %cst_49 : f32 to vector<16x1xf32>
    %123 = arith.divf %121, %122 : vector<16x1xf32>
    %124 = vector.broadcast %123 : vector<16x1xf32> to vector<16x32xf32>
    %125 = arith.subf %115, %124 : vector<16x32xf32>
    %126 = arith.mulf %125, %125 : vector<16x32xf32>
    %cst_50 = arith.constant dense<0.000000e+00> : vector<16xf32>
    %127 = vector.multi_reduction <add>, %126, %cst_50 [1] : vector<16x32xf32> to vector<16xf32>
    %128 = vector.shape_cast %127 : vector<16xf32> to vector<16x1xf32>
    %cst_51 = arith.constant 3.200000e+01 : f32
    %129 = vector.broadcast %cst_51 : f32 to vector<16x1xf32>
    %130 = arith.divf %128, %129 : vector<16x1xf32>
    %cst_52 = arith.constant 9.99999996E-13 : f32
    %131 = vector.broadcast %cst_52 : f32 to vector<16x1xf32>
    %132 = arith.addf %130, %131 : vector<16x1xf32>
    %133 = math.rsqrt %132 : vector<16x1xf32>
    %134 = vector.broadcast %133 : vector<16x1xf32> to vector<16x32xf32>
    %135 = arith.mulf %125, %134 : vector<16x32xf32>
    %136 = vector.broadcast %117 : vector<1x32xf32> to vector<16x32xf32>
    %137 = arith.mulf %135, %136 : vector<16x32xf32>
    %138 = vector.broadcast %119 : vector<1x32xf32> to vector<16x32xf32>
    %139 = arith.addf %137, %138 : vector<16x32xf32>
    %140 = arith.truncf %139 : vector<16x32xf32> to vector<16x32xbf16>
    %c0_53 = arith.constant 0 : index
    %c0_54 = arith.constant 0 : index
    %c0_55 = arith.constant 0 : index
    %141 = vector.load %arg14[%c0_53, %c0_54, %c0_55] : memref<2x32x64xbf16, #tpu.memory_space<vmem>>, vector<1x32x64xbf16>
    %142 = vector.shape_cast %141 : vector<1x32x64xbf16> to vector<32x64xbf16>
    %cst_56 = arith.constant dense<0.000000e+00> : vector<16x64xf32>
    %143 = tpu.matmul %140, %142, %cst_56 {dimension_numbers = #tpu.dot_dimension_numbers<[1], [0], [0], [1], [0, 0, 1, 1], [], []>} : vector<16x32xbf16>, vector<32x64xbf16>, vector<16x64xf32> -> vector<16x64xf32>
    %c0_57 = arith.constant 0 : index
    %c0_58 = arith.constant 0 : index
    %c0_59 = arith.constant 0 : index
    %144 = vector.load %arg15[%c0_57, %c0_58, %c0_59] : memref<2x1x64xf32, #tpu.memory_space<vmem>>, vector<1x1x64xf32>
    %145 = vector.shape_cast %144 : vector<1x1x64xf32> to vector<1x64xf32>
    %146 = vector.broadcast %145 : vector<1x64xf32> to vector<16x64xf32>
    %147 = arith.addf %143, %146 : vector<16x64xf32>
    %148 = arith.mulf %147, %147 : vector<16x64xf32>
    %149 = arith.mulf %147, %148 : vector<16x64xf32>
    %cst_60 = arith.constant 4.471500e-02 : f32
    %150 = vector.broadcast %cst_60 : f32 to vector<16x64xf32>
    %151 = arith.mulf %150, %149 : vector<16x64xf32>
    %152 = arith.addf %147, %151 : vector<16x64xf32>
    %cst_61 = arith.constant 0.797884583 : f32
    %153 = vector.broadcast %cst_61 : f32 to vector<16x64xf32>
    %154 = arith.mulf %153, %152 : vector<16x64xf32>
    %155 = math.tanh %154 : vector<16x64xf32>
    %cst_62 = arith.constant 1.000000e+00 : f32
    %156 = vector.broadcast %cst_62 : f32 to vector<16x64xf32>
    %157 = arith.addf %156, %155 : vector<16x64xf32>
    %cst_63 = arith.constant 5.000000e-01 : f32
    %158 = vector.broadcast %cst_63 : f32 to vector<16x64xf32>
    %159 = arith.mulf %158, %157 : vector<16x64xf32>
    %160 = arith.mulf %147, %159 : vector<16x64xf32>
    %161 = arith.truncf %160 : vector<16x64xf32> to vector<16x64xbf16>
    %c0_64 = arith.constant 0 : index
    %c0_65 = arith.constant 0 : index
    %c0_66 = arith.constant 0 : index
    %162 = vector.load %arg16[%c0_64, %c0_65, %c0_66] : memref<2x64x32xbf16, #tpu.memory_space<vmem>>, vector<1x64x32xbf16>
    %163 = vector.shape_cast %162 : vector<1x64x32xbf16> to vector<64x32xbf16>
    %cst_67 = arith.constant dense<0.000000e+00> : vector<16x32xf32>
    %164 = tpu.matmul %161, %163, %cst_67 {dimension_numbers = #tpu.dot_dimension_numbers<[1], [0], [0], [1], [0, 0, 1, 1], [], []>} : vector<16x64xbf16>, vector<64x32xbf16>, vector<16x32xf32> -> vector<16x32xf32>
    %c0_68 = arith.constant 0 : index
    %c0_69 = arith.constant 0 : index
    %c0_70 = arith.constant 0 : index
    %165 = vector.load %arg17[%c0_68, %c0_69, %c0_70] : memref<2x1x32xf32, #tpu.memory_space<vmem>>, vector<1x1x32xf32>
    %166 = vector.shape_cast %165 : vector<1x1x32xf32> to vector<1x32xf32>
    %167 = vector.broadcast %166 : vector<1x32xf32> to vector<16x32xf32>
    %168 = arith.addf %164, %167 : vector<16x32xf32>
    %169 = arith.addf %139, %168 : vector<16x32xf32>
    %c0_71 = arith.constant 0 : index
    %c0_72 = arith.constant 0 : index
    %c0_73 = arith.constant 0 : index
    %170 = vector.load %arg18[%c0_71, %c0_72, %c0_73] : memref<2x1x32xf32, #tpu.memory_space<vmem>>, vector<1x1x32xf32>
    %171 = vector.shape_cast %170 : vector<1x1x32xf32> to vector<1x32xf32>
    %c0_74 = arith.constant 0 : index
    %c0_75 = arith.constant 0 : index
    %c0_76 = arith.constant 0 : index
    %172 = vector.load %arg19[%c0_74, %c0_75, %c0_76] : memref<2x1x32xf32, #tpu.memory_space<vmem>>, vector<1x1x32xf32>
    %173 = vector.shape_cast %172 : vector<1x1x32xf32> to vector<1x32xf32>
    %cst_77 = arith.constant dense<0.000000e+00> : vector<16xf32>
    %174 = vector.multi_reduction <add>, %169, %cst_77 [1] : vector<16x32xf32> to vector<16xf32>
    %175 = vector.shape_cast %174 : vector<16xf32> to vector<16x1xf32>
    %cst_78 = arith.constant 3.200000e+01 : f32
    %176 = vector.broadcast %cst_78 : f32 to vector<16x1xf32>
    %177 = arith.divf %175, %176 : vector<16x1xf32>
    %178 = vector.broadcast %177 : vector<16x1xf32> to vector<16x32xf32>
    %179 = arith.subf %169, %178 : vector<16x32xf32>
    %180 = arith.mulf %179, %179 : vector<16x32xf32>
    %cst_79 = arith.constant dense<0.000000e+00> : vector<16xf32>
    %181 = vector.multi_reduction <add>, %180, %cst_79 [1] : vector<16x32xf32> to vector<16xf32>
    %182 = vector.shape_cast %181 : vector<16xf32> to vector<16x1xf32>
    %cst_80 = arith.constant 3.200000e+01 : f32
    %183 = vector.broadcast %cst_80 : f32 to vector<16x1xf32>
    %184 = arith.divf %182, %183 : vector<16x1xf32>
    %cst_81 = arith.constant 9.99999996E-13 : f32
    %185 = vector.broadcast %cst_81 : f32 to vector<16x1xf32>
    %186 = arith.addf %184, %185 : vector<16x1xf32>
    %187 = math.rsqrt %186 : vector<16x1xf32>
    %188 = vector.broadcast %187 : vector<16x1xf32> to vector<16x32xf32>
    %189 = arith.mulf %179, %188 : vector<16x32xf32>
    %190 = vector.broadcast %171 : vector<1x32xf32> to vector<16x32xf32>
    %191 = arith.mulf %189, %190 : vector<16x32xf32>
    %192 = vector.broadcast %173 : vector<1x32xf32> to vector<16x32xf32>
    %193 = arith.addf %191, %192 : vector<16x32xf32>
    %194 = arith.truncf %193 : vector<16x32xf32> to vector<16x32xbf16>
    %c1 = arith.constant 1 : index
    %c0_82 = arith.constant 0 : index
    %c0_83 = arith.constant 0 : index
    %195 = vector.load %arg8[%c1, %c0_82, %c0_83] : memref<2x32x96xbf16, #tpu.memory_space<vmem>>, vector<1x32x96xbf16>
    %196 = vector.shape_cast %195 : vector<1x32x96xbf16> to vector<32x96xbf16>
    %cst_84 = arith.constant dense<0.000000e+00> : vector<16x96xf32>
    %197 = tpu.matmul %194, %196, %cst_84 {dimension_numbers = #tpu.dot_dimension_numbers<[1], [0], [0], [1], [0, 0, 1, 1], [], []>} : vector<16x32xbf16>, vector<32x96xbf16>, vector<16x96xf32> -> vector<16x96xf32>
    %c1_85 = arith.constant 1 : index
    %c0_86 = arith.constant 0 : index
    %c0_87 = arith.constant 0 : index
    %198 = vector.load %arg9[%c1_85, %c0_86, %c0_87] : memref<2x1x96xf32, #tpu.memory_space<vmem>>, vector<1x1x96xf32>
    %199 = vector.shape_cast %198 : vector<1x1x96xf32> to vector<1x96xf32>
    %200 = vector.broadcast %199 : vector<1x96xf32> to vector<16x96xf32>
    %201 = arith.addf %197, %200 : vector<16x96xf32>
    %202 = vector.extract_strided_slice %201 {offsets = [0, 0], sizes = [16, 16], strides = [1, 1]} : vector<16x96xf32> to vector<16x16xf32>
    %203 = vector.shape_cast %202 : vector<16x16xf32> to vector<2x8x16xf32>
    %204 = arith.truncf %203 : vector<2x8x16xf32> to vector<2x8x16xbf16>
    %205 = vector.extract_strided_slice %201 {offsets = [0, 32], sizes = [16, 16], strides = [1, 1]} : vector<16x96xf32> to vector<16x16xf32>
    %206 = vector.shape_cast %205 : vector<16x16xf32> to vector<2x8x16xf32>
    %207 = arith.truncf %206 : vector<2x8x16xf32> to vector<2x8x16xbf16>
    %208 = vector.extract_strided_slice %201 {offsets = [0, 64], sizes = [16, 16], strides = [1, 1]} : vector<16x96xf32> to vector<16x16xf32>
    %209 = vector.shape_cast %208 : vector<16x16xf32> to vector<2x8x16xf32>
    %210 = arith.truncf %209 : vector<2x8x16xf32> to vector<2x8x16xbf16>
    "tpu.trace_start"() <{level = 10 : i32, message = "bqd,bkd->bqk"}> : () -> ()
    %cst_88 = arith.constant dense<0.000000e+00> : vector<2x8x8xf32>
    %211 = tpu.matmul %204, %207, %cst_88 {dimension_numbers = #tpu.dot_dimension_numbers<[2], [2], [1], [1], [0, 0, 0, 1, 1, 1], [0], [0]>} : vector<2x8x16xbf16>, vector<2x8x16xbf16>, vector<2x8x8xf32> -> vector<2x8x8xf32>
    "tpu.trace_stop"() : () -> ()
    %cst_89 = arith.constant 2.500000e-01 : f32
    %212 = vector.broadcast %cst_89 : f32 to vector<2x8x8xf32>
    %213 = arith.mulf %211, %212 : vector<2x8x8xf32>
    %214 = vector.broadcast %43 : vector<2x1x8xf32> to vector<2x8x8xf32>
    %215 = arith.addf %213, %214 : vector<2x8x8xf32>
    %cst_90 = arith.constant dense<0xFF800000> : vector<2x8xf32>
    %216 = vector.multi_reduction <maximumf>, %215, %cst_90 [2] : vector<2x8x8xf32> to vector<2x8xf32>
    %217 = vector.shape_cast %216 : vector<2x8xf32> to vector<2x8x1xf32>
    %218 = vector.broadcast %217 : vector<2x8x1xf32> to vector<2x8x8xf32>
    %219 = arith.subf %215, %218 : vector<2x8x8xf32>
    %220 = math.exp %219 : vector<2x8x8xf32>
    %cst_91 = arith.constant dense<0.000000e+00> : vector<2x8xf32>
    %221 = vector.multi_reduction <add>, %220, %cst_91 [2] : vector<2x8x8xf32> to vector<2x8xf32>
    %222 = vector.shape_cast %221 : vector<2x8xf32> to vector<2x8x1xf32>
    %223 = tpu.reciprocal %222 {approx = true} : vector<2x8x1xf32> -> vector<2x8x1xf32>
    %224 = vector.broadcast %223 : vector<2x8x1xf32> to vector<2x8x8xf32>
    %225 = arith.mulf %220, %224 : vector<2x8x8xf32>
    %226 = arith.truncf %225 : vector<2x8x8xf32> to vector<2x8x8xbf16>
    "tpu.trace_start"() <{level = 10 : i32, message = "bqk,bkd->bqd"}> : () -> ()
    %cst_92 = arith.constant dense<0.000000e+00> : vector<2x8x16xf32>
    %227 = tpu.matmul %226, %210, %cst_92 {dimension_numbers = #tpu.dot_dimension_numbers<[2], [1], [1], [2], [0, 0, 0, 1, 1, 2], [0], [0]>} : vector<2x8x8xbf16>, vector<2x8x16xbf16>, vector<2x8x16xf32> -> vector<2x8x16xf32>
    "tpu.trace_stop"() : () -> ()
    %228 = vector.shape_cast %227 : vector<2x8x16xf32> to vector<16x16xf32>
    %229 = vector.extract_strided_slice %201 {offsets = [0, 16], sizes = [16, 16], strides = [1, 1]} : vector<16x96xf32> to vector<16x16xf32>
    %230 = vector.shape_cast %229 : vector<16x16xf32> to vector<2x8x16xf32>
    %231 = arith.truncf %230 : vector<2x8x16xf32> to vector<2x8x16xbf16>
    %232 = vector.extract_strided_slice %201 {offsets = [0, 48], sizes = [16, 16], strides = [1, 1]} : vector<16x96xf32> to vector<16x16xf32>
    %233 = vector.shape_cast %232 : vector<16x16xf32> to vector<2x8x16xf32>
    %234 = arith.truncf %233 : vector<2x8x16xf32> to vector<2x8x16xbf16>
    %235 = vector.extract_strided_slice %201 {offsets = [0, 80], sizes = [16, 16], strides = [1, 1]} : vector<16x96xf32> to vector<16x16xf32>
    %236 = vector.shape_cast %235 : vector<16x16xf32> to vector<2x8x16xf32>
    %237 = arith.truncf %236 : vector<2x8x16xf32> to vector<2x8x16xbf16>
    "tpu.trace_start"() <{level = 10 : i32, message = "bqd,bkd->bqk"}> : () -> ()
    %cst_93 = arith.constant dense<0.000000e+00> : vector<2x8x8xf32>
    %238 = tpu.matmul %231, %234, %cst_93 {dimension_numbers = #tpu.dot_dimension_numbers<[2], [2], [1], [1], [0, 0, 0, 1, 1, 1], [0], [0]>} : vector<2x8x16xbf16>, vector<2x8x16xbf16>, vector<2x8x8xf32> -> vector<2x8x8xf32>
    "tpu.trace_stop"() : () -> ()
    %cst_94 = arith.constant 2.500000e-01 : f32
    %239 = vector.broadcast %cst_94 : f32 to vector<2x8x8xf32>
    %240 = arith.mulf %238, %239 : vector<2x8x8xf32>
    %241 = vector.broadcast %43 : vector<2x1x8xf32> to vector<2x8x8xf32>
    %242 = arith.addf %240, %241 : vector<2x8x8xf32>
    %cst_95 = arith.constant dense<0xFF800000> : vector<2x8xf32>
    %243 = vector.multi_reduction <maximumf>, %242, %cst_95 [2] : vector<2x8x8xf32> to vector<2x8xf32>
    %244 = vector.shape_cast %243 : vector<2x8xf32> to vector<2x8x1xf32>
    %245 = vector.broadcast %244 : vector<2x8x1xf32> to vector<2x8x8xf32>
    %246 = arith.subf %242, %245 : vector<2x8x8xf32>
    %247 = math.exp %246 : vector<2x8x8xf32>
    %cst_96 = arith.constant dense<0.000000e+00> : vector<2x8xf32>
    %248 = vector.multi_reduction <add>, %247, %cst_96 [2] : vector<2x8x8xf32> to vector<2x8xf32>
    %249 = vector.shape_cast %248 : vector<2x8xf32> to vector<2x8x1xf32>
    %250 = tpu.reciprocal %249 {approx = true} : vector<2x8x1xf32> -> vector<2x8x1xf32>
    %251 = vector.broadcast %250 : vector<2x8x1xf32> to vector<2x8x8xf32>
    %252 = arith.mulf %247, %251 : vector<2x8x8xf32>
    %253 = arith.truncf %252 : vector<2x8x8xf32> to vector<2x8x8xbf16>
    "tpu.trace_start"() <{level = 10 : i32, message = "bqk,bkd->bqd"}> : () -> ()
    %cst_97 = arith.constant dense<0.000000e+00> : vector<2x8x16xf32>
    %254 = tpu.matmul %253, %237, %cst_97 {dimension_numbers = #tpu.dot_dimension_numbers<[2], [1], [1], [2], [0, 0, 0, 1, 1, 2], [0], [0]>} : vector<2x8x8xbf16>, vector<2x8x16xbf16>, vector<2x8x16xf32> -> vector<2x8x16xf32>
    "tpu.trace_stop"() : () -> ()
    %255 = vector.shape_cast %254 : vector<2x8x16xf32> to vector<16x16xf32>
    %256 = tpu.concatenate %228, %255 in 1 : vector<16x16xf32>, vector<16x16xf32> -> vector<16x32xf32>
    %257 = arith.truncf %256 : vector<16x32xf32> to vector<16x32xbf16>
    %c1_98 = arith.constant 1 : index
    %c0_99 = arith.constant 0 : index
    %c0_100 = arith.constant 0 : index
    %258 = vector.load %arg10[%c1_98, %c0_99, %c0_100] : memref<2x32x32xbf16, #tpu.memory_space<vmem>>, vector<1x32x32xbf16>
    %259 = vector.shape_cast %258 : vector<1x32x32xbf16> to vector<32x32xbf16>
    %cst_101 = arith.constant dense<0.000000e+00> : vector<16x32xf32>
    %260 = tpu.matmul %257, %259, %cst_101 {dimension_numbers = #tpu.dot_dimension_numbers<[1], [0], [0], [1], [0, 0, 1, 1], [], []>} : vector<16x32xbf16>, vector<32x32xbf16>, vector<16x32xf32> -> vector<16x32xf32>
    %c1_102 = arith.constant 1 : index
    %c0_103 = arith.constant 0 : index
    %c0_104 = arith.constant 0 : index
    %261 = vector.load %arg11[%c1_102, %c0_103, %c0_104] : memref<2x1x32xf32, #tpu.memory_space<vmem>>, vector<1x1x32xf32>
    %262 = vector.shape_cast %261 : vector<1x1x32xf32> to vector<1x32xf32>
    %263 = vector.broadcast %262 : vector<1x32xf32> to vector<16x32xf32>
    %264 = arith.addf %260, %263 : vector<16x32xf32>
    %265 = arith.addf %193, %264 : vector<16x32xf32>
    %c1_105 = arith.constant 1 : index
    %c0_106 = arith.constant 0 : index
    %c0_107 = arith.constant 0 : index
    %266 = vector.load %arg12[%c1_105, %c0_106, %c0_107] : memref<2x1x32xf32, #tpu.memory_space<vmem>>, vector<1x1x32xf32>
    %267 = vector.shape_cast %266 : vector<1x1x32xf32> to vector<1x32xf32>
    %c1_108 = arith.constant 1 : index
    %c0_109 = arith.constant 0 : index
    %c0_110 = arith.constant 0 : index
    %268 = vector.load %arg13[%c1_108, %c0_109, %c0_110] : memref<2x1x32xf32, #tpu.memory_space<vmem>>, vector<1x1x32xf32>
    %269 = vector.shape_cast %268 : vector<1x1x32xf32> to vector<1x32xf32>
    %cst_111 = arith.constant dense<0.000000e+00> : vector<16xf32>
    %270 = vector.multi_reduction <add>, %265, %cst_111 [1] : vector<16x32xf32> to vector<16xf32>
    %271 = vector.shape_cast %270 : vector<16xf32> to vector<16x1xf32>
    %cst_112 = arith.constant 3.200000e+01 : f32
    %272 = vector.broadcast %cst_112 : f32 to vector<16x1xf32>
    %273 = arith.divf %271, %272 : vector<16x1xf32>
    %274 = vector.broadcast %273 : vector<16x1xf32> to vector<16x32xf32>
    %275 = arith.subf %265, %274 : vector<16x32xf32>
    %276 = arith.mulf %275, %275 : vector<16x32xf32>
    %cst_113 = arith.constant dense<0.000000e+00> : vector<16xf32>
    %277 = vector.multi_reduction <add>, %276, %cst_113 [1] : vector<16x32xf32> to vector<16xf32>
    %278 = vector.shape_cast %277 : vector<16xf32> to vector<16x1xf32>
    %cst_114 = arith.constant 3.200000e+01 : f32
    %279 = vector.broadcast %cst_114 : f32 to vector<16x1xf32>
    %280 = arith.divf %278, %279 : vector<16x1xf32>
    %cst_115 = arith.constant 9.99999996E-13 : f32
    %281 = vector.broadcast %cst_115 : f32 to vector<16x1xf32>
    %282 = arith.addf %280, %281 : vector<16x1xf32>
    %283 = math.rsqrt %282 : vector<16x1xf32>
    %284 = vector.broadcast %283 : vector<16x1xf32> to vector<16x32xf32>
    %285 = arith.mulf %275, %284 : vector<16x32xf32>
    %286 = vector.broadcast %267 : vector<1x32xf32> to vector<16x32xf32>
    %287 = arith.mulf %285, %286 : vector<16x32xf32>
    %288 = vector.broadcast %269 : vector<1x32xf32> to vector<16x32xf32>
    %289 = arith.addf %287, %288 : vector<16x32xf32>
    %290 = arith.truncf %289 : vector<16x32xf32> to vector<16x32xbf16>
    %c1_116 = arith.constant 1 : index
    %c0_117 = arith.constant 0 : index
    %c0_118 = arith.constant 0 : index
    %291 = vector.load %arg14[%c1_116, %c0_117, %c0_118] : memref<2x32x64xbf16, #tpu.memory_space<vmem>>, vector<1x32x64xbf16>
    %292 = vector.shape_cast %291 : vector<1x32x64xbf16> to vector<32x64xbf16>
    %cst_119 = arith.constant dense<0.000000e+00> : vector<16x64xf32>
    %293 = tpu.matmul %290, %292, %cst_119 {dimension_numbers = #tpu.dot_dimension_numbers<[1], [0], [0], [1], [0, 0, 1, 1], [], []>} : vector<16x32xbf16>, vector<32x64xbf16>, vector<16x64xf32> -> vector<16x64xf32>
    %c1_120 = arith.constant 1 : index
    %c0_121 = arith.constant 0 : index
    %c0_122 = arith.constant 0 : index
    %294 = vector.load %arg15[%c1_120, %c0_121, %c0_122] : memref<2x1x64xf32, #tpu.memory_space<vmem>>, vector<1x1x64xf32>
    %295 = vector.shape_cast %294 : vector<1x1x64xf32> to vector<1x64xf32>
    %296 = vector.broadcast %295 : vector<1x64xf32> to vector<16x64xf32>
    %297 = arith.addf %293, %296 : vector<16x64xf32>
    %298 = arith.mulf %297, %297 : vector<16x64xf32>
    %299 = arith.mulf %297, %298 : vector<16x64xf32>
    %cst_123 = arith.constant 4.471500e-02 : f32
    %300 = vector.broadcast %cst_123 : f32 to vector<16x64xf32>
    %301 = arith.mulf %300, %299 : vector<16x64xf32>
    %302 = arith.addf %297, %301 : vector<16x64xf32>
    %cst_124 = arith.constant 0.797884583 : f32
    %303 = vector.broadcast %cst_124 : f32 to vector<16x64xf32>
    %304 = arith.mulf %303, %302 : vector<16x64xf32>
    %305 = math.tanh %304 : vector<16x64xf32>
    %cst_125 = arith.constant 1.000000e+00 : f32
    %306 = vector.broadcast %cst_125 : f32 to vector<16x64xf32>
    %307 = arith.addf %306, %305 : vector<16x64xf32>
    %cst_126 = arith.constant 5.000000e-01 : f32
    %308 = vector.broadcast %cst_126 : f32 to vector<16x64xf32>
    %309 = arith.mulf %308, %307 : vector<16x64xf32>
    %310 = arith.mulf %297, %309 : vector<16x64xf32>
    %311 = arith.truncf %310 : vector<16x64xf32> to vector<16x64xbf16>
    %c1_127 = arith.constant 1 : index
    %c0_128 = arith.constant 0 : index
    %c0_129 = arith.constant 0 : index
    %312 = vector.load %arg16[%c1_127, %c0_128, %c0_129] : memref<2x64x32xbf16, #tpu.memory_space<vmem>>, vector<1x64x32xbf16>
    %313 = vector.shape_cast %312 : vector<1x64x32xbf16> to vector<64x32xbf16>
    %cst_130 = arith.constant dense<0.000000e+00> : vector<16x32xf32>
    %314 = tpu.matmul %311, %313, %cst_130 {dimension_numbers = #tpu.dot_dimension_numbers<[1], [0], [0], [1], [0, 0, 1, 1], [], []>} : vector<16x64xbf16>, vector<64x32xbf16>, vector<16x32xf32> -> vector<16x32xf32>
    %c1_131 = arith.constant 1 : index
    %c0_132 = arith.constant 0 : index
    %c0_133 = arith.constant 0 : index
    %315 = vector.load %arg17[%c1_131, %c0_132, %c0_133] : memref<2x1x32xf32, #tpu.memory_space<vmem>>, vector<1x1x32xf32>
    %316 = vector.shape_cast %315 : vector<1x1x32xf32> to vector<1x32xf32>
    %317 = vector.broadcast %316 : vector<1x32xf32> to vector<16x32xf32>
    %318 = arith.addf %314, %317 : vector<16x32xf32>
    %319 = arith.addf %289, %318 : vector<16x32xf32>
    %c1_134 = arith.constant 1 : index
    %c0_135 = arith.constant 0 : index
    %c0_136 = arith.constant 0 : index
    %320 = vector.load %arg18[%c1_134, %c0_135, %c0_136] : memref<2x1x32xf32, #tpu.memory_space<vmem>>, vector<1x1x32xf32>
    %321 = vector.shape_cast %320 : vector<1x1x32xf32> to vector<1x32xf32>
    %c1_137 = arith.constant 1 : index
    %c0_138 = arith.constant 0 : index
    %c0_139 = arith.constant 0 : index
    %322 = vector.load %arg19[%c1_137, %c0_138, %c0_139] : memref<2x1x32xf32, #tpu.memory_space<vmem>>, vector<1x1x32xf32>
    %323 = vector.shape_cast %322 : vector<1x1x32xf32> to vector<1x32xf32>
    %cst_140 = arith.constant dense<0.000000e+00> : vector<16xf32>
    %324 = vector.multi_reduction <add>, %319, %cst_140 [1] : vector<16x32xf32> to vector<16xf32>
    %325 = vector.shape_cast %324 : vector<16xf32> to vector<16x1xf32>
    %cst_141 = arith.constant 3.200000e+01 : f32
    %326 = vector.broadcast %cst_141 : f32 to vector<16x1xf32>
    %327 = arith.divf %325, %326 : vector<16x1xf32>
    %328 = vector.broadcast %327 : vector<16x1xf32> to vector<16x32xf32>
    %329 = arith.subf %319, %328 : vector<16x32xf32>
    %330 = arith.mulf %329, %329 : vector<16x32xf32>
    %cst_142 = arith.constant dense<0.000000e+00> : vector<16xf32>
    %331 = vector.multi_reduction <add>, %330, %cst_142 [1] : vector<16x32xf32> to vector<16xf32>
    %332 = vector.shape_cast %331 : vector<16xf32> to vector<16x1xf32>
    %cst_143 = arith.constant 3.200000e+01 : f32
    %333 = vector.broadcast %cst_143 : f32 to vector<16x1xf32>
    %334 = arith.divf %332, %333 : vector<16x1xf32>
    %cst_144 = arith.constant 9.99999996E-13 : f32
    %335 = vector.broadcast %cst_144 : f32 to vector<16x1xf32>
    %336 = arith.addf %334, %335 : vector<16x1xf32>
    %337 = math.rsqrt %336 : vector<16x1xf32>
    %338 = vector.broadcast %337 : vector<16x1xf32> to vector<16x32xf32>
    %339 = arith.mulf %329, %338 : vector<16x32xf32>
    %340 = vector.broadcast %321 : vector<1x32xf32> to vector<16x32xf32>
    %341 = arith.mulf %339, %340 : vector<16x32xf32>
    %342 = vector.broadcast %323 : vector<1x32xf32> to vector<16x32xf32>
    %343 = arith.addf %341, %342 : vector<16x32xf32>
    %344 = tpu.iota {dimensions = array<i32: 1>} : vector<12x16xi32>
    %c0_145 = arith.constant 0 : index
    %c0_146 = arith.constant 0 : index
    %345 = vector.load %arg3[%c0_145, %c0_146] : memref<12x1xi32, #tpu.memory_space<vmem>>, vector<12x1xi32>
    %346 = vector.broadcast %345 : vector<12x1xi32> to vector<12x16xi32>
    %347 = arith.cmpi eq, %344, %346 : vector<12x16xi32>
    %348 = arith.extui %347 : vector<12x16xi1> to vector<12x16xi32>
    %349 = arith.sitofp %348 : vector<12x16xi32> to vector<12x16xf32>
    %cst_147 = arith.constant dense<0.000000e+00> : vector<12x32xf32>
    %350 = tpu.matmul %349, %343, %cst_147 {dimension_numbers = #tpu.dot_dimension_numbers<[1], [0], [0], [1], [0, 0, 1, 1], [], []>} : vector<12x16xf32>, vector<16x32xf32>, vector<12x32xf32> -> vector<12x32xf32>
    %351 = arith.truncf %350 : vector<12x32xf32> to vector<12x32xbf16>
    %c0_148 = arith.constant 0 : index
    %c0_149 = arith.constant 0 : index
    %352 = vector.load %arg20[%c0_148, %c0_149] : memref<32x32xbf16, #tpu.memory_space<vmem>>, vector<32x32xbf16>
    %cst_150 = arith.constant dense<0.000000e+00> : vector<12x32xf32>
    %353 = tpu.matmul %351, %352, %cst_150 {dimension_numbers = #tpu.dot_dimension_numbers<[1], [0], [0], [1], [0, 0, 1, 1], [], []>} : vector<12x32xbf16>, vector<32x32xbf16>, vector<12x32xf32> -> vector<12x32xf32>
    %c0_151 = arith.constant 0 : index
    %c0_152 = arith.constant 0 : index
    %354 = vector.load %arg21[%c0_151, %c0_152] : memref<1x32xf32, #tpu.memory_space<vmem>>, vector<1x32xf32>
    %355 = vector.broadcast %354 : vector<1x32xf32> to vector<12x32xf32>
    %356 = arith.addf %353, %355 : vector<12x32xf32>
    %357 = arith.truncf %356 : vector<12x32xf32> to vector<12x32xbf16>
    %c0_153 = arith.constant 0 : index
    %c0_154 = arith.constant 0 : index
    %358 = vector.load %arg22[%c0_153, %c0_154] : memref<32x128xbf16, #tpu.memory_space<vmem>>, vector<32x128xbf16>
    %cst_155 = arith.constant dense<0.000000e+00> : vector<12x128xf32>
    %359 = tpu.matmul %357, %358, %cst_155 {dimension_numbers = #tpu.dot_dimension_numbers<[1], [0], [0], [1], [0, 0, 1, 1], [], []>} : vector<12x32xbf16>, vector<32x128xbf16>, vector<12x128xf32> -> vector<12x128xf32>
    %c0_156 = arith.constant 0 : index
    %c0_157 = arith.constant 0 : index
    %360 = vector.load %arg23[%c0_156, %c0_157] : memref<1x128xf32, #tpu.memory_space<vmem>>, vector<1x128xf32>
    %361 = vector.broadcast %360 : vector<1x128xf32> to vector<12x128xf32>
    %362 = arith.addf %359, %361 : vector<12x128xf32>
    %c0_158 = arith.constant 0 : index
    %c0_159 = arith.constant 0 : index
    %363 = vector.load %arg24[%c0_158, %c0_159] : memref<12x128xf32, #tpu.memory_space<vmem>>, vector<12x128xf32>
    tpu.vector_store %arg24[%c0_158, %c0_159], %362 {strides = array<i32>} : memref<12x128xf32, #tpu.memory_space<vmem>>, vector<12x128xf32>,
    return
  }
  func.func @transform_0(%arg0: i32) -> (i32, i32) {
    %c0_i32 = arith.constant 0 : i32
    %c0_i32_0 = arith.constant 0 : i32
    %c0_i32_1 = arith.constant 0 : i32
    return %c0_i32, %c0_i32_0 : i32, i32
  }
  func.func @transform_1(%arg0: i32) -> (i32, i32) {
    %c0_i32 = arith.constant 0 : i32
    %c0_i32_0 = arith.constant 0 : i32
    %c0_i32_1 = arith.constant 0 : i32
    return %c0_i32, %c0_i32_0 : i32, i32
  }
  func.func @transform_2(%arg0: i32) -> (i32, i32) {
    %c0_i32 = arith.constant 0 : i32
    %c0_i32_0 = arith.constant 0 : i32
    %c0_i32_1 = arith.constant 0 : i32
    return %c0_i32, %c0_i32_0 : i32, i32
  }
  func.func @transform_3(%arg0: i32) -> (i32, i32) {
    %c0_i32 = arith.constant 0 : i32
    %c0_i32_0 = arith.constant 0 : i32
    %c0_i32_1 = arith.constant 0 : i32
    return %c0_i32, %c0_i32_0 : i32, i32
  }
  func.func @transform_4(%arg0: i32) -> (i32, i32) {
    %c0_i32 = arith.constant 0 : i32
    %c0_i32_0 = arith.constant 0 : i32
    %c0_i32_1 = arith.constant 0 : i32
    return %c0_i32, %c0_i32_0 : i32, i32
  }
  func.func @transform_5(%arg0: i32) -> (i32, i32) {
    %c0_i32 = arith.constant 0 : i32
    %c0_i32_0 = arith.constant 0 : i32
    %c0_i32_1 = arith.constant 0 : i32
    return %c0_i32, %c0_i32_0 : i32, i32
  }
  func.func @transform_6(%arg0: i32) -> (i32, i32) {
    %c0_i32 = arith.constant 0 : i32
    %c0_i32_0 = arith.constant 0 : i32
    %c0_i32_1 = arith.constant 0 : i32
    return %c0_i32, %c0_i32_0 : i32, i32
  }
  func.func @transform_7(%arg0: i32) -> (i32, i32, i32) {
    %c0_i32 = arith.constant 0 : i32
    %c0_i32_0 = arith.constant 0 : i32
    %c0_i32_1 = arith.constant 0 : i32
    %c0_i32_2 = arith.constant 0 : i32
    return %c0_i32, %c0_i32_0, %c0_i32_1 : i32, i32, i32
  }
  func.func @transform_8(%arg0: i32) -> (i32, i32, i32) {
    %c0_i32 = arith.constant 0 : i32
    %c0_i32_0 = arith.constant 0 : i32
    %c0_i32_1 = arith.constant 0 : i32
    %c0_i32_2 = arith.constant 0 : i32
    return %c0_i32, %c0_i32_0, %c0_i32_1 : i32, i32, i32
  }
  func.func @transform_9(%arg0: i32) -> (i32, i32, i32) {
    %c0_i32 = arith.constant 0 : i32
    %c0_i32_0 = arith.constant 0 : i32
    %c0_i32_1 = arith.constant 0 : i32
    %c0_i32_2 = arith.constant 0 : i32
    return %c0_i32, %c0_i32_0, %c0_i32_1 : i32, i32, i32
  }
  func.func @transform_10(%arg0: i32) -> (i32, i32, i32) {
    %c0_i32 = arith.constant 0 : i32
    %c0_i32_0 = arith.constant 0 : i32
    %c0_i32_1 = arith.constant 0 : i32
    %c0_i32_2 = arith.constant 0 : i32
    return %c0_i32, %c0_i32_0, %c0_i32_1 : i32, i32, i32
  }
  func.func @transform_11(%arg0: i32) -> (i32, i32, i32) {
    %c0_i32 = arith.constant 0 : i32
    %c0_i32_0 = arith.constant 0 : i32
    %c0_i32_1 = arith.constant 0 : i32
    %c0_i32_2 = arith.constant 0 : i32
    return %c0_i32, %c0_i32_0, %c0_i32_1 : i32, i32, i32
  }
  func.func @transform_12(%arg0: i32) -> (i32, i32, i32) {
    %c0_i32 = arith.constant 0 : i32
    %c0_i32_0 = arith.constant 0 : i32
    %c0_i32_1 = arith.constant 0 : i32
    %c0_i32_2 = arith.constant 0 : i32
    return %c0_i32, %c0_i32_0, %c0_i32_1 : i32, i32, i32
  }
  func.func @transform_13(%arg0: i32) -> (i32, i32, i32) {
    %c0_i32 = arith.constant 0 : i32
    %c0_i32_0 = arith.constant 0 : i32
    %c0_i32_1 = arith.constant 0 : i32
    %c0_i32_2 = arith.constant 0 : i32
    return %c0_i32, %c0_i32_0, %c0_i32_1 : i32, i32, i32
  }
  func.func @transform_14(%arg0: i32) -> (i32, i32, i32) {
    %c0_i32 = arith.constant 0 : i32
    %c0_i32_0 = arith.constant 0 : i32
    %c0_i32_1 = arith.constant 0 : i32
    %c0_i32_2 = arith.constant 0 : i32
    return %c0_i32, %c0_i32_0, %c0_i32_1 : i32, i32, i32
  }
  func.func @transform_15(%arg0: i32) -> (i32, i32, i32) {
    %c0_i32 = arith.constant 0 : i32
    %c0_i32_0 = arith.constant 0 : i32
    %c0_i32_1 = arith.constant 0 : i32
    %c0_i32_2 = arith.constant 0 : i32
    return %c0_i32, %c0_i32_0, %c0_i32_1 : i32, i32, i32
  }
  func.func @transform_16(%arg0: i32) -> (i32, i32, i32) {
    %c0_i32 = arith.constant 0 : i32
    %c0_i32_0 = arith.constant 0 : i32
    %c0_i32_1 = arith.constant 0 : i32
    %c0_i32_2 = arith.constant 0 : i32
    return %c0_i32, %c0_i32_0, %c0_i32_1 : i32, i32, i32
  }
  func.func @transform_17(%arg0: i32) -> (i32, i32, i32) {
    %c0_i32 = arith.constant 0 : i32
    %c0_i32_0 = arith.constant 0 : i32
    %c0_i32_1 = arith.constant 0 : i32
    %c0_i32_2 = arith.constant 0 : i32
    return %c0_i32, %c0_i32_0, %c0_i32_1 : i32, i32, i32
  }
  func.func @transform_18(%arg0: i32) -> (i32, i32, i32) {
    %c0_i32 = arith.constant 0 : i32
    %c0_i32_0 = arith.constant 0 : i32
    %c0_i32_1 = arith.constant 0 : i32
    %c0_i32_2 = arith.constant 0 : i32
    return %c0_i32, %c0_i32_0, %c0_i32_1 : i32, i32, i32
  }
  func.func @transform_19(%arg0: i32) -> (i32, i32) {
    %c0_i32 = arith.constant 0 : i32
    %c0_i32_0 = arith.constant 0 : i32
    %c0_i32_1 = arith.constant 0 : i32
    return %c0_i32, %c0_i32_0 : i32, i32
  }
  func.func @transform_20(%arg0: i32) -> (i32, i32) {
    %c0_i32 = arith.constant 0 : i32
    %c0_i32_0 = arith.constant 0 : i32
    %c0_i32_1 = arith.constant 0 : i32
    return %c0_i32, %c0_i32_0 : i32, i32
  }
  func.func @transform_21(%arg0: i32) -> (i32, i32) {
    %c0_i32 = arith.constant 0 : i32
    %c0_i32_0 = arith.constant 0 : i32
    %c0_i32_1 = arith.constant 0 : i32
    return %c0_i32, %c0_i32_0 : i32, i32
  }
  func.func @transform_22(%arg0: i32) -> (i32, i32) {
    %c0_i32 = arith.constant 0 : i32
    %c0_i32_0 = arith.constant 0 : i32
    %c0_i32_1 = arith.constant 0 : i32
    return %c0_i32, %c0_i32_0 : i32, i32
  }
  func.func @transform_23(%arg0: i32) -> (i32, i32) {
    %c0_i32 = arith.constant 0 : i32
    %c0_i32_0 = arith.constant 0 : i32
    %c0_i32_1 = arith.constant 0 : i32
    return %c0_i32, %c0_i32_0 : i32, i32
  }
}

</mosaic_0001>

<llo_original>
// kernel: bert_ner_forward.1
$region0: #{bert_ner_forward.1}
  #allocation0 [shape = 'u32[]', space=smem, size = 0x4, offset = 0x4, fixed_abs, tag = 'smem constant byte address 0x4 - core index']
  #allocation1 [shape = 'u32[144,128]{1,0:T(1,128)}', space=vmem, size = 0x12000, scoped, tag = 'internal scratch']
  %s0 = inlined_call_operand.vmem [shape: s32[16,1], index: 0, kind: input, shape index: {}]
  %s1 = inlined_call_operand.vmem [shape: s32[2,1], index: 1, kind: input, shape index: {}]
  %s2 = inlined_call_operand.vmem [shape: s32[12,1], index: 2, kind: input, shape index: {}]
  %s3 = inlined_call_operand.vmem [shape: f32[128,32], index: 3, kind: input, shape index: {}]
  %s4 = inlined_call_operand.vmem [shape: f32[32,32], index: 4, kind: input, shape index: {}]
  %s5 = inlined_call_operand.vmem [shape: f32[1,32], index: 5, kind: input, shape index: {}]
  %s6 = inlined_call_operand.vmem [shape: f32[1,32], index: 6, kind: input, shape index: {}]
  %s7 = inlined_call_operand.vmem [shape: bf16[2,32,96], index: 7, kind: input, shape index: {}]
  %s8 = inlined_call_operand.vmem [shape: f32[2,1,96], index: 8, kind: input, shape index: {}]
  %s9 = inlined_call_operand.vmem [shape: bf16[2,32,32], index: 9, kind: input, shape index: {}]
  %s10 = inlined_call_operand.vmem [shape: f32[2,1,32], index: 10, kind: input, shape index: {}]
  %s11 = inlined_call_operand.vmem [shape: f32[2,1,32], index: 11, kind: input, shape index: {}]
  %s12 = inlined_call_operand.vmem [shape: f32[2,1,32], index: 12, kind: input, shape index: {}]
  %s13 = inlined_call_operand.vmem [shape: bf16[2,32,64], index: 13, kind: input, shape index: {}]
  %s14 = inlined_call_operand.vmem [shape: f32[2,1,64], index: 14, kind: input, shape index: {}]
  %s15 = inlined_call_operand.vmem [shape: bf16[2,64,32], index: 15, kind: input, shape index: {}]
  %s16 = inlined_call_operand.vmem [shape: f32[2,1,32], index: 16, kind: input, shape index: {}]
  %s17 = inlined_call_operand.vmem [shape: f32[2,1,32], index: 17, kind: input, shape index: {}]
  %s18 = inlined_call_operand.vmem [shape: f32[2,1,32], index: 18, kind: input, shape index: {}]
  %s19 = inlined_call_operand.vmem [shape: bf16[32,32], index: 19, kind: input, shape index: {}]
  %s20 = inlined_call_operand.vmem [shape: f32[1,32], index: 20, kind: input, shape index: {}]
  %s21 = inlined_call_operand.vmem [shape: bf16[32,128], index: 21, kind: input, shape index: {}]
  %s22 = inlined_call_operand.vmem [shape: f32[1,128], index: 22, kind: input, shape index: {}]
  %s23 = inlined_call_operand.vmem [shape: f32[12,128], index: 23, kind: output, shape index: {}]
  %s24 = sld [smem:[#allocation0]]
  $region102: #{bert_ner_forward.1} parent=0
    _
  %s26 = ssub.s32 1, %s24
  %s27 = scalar_select 0, %s26, %s24
  // Predicated region
  $region2: #{bert_ner_forward.1} parent=0 // pred_check
    _
  $region3: #{bert_ner_forward.1} parent=0 // pred_check_branch
    %29 = sbr.rel (0) target = $region5
  $region4: #{bert_ner_forward.1} parent=0 // pred_region
    _
  $region5: #{bert_ner_forward.1} parent=0 // pred_fallthru
    _
  // Predicated region
  $region6: #{bert_ner_forward.1} parent=0 // pred_check
    _
  $region7: #{bert_ner_forward.1} parent=0 // pred_check_branch
    %31 = sbr.rel (0) target = $region9
  $region8: #{bert_ner_forward.1} parent=0 // pred_region
    _
  $region9: #{bert_ner_forward.1} parent=0 // pred_fallthru
    _
  // Predicated region
  $region10: #{bert_ner_forward.1} parent=0 // pred_check
    _
  $region11: #{bert_ner_forward.1} parent=0 // pred_check_branch
    %33 = sbr.rel (0) target = $region13
  $region12: #{bert_ner_forward.1} parent=0 // pred_region
    _
  $region13: #{bert_ner_forward.1} parent=0 // pred_fallthru
    _
  // Predicated region
  $region14: #{bert_ner_forward.1} parent=0 // pred_check
    _
  $region15: #{bert_ner_forward.1} parent=0 // pred_check_branch
    %35 = sbr.rel (0) target = $region17
  $region16: #{bert_ner_forward.1} parent=0 // pred_region
    _
  $region17: #{bert_ner_forward.1} parent=0 // pred_fallthru
    _
  // Predicated region
  $region18: #{bert_ner_forward.1} parent=0 // pred_check
    _
  $region19: #{bert_ner_forward.1} parent=0 // pred_check_branch
    %37 = sbr.rel (0) target = $region21
  $region20: #{bert_ner_forward.1} parent=0 // pred_region
    _
  $region21: #{bert_ner_forward.1} parent=0 // pred_fallthru
    _
  // Predicated region
  $region22: #{bert_ner_forward.1} parent=0 // pred_check
    _
  $region23: #{bert_ner_forward.1} parent=0 // pred_check_branch
    %39 = sbr.rel (0) target = $region25
  $region24: #{bert_ner_forward.1} parent=0 // pred_region
    _
  $region25: #{bert_ner_forward.1} parent=0 // pred_fallthru
    _
  // Predicated region
  $region26: #{bert_ner_forward.1} parent=0 // pred_check
    _
  $region27: #{bert_ner_forward.1} parent=0 // pred_check_branch
    %41 = sbr.rel (0) target = $region29
  $region28: #{bert_ner_forward.1} parent=0 // pred_region
    _
  $region29: #{bert_ner_forward.1} parent=0 // pred_fallthru
    _
  // Predicated region
  $region30: #{bert_ner_forward.1} parent=0 // pred_check
    _
  $region31: #{bert_ner_forward.1} parent=0 // pred_check_branch
    %43 = sbr.rel (0) target = $region33
  $region32: #{bert_ner_forward.1} parent=0 // pred_region
    _
  $region33: #{bert_ner_forward.1} parent=0 // pred_fallthru
    _
  // Predicated region
  $region34: #{bert_ner_forward.1} parent=0 // pred_check
    _
  $region35: #{bert_ner_forward.1} parent=0 // pred_check_branch
    %45 = sbr.rel (0) target = $region37
  $region36: #{bert_ner_forward.1} parent=0 // pred_region
    _
  $region37: #{bert_ner_forward.1} parent=0 // pred_fallthru
    _
  // Predicated region
  $region38: #{bert_ner_forward.1} parent=0 // pred_check
    _
  $region39: #{bert_ner_forward.1} parent=0 // pred_check_branch
    %47 = sbr.rel (0) target = $region41
  $region40: #{bert_ner_forward.1} parent=0 // pred_region
    _
  $region41: #{bert_ner_forward.1} parent=0 // pred_fallthru
    _
  // Predicated region
  $region42: #{bert_ner_forward.1} parent=0 // pred_check
    _
  $region43: #{bert_ner_forward.1} parent=0 // pred_check_branch
    %49 = sbr.rel (0) target = $region45
  $region44: #{bert_ner_forward.1} parent=0 // pred_region
    _
  $region45: #{bert_ner_forward.1} parent=0 // pred_fallthru
    _
  // Predicated region
  $region46: #{bert_ner_forward.1} parent=0 // pred_check
    _
  $region47: #{bert_ner_forward.1} parent=0 // pred_check_branch
    %51 = sbr.rel (0) target = $region49
  $region48: #{bert_ner_forward.1} parent=0 // pred_region
    _
  $region49: #{bert_ner_forward.1} parent=0 // pred_fallthru
    _
  // Predicated region
  $region50: #{bert_ner_forward.1} parent=0 // pred_check
    _
  $region51: #{bert_ner_forward.1} parent=0 // pred_check_branch
    %53 = sbr.rel (0) target = $region53
  $region52: #{bert_ner_forward.1} parent=0 // pred_region
    _
  $region53: #{bert_ner_forward.1} parent=0 // pred_fallthru
    _
  // Predicated region
  $region54: #{bert_ner_forward.1} parent=0 // pred_check
    _
  $region55: #{bert_ner_forward.1} parent=0 // pred_check_branch
    %55 = sbr.rel (0) target = $region57
  $region56: #{bert_ner_forward.1} parent=0 // pred_region
    _
  $region57: #{bert_ner_forward.1} parent=0 // pred_fallthru
    _
  // Predicated region
  $region58: #{bert_ner_forward.1} parent=0 // pred_check
    _
  $region59: #{bert_ner_forward.1} parent=0 // pred_check_branch
    %57 = sbr.rel (0) target = $region61
  $region60: #{bert_ner_forward.1} parent=0 // pred_region
    _
  $region61: #{bert_ner_forward.1} parent=0 // pred_fallthru
    _
  // Predicated region
  $region62: #{bert_ner_forward.1} parent=0 // pred_check
    _
  $region63: #{bert_ner_forward.1} parent=0 // pred_check_branch
    %59 = sbr.rel (0) target = $region65
  $region64: #{bert_ner_forward.1} parent=0 // pred_region
    _
  $region65: #{bert_ner_forward.1} parent=0 // pred_fallthru
    _
  // Predicated region
  $region66: #{bert_ner_forward.1} parent=0 // pred_check
    _
  $region67: #{bert_ner_forward.1} parent=0 // pred_check_branch
    %61 = sbr.rel (0) target = $region69
  $region68: #{bert_ner_forward.1} parent=0 // pred_region
    _
  $region69: #{bert_ner_forward.1} parent=0 // pred_fallthru
    _
  // Predicated region
  $region70: #{bert_ner_forward.1} parent=0 // pred_check
    _
  $region71: #{bert_ner_forward.1} parent=0 // pred_check_branch
    %63 = sbr.rel (0) target = $region73
  $region72: #{bert_ner_forward.1} parent=0 // pred_region
    _
  $region73: #{bert_ner_forward.1} parent=0 // pred_fallthru
    _
  // Predicated region
  $region74: #{bert_ner_forward.1} parent=0 // pred_check
    _
  $region75: #{bert_ner_forward.1} parent=0 // pred_check_branch
    %65 = sbr.rel (0) target = $region77
  $region76: #{bert_ner_forward.1} parent=0 // pred_region
    _
  $region77: #{bert_ner_forward.1} parent=0 // pred_fallthru
    _
  // Predicated region
  $region78: #{bert_ner_forward.1} parent=0 // pred_check
    _
  $region79: #{bert_ner_forward.1} parent=0 // pred_check_branch
    %67 = sbr.rel (0) target = $region81
  $region80: #{bert_ner_forward.1} parent=0 // pred_region
    _
  $region81: #{bert_ner_forward.1} parent=0 // pred_fallthru
    _
  // Predicated region
  $region82: #{bert_ner_forward.1} parent=0 // pred_check
    _
  $region83: #{bert_ner_forward.1} parent=0 // pred_check_branch
    %69 = sbr.rel (0) target = $region85
  $region84: #{bert_ner_forward.1} parent=0 // pred_region
    _
  $region85: #{bert_ner_forward.1} parent=0 // pred_fallthru
    _
  // Predicated region
  $region86: #{bert_ner_forward.1} parent=0 // pred_check
    _
  $region87: #{bert_ner_forward.1} parent=0 // pred_check_branch
    %71 = sbr.rel (0) target = $region89
  $region88: #{bert_ner_forward.1} parent=0 // pred_region
    _
  $region89: #{bert_ner_forward.1} parent=0 // pred_fallthru
    _
  // Predicated region
  $region90: #{bert_ner_forward.1} parent=0 // pred_check
    _
  $region91: #{bert_ner_forward.1} parent=0 // pred_check_branch
    %73 = sbr.rel (0) target = $region93
  $region92: #{bert_ner_forward.1} parent=0 // pred_region
    _
  $region93: #{bert_ner_forward.1} parent=0 // pred_fallthru
    _
  %v75 = vlaneseq
  %v76 = vand.u32 %v75, 127
  %v77 = vld [vmem:[%s0] sm:$0xff]
  %v78 = vld [vmem:[%s0 + $0x8] sm:$0xff]
  %79 = vset.pattern.permute.xlu0 0
  %80 = vperm.xlu0 %79, %v77
  %v81 = vpop.permute.xlu0 %80
  %82 = vset.pattern.permute.xlu0 0
  %83 = vperm.xlu0 %82, %v78
  %v84 = vpop.permute.xlu0 %83
  %vm85 = vcmp.eq.s32.totalorder %v76, %v81
  %vm86 = vcmp.eq.s32.totalorder %v76, %v84
  %v87 = vsel %vm85, 1, 0
  %v88 = vsel %vm86, 1, 0
  %v89 = vcvt.s32.f32 %v87
  %v90 = vcvt.s32.f32 %v88
  %v91 = vld [vmem:[%s3] sm:$0xff]
  %v92 = vld [vmem:[%s3 + $0x8] sm:$0xff]
  %v93 = vld [vmem:[%s3 + $0x10] sm:$0xff]
  %v94 = vld [vmem:[%s3 + $0x18] sm:$0xff]
  %v95 = vld [vmem:[%s3 + $0x20] sm:$0xff]
  %v96 = vld [vmem:[%s3 + $0x28] sm:$0xff]
  %v97 = vld [vmem:[%s3 + $0x30] sm:$0xff]
  %v98 = vld [vmem:[%s3 + $0x38] sm:$0xff]
  %v99 = vld [vmem:[%s3 + $0x40] sm:$0xff]
  %v100 = vld [vmem:[%s3 + $0x48] sm:$0xff]
  %v101 = vld [vmem:[%s3 + $0x50] sm:$0xff]
  %v102 = vld [vmem:[%s3 + $0x58] sm:$0xff]
  %v103 = vld [vmem:[%s3 + $0x60] sm:$0xff]
  %v104 = vld [vmem:[%s3 + $0x68] sm:$0xff]
  %v105 = vld [vmem:[%s3 + $0x70] sm:$0xff]
  %v106 = vld [vmem:[%s3 + $0x78] sm:$0xff]
  %107 = vmatprep.subr.mxu0 0.0
  %108 = vmatpush1.msra.mxu0 %v91
  %109 = vmatprep.subr.mxu0 0.0
  %110 = vmatpush1.msra.mxu0 %v92
  %111 = vmatprep.subr.mxu0 0.0
  %112 = vmatpush1.msra.mxu0 %v93
  %113 = vmatprep.subr.mxu0 0.0
  %114 = vmatpush1.msra.mxu0 %v94
  %115 = vmatprep.subr.mxu0 0.0
  %116 = vmatpush1.msra.mxu0 %v95
  %117 = vmatprep.subr.mxu0 0.0
  %118 = vmatpush1.msra.mxu0 %v96
  %119 = vmatprep.subr.mxu0 0.0
  %120 = vmatpush1.msra.mxu0 %v97
  %121 = vmatprep.subr.mxu0 0.0
  %122 = vmatpush1.msra.mxu0 %v98
  %123 = vmatprep.subr.mxu0 0.0
  %124 = vmatpush1.msra.mxu0 %v99
  %125 = vmatprep.subr.mxu0 0.0
  %126 = vmatpush1.msra.mxu0 %v100
  %127 = vmatprep.subr.mxu0 0.0
  %128 = vmatpush1.msra.mxu0 %v101
  %129 = vmatprep.subr.mxu0 0.0
  %130 = vmatpush1.msra.mxu0 %v102
  %131 = vmatprep.subr.mxu0 0.0
  %132 = vmatpush1.msra.mxu0 %v103
  %133 = vmatprep.subr.mxu0 0.0
  %134 = vmatpush1.msra.mxu0 %v104
  %135 = vmatprep.subr.mxu0 0.0
  %136 = vmatpush1.msra.mxu0 %v105
  %137 = vmatprep.subr.mxu0 0.0
  %138 = vmatpush1.msra.mxu0 %v106
  %139 = vmatprep.subr.mxu0 0.0
  %140 = vmatpush1.msra.mxu0 0.0
  %141 = vmatprep.subr.mxu0 0.0
  %142 = vmatpush1.msra.mxu0 0.0
  %143 = vmatprep.subr.mxu0 0.0
  %144 = vmatpush1.msra.mxu0 0.0
  %145 = vmatprep.subr.mxu0 0.0
  %146 = vmatpush1.msra.mxu0 0.0
  %147 = vmatprep.subr.mxu0 0.0
  %148 = vmatpush1.msra.mxu0 0.0
  %149 = vmatprep.subr.mxu0 0.0
  %150 = vmatpush1.msra.mxu0 0.0
  %151 = vmatprep.subr.mxu0 0.0
  %152 = vmatpush1.msra.mxu0 0.0
  %153 = vmatprep.subr.mxu0 0.0
  %154 = vmatpush1.msra.mxu0 0.0
  %155 = vmatprep.subr.mxu0 0.0
  %156 = vmatpush1.msra.mxu0 0.0
  %157 = vmatprep.subr.mxu0 0.0
  %158 = vmatpush1.msra.mxu0 0.0
  %159 = vmatprep.subr.mxu0 0.0
  %160 = vmatpush1.msra.mxu0 0.0
  %161 = vmatprep.subr.mxu0 0.0
  %162 = vmatpush1.msra.mxu0 0.0
  %163 = vmatprep.subr.mxu0 0.0
  %164 = vmatpush1.msra.mxu0 0.0
  %165 = vmatprep.subr.mxu0 0.0
  %166 = vmatpush1.msra.mxu0 0.0
  %167 = vmatprep.subr.mxu0 0.0
  %168 = vmatpush1.msra.mxu0 0.0
  %169 = vmatprep.subr.mxu0 0.0
  %170 = vmatpush1.msra.mxu0 0.0
  %171 = vmatprep.mubr.f32.mxu0 0.0
  %172 = vmatmul.mubr.f32.gmra.mrb[0].mxu0 %v89
  %v173 = vpop.f32.mrb[0].mxu0
  %v174 = vadd.f32 0.0, %v173
  %v175 = vpop.f32.mrb[0].mxu0
  %176 = vmatprep.mubr.f32.mxu0 0.0
  %177 = vmatmul.mubr.f32.gmra.mrb[0].mxu0 %v90
  %v178 = vpop.f32.mrb[0].mxu0
  %v179 = vadd.f32 0.0, %v178
  %v180 = vpop.f32.mrb[0].mxu0
  %181 = vdwg.mxu0
  %v182 = vld [vmem:[%s4] sm:$0xff]
  %v183 = vadd.f32 %v174, %v182
  %v184 = vadd.f32 %v179, %v182
  %v185 = vld [vmem:[%s5] sm:$0x1]
  %v186 = vld [vmem:[%s6] sm:$0x1]
  %vm187 = vcmask 261120
  %v188 = vsel %vm187, %v183, 0.0
  %189 = vadd.xlane.f32.xlu0 %v188
  %v190 = vpop.xlane.xlu0 %189
  %v191 = vsel %vm187, %v184, 0.0
  %192 = vadd.xlane.f32.xlu0 %v191
  %v193 = vpop.xlane.xlu0 %192
  %v194 = vrcp.pop 32.0
  %v195 = vmul.f32 %v190, %v194
  %v196 = vmul.f32 %v193, %v194
  %v197 = vsub.f32 %v183, %v195
  %v198 = vsub.f32 %v184, %v196
  %v199 = vmul.f32 %v197, %v197
  %v200 = vmul.f32 %v198, %v198
  %v201 = vsel %vm187, %v199, 0.0
  %202 = vadd.xlane.f32.xlu0 %v201
  %v203 = vpop.xlane.xlu0 %202
  %v204 = vsel %vm187, %v200, 0.0
  %205 = vadd.xlane.f32.xlu0 %v204
  %v206 = vpop.xlane.xlu0 %205
  %v207 = vmul.f32 %v203, %v194
  %v208 = vmul.f32 %v206, %v194
  %v209 = vadd.f32 %v207, 1e-12
  %v210 = vadd.f32 %v208, 1e-12
  %v211 = vrsqrt.pop %v209
  %v212 = vrsqrt.pop %v210
  %v213 = vmul.f32 %v197, %v211
  %v214 = vmul.f32 %v198, %v212
  %v216 = vlaneseq
  %v217 = vshrl.u32 %v216, 7
  %v218 = vsub.s32 0, %v217
  %v219 = vrot.slane %v185, %v218
  %v221 = vmul.f32 %v213, %v219
  %v222 = vmul.f32 %v214, %v219
  %v224 = vlaneseq
  %v225 = vshrl.u32 %v224, 7
  %v226 = vsub.s32 0, %v225
  %v227 = vrot.slane %v186, %v226
  %v229 = vadd.f32 %v221, %v227
  %v230 = vadd.f32 %v222, %v227
  %v231 = vld [vmem:[%s1] sm:$0x3]
  %232 = vset.pattern.permute.xlu0 0
  %233 = vperm.xlu0 %232, %v231
  %v234 = vpop.permute.xlu0 %233
  %vm235 = vcmp.lt.s32.totalorder %v76, %v234
  %v236 = vsel %vm235, 0.0, -10000.0
  %v239 = vunpack.c.l.s4 1966171168
  %v240 = vunpack.c.0.s8 %v239
  %v241 = vlaneseq
  %v242 = vshrl.u32 %v241, 7
  %v243 = vsub.s32 %v240, %v242
  %v244 = vrot.slane %v236, %v243
  %v245 = vcombine.high %v244, %v244
  %v247 = vunpack.c.l.s4 1966171168
  %v248 = vunpack.c.0.s8 %v247
  %v249 = vlaneseq
  %v250 = vshrl.u32 %v249, 7
  %v251 = vsub.s32 %v248, %v250
  %v252 = vrot.slane %v244, %v251
  %v254 = vunpack.c.l.s4 1966171168
  %v255 = vunpack.c.0.s8 %v254
  %v256 = vlaneseq
  %v257 = vshrl.u32 %v256, 7
  %v258 = vsub.s32 %v255, %v257
  %v259 = vrot.slane %v245, %v258
  %v260 = vpack.c.bf16 %v230, %v229
  %v261 = vld [vmem:[%s7] sm:$0xf]
  %v262 = vld [vmem:[%s7 + $0x4] sm:$0xf]
  %v263 = vld [vmem:[%s7 + $0x8] sm:$0xf]
  %v264 = vld [vmem:[%s7 + $0xc] sm:$0xf]
  %v265 = vld [vmem:[%s8] sm:$0x1]
  %v267 = vlaneseq
  %v268 = vshrl.u32 %v267, 7
  %v269 = vsub.s32 0, %v268
  %v270 = vrot.slane %v265, %v269
  %v276 = vunpack.c.l.b16 %v261
  %v277 = vunpack.c.l.b16 %v262
  %v278 = vunpack.c.l.b16 %v263
  %v279 = vunpack.c.l.b16 %v264
  %v280 = vpack.c.b16 %v277, %v276
  %v281 = vpack.c.b16 %v279, %v278
  %v285 = vsel %vm187, %v260, 0
  %287 = vmatprep.subr.bf16.mxu0 0
  %288 = vmatpush1.bf16.msra.mxu0 %v280
  %289 = vmatprep.subr.bf16.mxu0 0
  %290 = vmatpush1.bf16.msra.mxu0 %v281
  %291 = vmatprep.subr.bf16.mxu0 0
  %292 = vmatpush1.bf16.msra.mxu0 0
  %293 = vmatprep.subr.bf16.mxu0 0
  %294 = vmatpush1.bf16.msra.mxu0 0
  %295 = vmatprep.subr.bf16.mxu0 0
  %296 = vmatpush1.bf16.msra.mxu0 0
  %297 = vmatprep.subr.bf16.mxu0 0
  %298 = vmatpush1.bf16.msra.mxu0 0
  %299 = vmatprep.subr.bf16.mxu0 0
  %300 = vmatpush1.bf16.msra.mxu0 0
  %301 = vmatprep.subr.bf16.mxu0 0
  %302 = vmatpush1.bf16.msra.mxu0 0
  %303 = vmatprep.subr.bf16.mxu0 0
  %304 = vmatpush1.bf16.msra.mxu0 0
  %305 = vmatprep.subr.bf16.mxu0 0
  %306 = vmatpush1.bf16.msra.mxu0 0
  %307 = vmatprep.subr.bf16.mxu0 0
  %308 = vmatpush1.bf16.msra.mxu0 0
  %309 = vmatprep.subr.bf16.mxu0 0
  %310 = vmatpush1.bf16.msra.mxu0 0
  %311 = vmatprep.subr.bf16.mxu0 0
  %312 = vmatpush1.bf16.msra.mxu0 0
  %313 = vmatprep.subr.bf16.mxu0 0
  %314 = vmatpush1.bf16.msra.mxu0 0
  %315 = vmatprep.subr.bf16.mxu0 0
  %316 = vmatpush1.bf16.msra.mxu0 0
  %317 = vmatprep.subr.bf16.mxu0 0
  %318 = vmatpush1.bf16.msra.mxu0 0
  %319 = vmatprep.mubr.bf16.mxu0 0
  %320 = vmatmul.mubr.bf16.gmra.mrb[0].mxu0 %v285
  %v321 = vpop.f32.mrb[0].mxu0
  %v322 = vadd.f32 %v270, %v321
  %v323 = vpop.f32.mrb[0].mxu0
  %v324 = vpop.f32.mrb[0].mxu0
  %v325 = vadd.f32 %v270, %v324
  %v326 = vpop.f32.mrb[0].mxu0
  %327 = vdwg.mxu0
  %v328 = vpack.c.bf16 %v322, %v322
  %v329 = vpack.c.bf16 %v325, %v325
  %331 = vrot.lane.b32.xlu0 %v328, 96
  %v332 = vpop.permute.xlu0 %331
  %vm333 = vcmask 130048
  %v335 = vsel %vm333, %v328, 0
  %v338 = vsel %vm333, %v332, 0
  %340 = vmatprep.subr.bf16.mxu0 0
  %341 = vmatpush1.bf16.xpose.msra.mxu0 %v338
  %342 = vmatprep.subr.bf16.mxu0 0
  %343 = vmatpush1.bf16.xpose.msra.mxu0 0
  %344 = vmatprep.subr.bf16.mxu0 0
  %345 = vmatpush1.bf16.xpose.msra.mxu0 0
  %346 = vmatprep.subr.bf16.mxu0 0
  %347 = vmatpush1.bf16.xpose.msra.mxu0 0
  %348 = vmatprep.subr.bf16.mxu0 0
  %349 = vmatpush1.bf16.xpose.msra.mxu0 0
  %350 = vmatprep.subr.bf16.mxu0 0
  %351 = vmatpush1.bf16.xpose.msra.mxu0 0
  %352 = vmatprep.subr.bf16.mxu0 0
  %353 = vmatpush1.bf16.xpose.msra.mxu0 0
  %354 = vmatprep.subr.bf16.mxu0 0
  %355 = vmatpush1.bf16.xpose.msra.mxu0 0
  %356 = vmatprep.subr.bf16.mxu0 0
  %357 = vmatpush1.bf16.xpose.msra.mxu0 0
  %358 = vmatprep.subr.bf16.mxu0 0
  %359 = vmatpush1.bf16.xpose.msra.mxu0 0
  %360 = vmatprep.subr.bf16.mxu0 0
  %361 = vmatpush1.bf16.xpose.msra.mxu0 0
  %362 = vmatprep.subr.bf16.mxu0 0
  %363 = vmatpush1.bf16.xpose.msra.mxu0 0
  %364 = vmatprep.subr.bf16.mxu0 0
  %365 = vmatpush1.bf16.xpose.msra.mxu0 0
  %366 = vmatprep.subr.bf16.mxu0 0
  %367 = vmatpush1.bf16.xpose.msra.mxu0 0
  %368 = vmatprep.subr.bf16.mxu0 0
  %369 = vmatpush1.bf16.xpose.msra.mxu0 0
  %370 = vmatprep.subr.bf16.mxu0 0
  %371 = vmatpush1.bf16.xpose.msra.mxu0 0
  %372 = vmatprep.mubr.bf16.mxu0 0
  %373 = vmatmul.mubr.bf16.gmra.mrb[0].mxu0 %v335
  %v374 = vpop.f32.mrb[0].mxu0
  %v375 = vadd.f32 0.0, %v374
  %v376 = vpop.f32.mrb[0].mxu0
  %v377 = vpop.f32.mrb[0].mxu0
  %v378 = vpop.f32.mrb[0].mxu0
  %379 = vdwg.mxu0
  %381 = vrot.lane.b32.xlu0 %v329, 96
  %v382 = vpop.permute.xlu0 %381
  %v384 = vsel %vm333, %v329, 0
  %v387 = vsel %vm333, %v382, 0
  %389 = vmatprep.subr.bf16.mxu0 0
  %390 = vmatpush1.bf16.xpose.msra.mxu0 %v387
  %391 = vmatprep.subr.bf16.mxu0 0
  %392 = vmatpush1.bf16.xpose.msra.mxu0 0
  %393 = vmatprep.subr.bf16.mxu0 0
  %394 = vmatpush1.bf16.xpose.msra.mxu0 0
  %395 = vmatprep.subr.bf16.mxu0 0
  %396 = vmatpush1.bf16.xpose.msra.mxu0 0
  %397 = vmatprep.subr.bf16.mxu0 0
  %398 = vmatpush1.bf16.xpose.msra.mxu0 0
  %399 = vmatprep.subr.bf16.mxu0 0
  %400 = vmatpush1.bf16.xpose.msra.mxu0 0
  %401 = vmatprep.subr.bf16.mxu0 0
  %402 = vmatpush1.bf16.xpose.msra.mxu0 0
  %403 = vmatprep.subr.bf16.mxu0 0
  %404 = vmatpush1.bf16.xpose.msra.mxu0 0
  %405 = vmatprep.subr.bf16.mxu0 0
  %406 = vmatpush1.bf16.xpose.msra.mxu0 0
  %407 = vmatprep.subr.bf16.mxu0 0
  %408 = vmatpush1.bf16.xpose.msra.mxu0 0
  %409 = vmatprep.subr.bf16.mxu0 0
  %410 = vmatpush1.bf16.xpose.msra.mxu0 0
  %411 = vmatprep.subr.bf16.mxu0 0
  %412 = vmatpush1.bf16.xpose.msra.mxu0 0
  %413 = vmatprep.subr.bf16.mxu0 0
  %414 = vmatpush1.bf16.xpose.msra.mxu0 0
  %415 = vmatprep.subr.bf16.mxu0 0
  %416 = vmatpush1.bf16.xpose.msra.mxu0 0
  %417 = vmatprep.subr.bf16.mxu0 0
  %418 = vmatpush1.bf16.xpose.msra.mxu0 0
  %419 = vmatprep.subr.bf16.mxu0 0
  %420 = vmatpush1.bf16.xpose.msra.mxu0 0
  %421 = vmatprep.mubr.bf16.mxu0 0
  %422 = vmatmul.mubr.bf16.gmra.mrb[0].mxu0 %v384
  %v423 = vpop.f32.mrb[0].mxu0
  %v424 = vadd.f32 0.0, %v423
  %v425 = vpop.f32.mrb[0].mxu0
  %v426 = vpop.f32.mrb[0].mxu0
  %v427 = vpop.f32.mrb[0].mxu0
  %428 = vdwg.mxu0
  %v429 = vmul.f32 %v375, 0.25
  %v430 = vmul.f32 %v424, 0.25
  %v431 = vlaneseq
  %v432 = vshrl.u32 %v431, 7
  %v433 = vsub.s32 0, %v432
  %v434 = vrot.slane %v252, %v433
  %v435 = vlaneseq
  %v436 = vshrl.u32 %v435, 7
  %v437 = vsub.s32 0, %v436
  %v438 = vrot.slane %v259, %v437
  %v441 = vadd.f32 %v429, %v434
  %v442 = vadd.f32 %v430, %v438
  %vm443 = vcmask 64512
  %v444 = vsel %vm443, %v441, -inf
  %445 = vmax.xlane.f32.xlu0 %v444
  %v446 = vpop.xlane.xlu0 %445
  %v447 = vsel %vm443, %v442, -inf
  %448 = vmax.xlane.f32.xlu0 %v447
  %v449 = vpop.xlane.xlu0 %448
  %v450 = vsub.f32 %v441, %v446
  %v451 = vsub.f32 %v442, %v449
  %v452 = vmul.f32 %v450, 1.442695
  %v453 = vpow.pop %v452
  %v454 = vmul.f32 %v451, 1.442695
  %v455 = vpow.pop %v454
  %v456 = vsel %vm443, %v453, 0.0
  %457 = vadd.xlane.f32.xlu0 %v456
  %v458 = vpop.xlane.xlu0 %457
  %v459 = vsel %vm443, %v455, 0.0
  %460 = vadd.xlane.f32.xlu0 %v459
  %v461 = vpop.xlane.xlu0 %460
  %v462 = vrcp.pop %v458
  %v463 = vrcp.pop %v461
  %v464 = vmul.f32 %v453, %v462
  %v465 = vmul.f32 %v455, %v463
  %v466 = vpack.c.bf16 %v464, %v464
  %v467 = vpack.c.bf16 %v465, %v465
  %468 = vrot.lane.b32.xlu0 %v328, 64
  %v469 = vpop.permute.xlu0 %468
  %v471 = vsel %vm443, %v466, 0
  %vm473 = vcmask 1043456
  %v475 = vsel %vm473, %v469, 0
  %477 = vmatprep.subr.bf16.mxu0 0
  %478 = vmatpush1.bf16.msra.mxu0 %v475
  %479 = vmatprep.subr.bf16.mxu0 0
  %480 = vmatpush1.bf16.msra.mxu0 0
  %481 = vmatprep.subr.bf16.mxu0 0
  %482 = vmatpush1.bf16.msra.mxu0 0
  %483 = vmatprep.subr.bf16.mxu0 0
  %484 = vmatpush1.bf16.msra.mxu0 0
  %485 = vmatprep.subr.bf16.mxu0 0
  %486 = vmatpush1.bf16.msra.mxu0 0
  %487 = vmatprep.subr.bf16.mxu0 0
  %488 = vmatpush1.bf16.msra.mxu0 0
  %489 = vmatprep.subr.bf16.mxu0 0
  %490 = vmatpush1.bf16.msra.mxu0 0
  %491 = vmatprep.subr.bf16.mxu0 0
  %492 = vmatpush1.bf16.msra.mxu0 0
  %493 = vmatprep.subr.bf16.mxu0 0
  %494 = vmatpush1.bf16.msra.mxu0 0
  %495 = vmatprep.subr.bf16.mxu0 0
  %496 = vmatpush1.bf16.msra.mxu0 0
  %497 = vmatprep.subr.bf16.mxu0 0
  %498 = vmatpush1.bf16.msra.mxu0 0
  %499 = vmatprep.subr.bf16.mxu0 0
  %500 = vmatpush1.bf16.msra.mxu0 0
  %501 = vmatprep.subr.bf16.mxu0 0
  %502 = vmatpush1.bf16.msra.mxu0 0
  %503 = vmatprep.subr.bf16.mxu0 0
  %504 = vmatpush1.bf16.msra.mxu0 0
  %505 = vmatprep.subr.bf16.mxu0 0
  %506 = vmatpush1.bf16.msra.mxu0 0
  %507 = vmatprep.subr.bf16.mxu0 0
  %508 = vmatpush1.bf16.msra.mxu0 0
  %509 = vmatprep.mubr.bf16.mxu0 0
  %510 = vmatmul.mubr.bf16.gmra.mrb[0].mxu0 %v471
  %v511 = vpop.f32.mrb[0].mxu0
  %v512 = vadd.f32 0.0, %v511
  %v513 = vpop.f32.mrb[0].mxu0
  %v514 = vpop.f32.mrb[0].mxu0
  %v515 = vpop.f32.mrb[0].mxu0
  %516 = vdwg.mxu0
  %517 = vrot.lane.b32.xlu0 %v329, 64
  %v518 = vpop.permute.xlu0 %517
  %v520 = vsel %vm443, %v467, 0
  %v523 = vsel %vm473, %v518, 0
  %525 = vmatprep.subr.bf16.mxu0 0
  %526 = vmatpush1.bf16.msra.mxu0 %v523
  %527 = vmatprep.subr.bf16.mxu0 0
  %528 = vmatpush1.bf16.msra.mxu0 0
  %529 = vmatprep.subr.bf16.mxu0 0
  %530 = vmatpush1.bf16.msra.mxu0 0
  %531 = vmatprep.subr.bf16.mxu0 0
  %532 = vmatpush1.bf16.msra.mxu0 0
  %533 = vmatprep.subr.bf16.mxu0 0
  %534 = vmatpush1.bf16.msra.mxu0 0
  %535 = vmatprep.subr.bf16.mxu0 0
  %536 = vmatpush1.bf16.msra.mxu0 0
  %537 = vmatprep.subr.bf16.mxu0 0
  %538 = vmatpush1.bf16.msra.mxu0 0
  %539 = vmatprep.subr.bf16.mxu0 0
  %540 = vmatpush1.bf16.msra.mxu0 0
  %541 = vmatprep.subr.bf16.mxu0 0
  %542 = vmatpush1.bf16.msra.mxu0 0
  %543 = vmatprep.subr.bf16.mxu0 0
  %544 = vmatpush1.bf16.msra.mxu0 0
  %545 = vmatprep.subr.bf16.mxu0 0
  %546 = vmatpush1.bf16.msra.mxu0 0
  %547 = vmatprep.subr.bf16.mxu0 0
  %548 = vmatpush1.bf16.msra.mxu0 0
  %549 = vmatprep.subr.bf16.mxu0 0
  %550 = vmatpush1.bf16.msra.mxu0 0
  %551 = vmatprep.subr.bf16.mxu0 0
  %552 = vmatpush1.bf16.msra.mxu0 0
  %553 = vmatprep.subr.bf16.mxu0 0
  %554 = vmatpush1.bf16.msra.mxu0 0
  %555 = vmatprep.subr.bf16.mxu0 0
  %556 = vmatpush1.bf16.msra.mxu0 0
  %557 = vmatprep.mubr.bf16.mxu0 0
  %558 = vmatmul.mubr.bf16.gmra.mrb[0].mxu0 %v520
  %v559 = vpop.f32.mrb[0].mxu0
  %v560 = vadd.f32 0.0, %v559
  %v561 = vpop.f32.mrb[0].mxu0
  %v562 = vpop.f32.mrb[0].mxu0
  %v563 = vpop.f32.mrb[0].mxu0
  %564 = vdwg.mxu0
  %565 = vrot.lane.b32.xlu0 %v328, 112
  %v566 = vpop.permute.xlu0 %565
  %567 = vrot.lane.b32.xlu0 %v328, 80
  %v568 = vpop.permute.xlu0 %567
  %v570 = vsel %vm333, %v566, 0
  %v573 = vsel %vm333, %v568, 0
  %575 = vmatprep.subr.bf16.mxu0 0
  %576 = vmatpush1.bf16.xpose.msra.mxu0 %v573
  %577 = vmatprep.subr.bf16.mxu0 0
  %578 = vmatpush1.bf16.xpose.msra.mxu0 0
  %579 = vmatprep.subr.bf16.mxu0 0
  %580 = vmatpush1.bf16.xpose.msra.mxu0 0
  %581 = vmatprep.subr.bf16.mxu0 0
  %582 = vmatpush1.bf16.xpose.msra.mxu0 0
  %583 = vmatprep.subr.bf16.mxu0 0
  %584 = vmatpush1.bf16.xpose.msra.mxu0 0
  %585 = vmatprep.subr.bf16.mxu0 0
  %586 = vmatpush1.bf16.xpose.msra.mxu0 0
  %587 = vmatprep.subr.bf16.mxu0 0
  %588 = vmatpush1.bf16.xpose.msra.mxu0 0
  %589 = vmatprep.subr.bf16.mxu0 0
  %590 = vmatpush1.bf16.xpose.msra.mxu0 0
  %591 = vmatprep.subr.bf16.mxu0 0
  %592 = vmatpush1.bf16.xpose.msra.mxu0 0
  %593 = vmatprep.subr.bf16.mxu0 0
  %594 = vmatpush1.bf16.xpose.msra.mxu0 0
  %595 = vmatprep.subr.bf16.mxu0 0
  %596 = vmatpush1.bf16.xpose.msra.mxu0 0
  %597 = vmatprep.subr.bf16.mxu0 0
  %598 = vmatpush1.bf16.xpose.msra.mxu0 0
  %599 = vmatprep.subr.bf16.mxu0 0
  %600 = vmatpush1.bf16.xpose.msra.mxu0 0
  %601 = vmatprep.subr.bf16.mxu0 0
  %602 = vmatpush1.bf16.xpose.msra.mxu0 0
  %603 = vmatprep.subr.bf16.mxu0 0
  %604 = vmatpush1.bf16.xpose.msra.mxu0 0
  %605 = vmatprep.subr.bf16.mxu0 0
  %606 = vmatpush1.bf16.xpose.msra.mxu0 0
  %607 = vmatprep.mubr.bf16.mxu0 0
  %608 = vmatmul.mubr.bf16.gmra.mrb[0].mxu0 %v570
  %v609 = vpop.f32.mrb[0].mxu0
  %v610 = vadd.f32 0.0, %v609
  %v611 = vpop.f32.mrb[0].mxu0
  %v612 = vpop.f32.mrb[0].mxu0
  %v613 = vpop.f32.mrb[0].mxu0
  %614 = vdwg.mxu0
  %615 = vrot.lane.b32.xlu0 %v329, 112
  %v616 = vpop.permute.xlu0 %615
  %617 = vrot.lane.b32.xlu0 %v329, 80
  %v618 = vpop.permute.xlu0 %617
  %v620 = vsel %vm333, %v616, 0
  %v623 = vsel %vm333, %v618, 0
  %625 = vmatprep.subr.bf16.mxu0 0
  %626 = vmatpush1.bf16.xpose.msra.mxu0 %v623
  %627 = vmatprep.subr.bf16.mxu0 0
  %628 = vmatpush1.bf16.xpose.msra.mxu0 0
  %629 = vmatprep.subr.bf16.mxu0 0
  %630 = vmatpush1.bf16.xpose.msra.mxu0 0
  %631 = vmatprep.subr.bf16.mxu0 0
  %632 = vmatpush1.bf16.xpose.msra.mxu0 0
  %633 = vmatprep.subr.bf16.mxu0 0
  %634 = vmatpush1.bf16.xpose.msra.mxu0 0
  %635 = vmatprep.subr.bf16.mxu0 0
  %636 = vmatpush1.bf16.xpose.msra.mxu0 0
  %637 = vmatprep.subr.bf16.mxu0 0
  %638 = vmatpush1.bf16.xpose.msra.mxu0 0
  %639 = vmatprep.subr.bf16.mxu0 0
  %640 = vmatpush1.bf16.xpose.msra.mxu0 0
  %641 = vmatprep.subr.bf16.mxu0 0
  %642 = vmatpush1.bf16.xpose.msra.mxu0 0
  %643 = vmatprep.subr.bf16.mxu0 0
  %644 = vmatpush1.bf16.xpose.msra.mxu0 0
  %645 = vmatprep.subr.bf16.mxu0 0
  %646 = vmatpush1.bf16.xpose.msra.mxu0 0
  %647 = vmatprep.subr.bf16.mxu0 0
  %648 = vmatpush1.bf16.xpose.msra.mxu0 0
  %649 = vmatprep.subr.bf16.mxu0 0
  %650 = vmatpush1.bf16.xpose.msra.mxu0 0
  %651 = vmatprep.subr.bf16.mxu0 0
  %652 = vmatpush1.bf16.xpose.msra.mxu0 0
  %653 = vmatprep.subr.bf16.mxu0 0
  %654 = vmatpush1.bf16.xpose.msra.mxu0 0
  %655 = vmatprep.subr.bf16.mxu0 0
  %656 = vmatpush1.bf16.xpose.msra.mxu0 0
  %657 = vmatprep.mubr.bf16.mxu0 0
  %658 = vmatmul.mubr.bf16.gmra.mrb[0].mxu0 %v620
  %v659 = vpop.f32.mrb[0].mxu0
  %v660 = vadd.f32 0.0, %v659
  %v661 = vpop.f32.mrb[0].mxu0
  %v662 = vpop.f32.mrb[0].mxu0
  %v663 = vpop.f32.mrb[0].mxu0
  %664 = vdwg.mxu0
  %v665 = vmul.f32 %v610, 0.25
  %v666 = vmul.f32 %v660, 0.25
  %v667 = vadd.f32 %v665, %v434
  %v668 = vadd.f32 %v666, %v438
  %v669 = vsel %vm443, %v667, -inf
  %670 = vmax.xlane.f32.xlu0 %v669
  %v671 = vpop.xlane.xlu0 %670
  %v672 = vsel %vm443, %v668, -inf
  %673 = vmax.xlane.f32.xlu0 %v672
  %v674 = vpop.xlane.xlu0 %673
  %v675 = vsub.f32 %v667, %v671
  %v676 = vsub.f32 %v668, %v674
  %v677 = vmul.f32 %v675, 1.442695
  %v678 = vpow.pop %v677
  %v679 = vmul.f32 %v676, 1.442695
  %v680 = vpow.pop %v679
  %v681 = vsel %vm443, %v678, 0.0
  %682 = vadd.xlane.f32.xlu0 %v681
  %v683 = vpop.xlane.xlu0 %682
  %v684 = vsel %vm443, %v680, 0.0
  %685 = vadd.xlane.f32.xlu0 %v684
  %v686 = vpop.xlane.xlu0 %685
  %v687 = vrcp.pop %v683
  %v688 = vrcp.pop %v686
  %v689 = vmul.f32 %v678, %v687
  %v690 = vmul.f32 %v680, %v688
  %v691 = vpack.c.bf16 %v689, %v689
  %v692 = vpack.c.bf16 %v690, %v690
  %693 = vrot.lane.b32.xlu0 %v328, 48
  %v694 = vpop.permute.xlu0 %693
  %v696 = vsel %vm443, %v691, 0
  %v699 = vsel %vm473, %v694, 0
  %701 = vmatprep.subr.bf16.mxu0 0
  %702 = vmatpush1.bf16.msra.mxu0 %v699
  %703 = vmatprep.subr.bf16.mxu0 0
  %704 = vmatpush1.bf16.msra.mxu0 0
  %705 = vmatprep.subr.bf16.mxu0 0
  %706 = vmatpush1.bf16.msra.mxu0 0
  %707 = vmatprep.subr.bf16.mxu0 0
  %708 = vmatpush1.bf16.msra.mxu0 0
  %709 = vmatprep.subr.bf16.mxu0 0
  %710 = vmatpush1.bf16.msra.mxu0 0
  %711 = vmatprep.subr.bf16.mxu0 0
  %712 = vmatpush1.bf16.msra.mxu0 0
  %713 = vmatprep.subr.bf16.mxu0 0
  %714 = vmatpush1.bf16.msra.mxu0 0
  %715 = vmatprep.subr.bf16.mxu0 0
  %716 = vmatpush1.bf16.msra.mxu0 0
  %717 = vmatprep.subr.bf16.mxu0 0
  %718 = vmatpush1.bf16.msra.mxu0 0
  %719 = vmatprep.subr.bf16.mxu0 0
  %720 = vmatpush1.bf16.msra.mxu0 0
  %721 = vmatprep.subr.bf16.mxu0 0
  %722 = vmatpush1.bf16.msra.mxu0 0
  %723 = vmatprep.subr.bf16.mxu0 0
  %724 = vmatpush1.bf16.msra.mxu0 0
  %725 = vmatprep.subr.bf16.mxu0 0
  %726 = vmatpush1.bf16.msra.mxu0 0
  %727 = vmatprep.subr.bf16.mxu0 0
  %728 = vmatpush1.bf16.msra.mxu0 0
  %729 = vmatprep.subr.bf16.mxu0 0
  %730 = vmatpush1.bf16.msra.mxu0 0
  %731 = vmatprep.subr.bf16.mxu0 0
  %732 = vmatpush1.bf16.msra.mxu0 0
  %733 = vmatprep.mubr.bf16.mxu0 0
  %734 = vmatmul.mubr.bf16.gmra.mrb[0].mxu0 %v696
  %v735 = vpop.f32.mrb[0].mxu0
  %v736 = vadd.f32 0.0, %v735
  %v737 = vpop.f32.mrb[0].mxu0
  %v738 = vpop.f32.mrb[0].mxu0
  %v739 = vpop.f32.mrb[0].mxu0
  %740 = vdwg.mxu0
  %741 = vrot.lane.b32.xlu0 %v329, 48
  %v742 = vpop.permute.xlu0 %741
  %v744 = vsel %vm443, %v692, 0
  %v747 = vsel %vm473, %v742, 0
  %749 = vmatprep.subr.bf16.mxu0 0
  %750 = vmatpush1.bf16.msra.mxu0 %v747
  %751 = vmatprep.subr.bf16.mxu0 0
  %752 = vmatpush1.bf16.msra.mxu0 0
  %753 = vmatprep.subr.bf16.mxu0 0
  %754 = vmatpush1.bf16.msra.mxu0 0
  %755 = vmatprep.subr.bf16.mxu0 0
  %756 = vmatpush1.bf16.msra.mxu0 0
  %757 = vmatprep.subr.bf16.mxu0 0
  %758 = vmatpush1.bf16.msra.mxu0 0
  %759 = vmatprep.subr.bf16.mxu0 0
  %760 = vmatpush1.bf16.msra.mxu0 0
  %761 = vmatprep.subr.bf16.mxu0 0
  %762 = vmatpush1.bf16.msra.mxu0 0
  %763 = vmatprep.subr.bf16.mxu0 0
  %764 = vmatpush1.bf16.msra.mxu0 0
  %765 = vmatprep.subr.bf16.mxu0 0
  %766 = vmatpush1.bf16.msra.mxu0 0
  %767 = vmatprep.subr.bf16.mxu0 0
  %768 = vmatpush1.bf16.msra.mxu0 0
  %769 = vmatprep.subr.bf16.mxu0 0
  %770 = vmatpush1.bf16.msra.mxu0 0
  %771 = vmatprep.subr.bf16.mxu0 0
  %772 = vmatpush1.bf16.msra.mxu0 0
  %773 = vmatprep.subr.bf16.mxu0 0
  %774 = vmatpush1.bf16.msra.mxu0 0
  %775 = vmatprep.subr.bf16.mxu0 0
  %776 = vmatpush1.bf16.msra.mxu0 0
  %777 = vmatprep.subr.bf16.mxu0 0
  %778 = vmatpush1.bf16.msra.mxu0 0
  %779 = vmatprep.subr.bf16.mxu0 0
  %780 = vmatpush1.bf16.msra.mxu0 0
  %781 = vmatprep.mubr.bf16.mxu0 0
  %782 = vmatmul.mubr.bf16.gmra.mrb[0].mxu0 %v744
  %v783 = vpop.f32.mrb[0].mxu0
  %v784 = vadd.f32 0.0, %v783
  %v785 = vpop.f32.mrb[0].mxu0
  %v786 = vpop.f32.mrb[0].mxu0
  %v787 = vpop.f32.mrb[0].mxu0
  %788 = vdwg.mxu0
  %791 = vrot.lane.b32.xlu0 %v736, 16
  %v792 = vpop.permute.xlu0 %791
  %793 = vrot.lane.b32.xlu0 %v784, 16
  %v794 = vpop.permute.xlu0 %793
  %v797 = vsel %vm333, %v512, %v792
  %v798 = vsel %vm333, %v560, %v794
  %v799 = vpack.c.bf16 %v798, %v797
  %v800 = vld [vmem:[%s9] sm:$0xf]
  %v801 = vld [vmem:[%s9 + $0x4] sm:$0xf]
  %v802 = vld [vmem:[%s9 + $0x8] sm:$0xf]
  %v803 = vld [vmem:[%s9 + $0xc] sm:$0xf]
  %v804 = vld [vmem:[%s10] sm:$0x1]
  %v806 = vlaneseq
  %v807 = vshrl.u32 %v806, 7
  %v808 = vsub.s32 0, %v807
  %v809 = vrot.slane %v804, %v808
  %v815 = vunpack.c.l.b16 %v800
  %v816 = vunpack.c.l.b16 %v801
  %v817 = vunpack.c.l.b16 %v802
  %v818 = vunpack.c.l.b16 %v803
  %v819 = vpack.c.b16 %v816, %v815
  %v820 = vpack.c.b16 %v818, %v817
  %v824 = vsel %vm187, %v799, 0
  %826 = vmatprep.subr.bf16.mxu0 0
  %827 = vmatpush1.bf16.msra.mxu0 %v819
  %828 = vmatprep.subr.bf16.mxu0 0
  %829 = vmatpush1.bf16.msra.mxu0 %v820
  %830 = vmatprep.subr.bf16.mxu0 0
  %831 = vmatpush1.bf16.msra.mxu0 0
  %832 = vmatprep.subr.bf16.mxu0 0
  %833 = vmatpush1.bf16.msra.mxu0 0
  %834 = vmatprep.subr.bf16.mxu0 0
  %835 = vmatpush1.bf16.msra.mxu0 0
  %836 = vmatprep.subr.bf16.mxu0 0
  %837 = vmatpush1.bf16.msra.mxu0 0
  %838 = vmatprep.subr.bf16.mxu0 0
  %839 = vmatpush1.bf16.msra.mxu0 0
  %840 = vmatprep.subr.bf16.mxu0 0
  %841 = vmatpush1.bf16.msra.mxu0 0
  %842 = vmatprep.subr.bf16.mxu0 0
  %843 = vmatpush1.bf16.msra.mxu0 0
  %844 = vmatprep.subr.bf16.mxu0 0
  %845 = vmatpush1.bf16.msra.mxu0 0
  %846 = vmatprep.subr.bf16.mxu0 0
  %847 = vmatpush1.bf16.msra.mxu0 0
  %848 = vmatprep.subr.bf16.mxu0 0
  %849 = vmatpush1.bf16.msra.mxu0 0
  %850 = vmatprep.subr.bf16.mxu0 0
  %851 = vmatpush1.bf16.msra.mxu0 0
  %852 = vmatprep.subr.bf16.mxu0 0
  %853 = vmatpush1.bf16.msra.mxu0 0
  %854 = vmatprep.subr.bf16.mxu0 0
  %855 = vmatpush1.bf16.msra.mxu0 0
  %856 = vmatprep.subr.bf16.mxu0 0
  %857 = vmatpush1.bf16.msra.mxu0 0
  %858 = vmatprep.mubr.bf16.mxu0 0
  %859 = vmatmul.mubr.bf16.gmra.mrb[0].mxu0 %v824
  %v860 = vpop.f32.mrb[0].mxu0
  %v861 = vadd.f32 %v809, %v860
  %v862 = vpop.f32.mrb[0].mxu0
  %v863 = vpop.f32.mrb[0].mxu0
  %v864 = vadd.f32 %v809, %v863
  %v865 = vpop.f32.mrb[0].mxu0
  %866 = vdwg.mxu0
  %v867 = vadd.f32 %v229, %v861
  %v868 = vadd.f32 %v230, %v864
  %v869 = vld [vmem:[%s11] sm:$0x1]
  %v870 = vld [vmem:[%s12] sm:$0x1]
  %v871 = vsel %vm187, %v867, 0.0
  %872 = vadd.xlane.f32.xlu0 %v871
  %v873 = vpop.xlane.xlu0 %872
  %v874 = vsel %vm187, %v868, 0.0
  %875 = vadd.xlane.f32.xlu0 %v874
  %v876 = vpop.xlane.xlu0 %875
  %v877 = vmul.f32 %v873, %v194
  %v878 = vmul.f32 %v876, %v194
  %v879 = vsub.f32 %v867, %v877
  %v880 = vsub.f32 %v868, %v878
  %v881 = vmul.f32 %v879, %v879
  %v882 = vmul.f32 %v880, %v880
  %v883 = vsel %vm187, %v881, 0.0
  %884 = vadd.xlane.f32.xlu0 %v883
  %v885 = vpop.xlane.xlu0 %884
  %v886 = vsel %vm187, %v882, 0.0
  %887 = vadd.xlane.f32.xlu0 %v886
  %v888 = vpop.xlane.xlu0 %887
  %v889 = vmul.f32 %v885, %v194
  %v890 = vmul.f32 %v888, %v194
  %v891 = vadd.f32 %v889, 1e-12
  %v892 = vadd.f32 %v890, 1e-12
  %v893 = vrsqrt.pop %v891
  %v894 = vrsqrt.pop %v892
  %v895 = vmul.f32 %v879, %v893
  %v896 = vmul.f32 %v880, %v894
  %v898 = vlaneseq
  %v899 = vshrl.u32 %v898, 7
  %v900 = vsub.s32 0, %v899
  %v901 = vrot.slane %v869, %v900
  %v903 = vmul.f32 %v895, %v901
  %v904 = vmul.f32 %v896, %v901
  %v906 = vlaneseq
  %v907 = vshrl.u32 %v906, 7
  %v908 = vsub.s32 0, %v907
  %v909 = vrot.slane %v870, %v908
  %v911 = vadd.f32 %v903, %v909
  %v912 = vadd.f32 %v904, %v909
  %v913 = vpack.c.bf16 %v912, %v911
  %v914 = vld [vmem:[%s13] sm:$0xf]
  %v915 = vld [vmem:[%s13 + $0x4] sm:$0xf]
  %v916 = vld [vmem:[%s13 + $0x8] sm:$0xf]
  %v917 = vld [vmem:[%s13 + $0xc] sm:$0xf]
  %v918 = vld [vmem:[%s14] sm:$0x1]
  %v920 = vlaneseq
  %v921 = vshrl.u32 %v920, 7
  %v922 = vsub.s32 0, %v921
  %v923 = vrot.slane %v918, %v922
  %v929 = vunpack.c.l.b16 %v914
  %v930 = vunpack.c.l.b16 %v915
  %v931 = vunpack.c.l.b16 %v916
  %v932 = vunpack.c.l.b16 %v917
  %v933 = vpack.c.b16 %v930, %v929
  %v934 = vpack.c.b16 %v932, %v931
  %v938 = vsel %vm187, %v913, 0
  %940 = vmatprep.subr.bf16.mxu0 0
  %941 = vmatpush1.bf16.msra.mxu0 %v933
  %942 = vmatprep.subr.bf16.mxu0 0
  %943 = vmatpush1.bf16.msra.mxu0 %v934
  %944 = vmatprep.subr.bf16.mxu0 0
  %945 = vmatpush1.bf16.msra.mxu0 0
  %946 = vmatprep.subr.bf16.mxu0 0
  %947 = vmatpush1.bf16.msra.mxu0 0
  %948 = vmatprep.subr.bf16.mxu0 0
  %949 = vmatpush1.bf16.msra.mxu0 0
  %950 = vmatprep.subr.bf16.mxu0 0
  %951 = vmatpush1.bf16.msra.mxu0 0
  %952 = vmatprep.subr.bf16.mxu0 0
  %953 = vmatpush1.bf16.msra.mxu0 0
  %954 = vmatprep.subr.bf16.mxu0 0
  %955 = vmatpush1.bf16.msra.mxu0 0
  %956 = vmatprep.subr.bf16.mxu0 0
  %957 = vmatpush1.bf16.msra.mxu0 0
  %958 = vmatprep.subr.bf16.mxu0 0
  %959 = vmatpush1.bf16.msra.mxu0 0
  %960 = vmatprep.subr.bf16.mxu0 0
  %961 = vmatpush1.bf16.msra.mxu0 0
  %962 = vmatprep.subr.bf16.mxu0 0
  %963 = vmatpush1.bf16.msra.mxu0 0
  %964 = vmatprep.subr.bf16.mxu0 0
  %965 = vmatpush1.bf16.msra.mxu0 0
  %966 = vmatprep.subr.bf16.mxu0 0
  %967 = vmatpush1.bf16.msra.mxu0 0
  %968 = vmatprep.subr.bf16.mxu0 0
  %969 = vmatpush1.bf16.msra.mxu0 0
  %970 = vmatprep.subr.bf16.mxu0 0
  %971 = vmatpush1.bf16.msra.mxu0 0
  %972 = vmatprep.mubr.bf16.mxu0 0
  %973 = vmatmul.mubr.bf16.gmra.mrb[0].mxu0 %v938
  %v974 = vpop.f32.mrb[0].mxu0
  %v975 = vadd.f32 %v923, %v974
  %v976 = vpop.f32.mrb[0].mxu0
  %v977 = vpop.f32.mrb[0].mxu0
  %v978 = vadd.f32 %v923, %v977
  %v979 = vpop.f32.mrb[0].mxu0
  %980 = vdwg.mxu0
  %v981 = vmul.f32 %v975, %v975
  %v982 = vmul.f32 %v978, %v978
  %v983 = vmul.f32 %v975, %v981
  %v984 = vmul.f32 %v978, %v982
  %v985 = vmul.f32 %v983, 0.044715
  %v986 = vmul.f32 %v984, 0.044715
  %v987 = vadd.f32 %v975, %v985
  %v988 = vadd.f32 %v978, %v986
  %v989 = vmul.f32 %v987, 0.7978846
  %v990 = vmul.f32 %v988, 0.7978846
  %v991 = vtanh.pop %v989
  %v992 = vtanh.pop %v990
  %v993 = vadd.f32 %v991, 1.0
  %v994 = vadd.f32 %v992, 1.0
  %v995 = vmul.f32 %v993, 0.5
  %v996 = vmul.f32 %v994, 0.5
  %v997 = vmul.f32 %v975, %v995
  %v998 = vmul.f32 %v978, %v996
  %v999 = vpack.c.bf16 %v998, %v997
  %v1000 = vld [vmem:[%s15] sm:$0xf]
  %v1001 = vld [vmem:[%s15 + $0x4] sm:$0xf]
  %v1002 = vld [vmem:[%s15 + $0x8] sm:$0xf]
  %v1003 = vld [vmem:[%s15 + $0xc] sm:$0xf]
  %v1004 = vld [vmem:[%s15 + $0x10] sm:$0xf]
  %v1005 = vld [vmem:[%s15 + $0x14] sm:$0xf]
  %v1006 = vld [vmem:[%s15 + $0x18] sm:$0xf]
  %v1007 = vld [vmem:[%s15 + $0x1c] sm:$0xf]
  %v1008 = vld [vmem:[%s16] sm:$0x1]
  %v1010 = vlaneseq
  %v1011 = vshrl.u32 %v1010, 7
  %v1012 = vsub.s32 0, %v1011
  %v1013 = vrot.slane %v1008, %v1012
  %v1023 = vunpack.c.l.b16 %v1000
  %v1024 = vunpack.c.l.b16 %v1001
  %v1025 = vunpack.c.l.b16 %v1002
  %v1026 = vunpack.c.l.b16 %v1003
  %v1027 = vunpack.c.l.b16 %v1004
  %v1028 = vunpack.c.l.b16 %v1005
  %v1029 = vunpack.c.l.b16 %v1006
  %v1030 = vunpack.c.l.b16 %v1007
  %v1031 = vpack.c.b16 %v1024, %v1023
  %v1032 = vpack.c.b16 %v1026, %v1025
  %v1033 = vpack.c.b16 %v1028, %v1027
  %v1034 = vpack.c.b16 %v1030, %v1029
  %vm1039 = vcmask 523264
  %v1041 = vsel %vm1039, %v999, 0
  %1043 = vmatprep.subr.bf16.mxu0 0
  %1044 = vmatpush1.bf16.msra.mxu0 %v1031
  %1045 = vmatprep.subr.bf16.mxu0 0
  %1046 = vmatpush1.bf16.msra.mxu0 %v1032
  %1047 = vmatprep.subr.bf16.mxu0 0
  %1048 = vmatpush1.bf16.msra.mxu0 %v1033
  %1049 = vmatprep.subr.bf16.mxu0 0
  %1050 = vmatpush1.bf16.msra.mxu0 %v1034
  %1051 = vmatprep.subr.bf16.mxu0 0
  %1052 = vmatpush1.bf16.msra.mxu0 0
  %1053 = vmatprep.subr.bf16.mxu0 0
  %1054 = vmatpush1.bf16.msra.mxu0 0
  %1055 = vmatprep.subr.bf16.mxu0 0
  %1056 = vmatpush1.bf16.msra.mxu0 0
  %1057 = vmatprep.subr.bf16.mxu0 0
  %1058 = vmatpush1.bf16.msra.mxu0 0
  %1059 = vmatprep.subr.bf16.mxu0 0
  %1060 = vmatpush1.bf16.msra.mxu0 0
  %1061 = vmatprep.subr.bf16.mxu0 0
  %1062 = vmatpush1.bf16.msra.mxu0 0
  %1063 = vmatprep.subr.bf16.mxu0 0
  %1064 = vmatpush1.bf16.msra.mxu0 0
  %1065 = vmatprep.subr.bf16.mxu0 0
  %1066 = vmatpush1.bf16.msra.mxu0 0
  %1067 = vmatprep.subr.bf16.mxu0 0
  %1068 = vmatpush1.bf16.msra.mxu0 0
  %1069 = vmatprep.subr.bf16.mxu0 0
  %1070 = vmatpush1.bf16.msra.mxu0 0
  %1071 = vmatprep.subr.bf16.mxu0 0
  %1072 = vmatpush1.bf16.msra.mxu0 0
  %1073 = vmatprep.subr.bf16.mxu0 0
  %1074 = vmatpush1.bf16.msra.mxu0 0
  %1075 = vmatprep.mubr.bf16.mxu0 0
  %1076 = vmatmul.mubr.bf16.gmra.mrb[0].mxu0 %v1041
  %v1077 = vpop.f32.mrb[0].mxu0
  %v1078 = vadd.f32 %v1013, %v1077
  %v1079 = vpop.f32.mrb[0].mxu0
  %v1080 = vpop.f32.mrb[0].mxu0
  %v1081 = vadd.f32 %v1013, %v1080
  %v1082 = vpop.f32.mrb[0].mxu0
  %1083 = vdwg.mxu0
  %v1084 = vadd.f32 %v911, %v1078
  %v1085 = vadd.f32 %v912, %v1081
  %v1086 = vld [vmem:[%s17] sm:$0x1]
  %v1087 = vld [vmem:[%s18] sm:$0x1]
  %v1088 = vsel %vm187, %v1084, 0.0
  %1089 = vadd.xlane.f32.xlu0 %v1088
  %v1090 = vpop.xlane.xlu0 %1089
  %v1091 = vsel %vm187, %v1085, 0.0
  %1092 = vadd.xlane.f32.xlu0 %v1091
  %v1093 = vpop.xlane.xlu0 %1092
  %v1094 = vmul.f32 %v1090, %v194
  %v1095 = vmul.f32 %v1093, %v194
  %v1096 = vsub.f32 %v1084, %v1094
  %v1097 = vsub.f32 %v1085, %v1095
  %v1098 = vmul.f32 %v1096, %v1096
  %v1099 = vmul.f32 %v1097, %v1097
  %v1100 = vsel %vm187, %v1098, 0.0
  %1101 = vadd.xlane.f32.xlu0 %v1100
  %v1102 = vpop.xlane.xlu0 %1101
  %v1103 = vsel %vm187, %v1099, 0.0
  %1104 = vadd.xlane.f32.xlu0 %v1103
  %v1105 = vpop.xlane.xlu0 %1104
  %v1106 = vmul.f32 %v1102, %v194
  %v1107 = vmul.f32 %v1105, %v194
  %v1108 = vadd.f32 %v1106, 1e-12
  %v1109 = vadd.f32 %v1107, 1e-12
  %v1110 = vrsqrt.pop %v1108
  %v1111 = vrsqrt.pop %v1109
  %v1112 = vmul.f32 %v1096, %v1110
  %v1113 = vmul.f32 %v1097, %v1111
  %v1115 = vlaneseq
  %v1116 = vshrl.u32 %v1115, 7
  %v1117 = vsub.s32 0, %v1116
  %v1118 = vrot.slane %v1086, %v1117
  %v1120 = vmul.f32 %v1112, %v1118
  %v1121 = vmul.f32 %v1113, %v1118
  %v1123 = vlaneseq
  %v1124 = vshrl.u32 %v1123, 7
  %v1125 = vsub.s32 0, %v1124
  %v1126 = vrot.slane %v1087, %v1125
  %v1128 = vadd.f32 %v1120, %v1126
  %v1129 = vadd.f32 %v1121, %v1126
  %v1130 = vpack.c.bf16 %v1129, %v1128
  %s1131 = scalar_lea.vmem %s7, 16
  %v1132 = vld [vmem:[%s1131] sm:$0xf]
  %v1133 = vld [vmem:[%s1131 + $0x4] sm:$0xf]
  %v1134 = vld [vmem:[%s1131 + $0x8] sm:$0xf]
  %v1135 = vld [vmem:[%s1131 + $0xc] sm:$0xf]
  %s1136 = scalar_lea.vmem %s8, 1
  %v1137 = vld [vmem:[%s1136] sm:$0x1]
  %v1139 = vlaneseq
  %v1140 = vshrl.u32 %v1139, 7
  %v1141 = vsub.s32 0, %v1140
  %v1142 = vrot.slane %v1137, %v1141
  %v1148 = vunpack.c.l.b16 %v1132
  %v1149 = vunpack.c.l.b16 %v1133
  %v1150 = vunpack.c.l.b16 %v1134
  %v1151 = vunpack.c.l.b16 %v1135
  %v1152 = vpack.c.b16 %v1149, %v1148
  %v1153 = vpack.c.b16 %v1151, %v1150
  %v1157 = vsel %vm187, %v1130, 0
  %1159 = vmatprep.subr.bf16.mxu0 0
  %1160 = vmatpush1.bf16.msra.mxu0 %v1152
  %1161 = vmatprep.subr.bf16.mxu0 0
  %1162 = vmatpush1.bf16.msra.mxu0 %v1153
  %1163 = vmatprep.subr.bf16.mxu0 0
  %1164 = vmatpush1.bf16.msra.mxu0 0
  %1165 = vmatprep.subr.bf16.mxu0 0
  %1166 = vmatpush1.bf16.msra.mxu0 0
  %1167 = vmatprep.subr.bf16.mxu0 0
  %1168 = vmatpush1.bf16.msra.mxu0 0
  %1169 = vmatprep.subr.bf16.mxu0 0
  %1170 = vmatpush1.bf16.msra.mxu0 0
  %1171 = vmatprep.subr.bf16.mxu0 0
  %1172 = vmatpush1.bf16.msra.mxu0 0
  %1173 = vmatprep.subr.bf16.mxu0 0
  %1174 = vmatpush1.bf16.msra.mxu0 0
  %1175 = vmatprep.subr.bf16.mxu0 0
  %1176 = vmatpush1.bf16.msra.mxu0 0
  %1177 = vmatprep.subr.bf16.mxu0 0
  %1178 = vmatpush1.bf16.msra.mxu0 0
  %1179 = vmatprep.subr.bf16.mxu0 0
  %1180 = vmatpush1.bf16.msra.mxu0 0
  %1181 = vmatprep.subr.bf16.mxu0 0
  %1182 = vmatpush1.bf16.msra.mxu0 0
  %1183 = vmatprep.subr.bf16.mxu0 0
  %1184 = vmatpush1.bf16.msra.mxu0 0
  %1185 = vmatprep.subr.bf16.mxu0 0
  %1186 = vmatpush1.bf16.msra.mxu0 0
  %1187 = vmatprep.subr.bf16.mxu0 0
  %1188 = vmatpush1.bf16.msra.mxu0 0
  %1189 = vmatprep.subr.bf16.mxu0 0
  %1190 = vmatpush1.bf16.msra.mxu0 0
  %1191 = vmatprep.mubr.bf16.mxu0 0
  %1192 = vmatmul.mubr.bf16.gmra.mrb[0].mxu0 %v1157
  %v1193 = vpop.f32.mrb[0].mxu0
  %v1194 = vadd.f32 %v1142, %v1193
  %v1195 = vpop.f32.mrb[0].mxu0
  %v1196 = vpop.f32.mrb[0].mxu0
  %v1197 = vadd.f32 %v1142, %v1196
  %v1198 = vpop.f32.mrb[0].mxu0
  %1199 = vdwg.mxu0
  %v1200 = vpack.c.bf16 %v1194, %v1194
  %v1201 = vpack.c.bf16 %v1197, %v1197
  %1203 = vrot.lane.b32.xlu0 %v1200, 96
  %v1204 = vpop.permute.xlu0 %1203
  %v1206 = vsel %vm333, %v1200, 0
  %v1209 = vsel %vm333, %v1204, 0
  %1211 = vmatprep.subr.bf16.mxu0 0
  %1212 = vmatpush1.bf16.xpose.msra.mxu0 %v1209
  %1213 = vmatprep.subr.bf16.mxu0 0
  %1214 = vmatpush1.bf16.xpose.msra.mxu0 0
  %1215 = vmatprep.subr.bf16.mxu0 0
  %1216 = vmatpush1.bf16.xpose.msra.mxu0 0
  %1217 = vmatprep.subr.bf16.mxu0 0
  %1218 = vmatpush1.bf16.xpose.msra.mxu0 0
  %1219 = vmatprep.subr.bf16.mxu0 0
  %1220 = vmatpush1.bf16.xpose.msra.mxu0 0
  %1221 = vmatprep.subr.bf16.mxu0 0
  %1222 = vmatpush1.bf16.xpose.msra.mxu0 0
  %1223 = vmatprep.subr.bf16.mxu0 0
  %1224 = vmatpush1.bf16.xpose.msra.mxu0 0
  %1225 = vmatprep.subr.bf16.mxu0 0
  %1226 = vmatpush1.bf16.xpose.msra.mxu0 0
  %1227 = vmatprep.subr.bf16.mxu0 0
  %1228 = vmatpush1.bf16.xpose.msra.mxu0 0
  %1229 = vmatprep.subr.bf16.mxu0 0
  %1230 = vmatpush1.bf16.xpose.msra.mxu0 0
  %1231 = vmatprep.subr.bf16.mxu0 0
  %1232 = vmatpush1.bf16.xpose.msra.mxu0 0
  %1233 = vmatprep.subr.bf16.mxu0 0
  %1234 = vmatpush1.bf16.xpose.msra.mxu0 0
  %1235 = vmatprep.subr.bf16.mxu0 0
  %1236 = vmatpush1.bf16.xpose.msra.mxu0 0
  %1237 = vmatprep.subr.bf16.mxu0 0
  %1238 = vmatpush1.bf16.xpose.msra.mxu0 0
  %1239 = vmatprep.subr.bf16.mxu0 0
  %1240 = vmatpush1.bf16.xpose.msra.mxu0 0
  %1241 = vmatprep.subr.bf16.mxu0 0
  %1242 = vmatpush1.bf16.xpose.msra.mxu0 0
  %1243 = vmatprep.mubr.bf16.mxu0 0
  %1244 = vmatmul.mubr.bf16.gmra.mrb[0].mxu0 %v1206
  %v1245 = vpop.f32.mrb[0].mxu0
  %v1246 = vadd.f32 0.0, %v1245
  %v1247 = vpop.f32.mrb[0].mxu0
  %v1248 = vpop.f32.mrb[0].mxu0
  %v1249 = vpop.f32.mrb[0].mxu0
  %1250 = vdwg.mxu0
  %1252 = vrot.lane.b32.xlu0 %v1201, 96
  %v1253 = vpop.permute.xlu0 %1252
  %v1255 = vsel %vm333, %v1201, 0
  %v1258 = vsel %vm333, %v1253, 0
  %1260 = vmatprep.subr.bf16.mxu0 0
  %1261 = vmatpush1.bf16.xpose.msra.mxu0 %v1258
  %1262 = vmatprep.subr.bf16.mxu0 0
  %1263 = vmatpush1.bf16.xpose.msra.mxu0 0
  %1264 = vmatprep.subr.bf16.mxu0 0
  %1265 = vmatpush1.bf16.xpose.msra.mxu0 0
  %1266 = vmatprep.subr.bf16.mxu0 0
  %1267 = vmatpush1.bf16.xpose.msra.mxu0 0
  %1268 = vmatprep.subr.bf16.mxu0 0
  %1269 = vmatpush1.bf16.xpose.msra.mxu0 0
  %1270 = vmatprep.subr.bf16.mxu0 0
  %1271 = vmatpush1.bf16.xpose.msra.mxu0 0
  %1272 = vmatprep.subr.bf16.mxu0 0
  %1273 = vmatpush1.bf16.xpose.msra.mxu0 0
  %1274 = vmatprep.subr.bf16.mxu0 0
  %1275 = vmatpush1.bf16.xpose.msra.mxu0 0
  %1276 = vmatprep.subr.bf16.mxu0 0
  %1277 = vmatpush1.bf16.xpose.msra.mxu0 0
  %1278 = vmatprep.subr.bf16.mxu0 0
  %1279 = vmatpush1.bf16.xpose.msra.mxu0 0
  %1280 = vmatprep.subr.bf16.mxu0 0
  %1281 = vmatpush1.bf16.xpose.msra.mxu0 0
  %1282 = vmatprep.subr.bf16.mxu0 0
  %1283 = vmatpush1.bf16.xpose.msra.mxu0 0
  %1284 = vmatprep.subr.bf16.mxu0 0
  %1285 = vmatpush1.bf16.xpose.msra.mxu0 0
  %1286 = vmatprep.subr.bf16.mxu0 0
  %1287 = vmatpush1.bf16.xpose.msra.mxu0 0
  %1288 = vmatprep.subr.bf16.mxu0 0
  %1289 = vmatpush1.bf16.xpose.msra.mxu0 0
  %1290 = vmatprep.subr.bf16.mxu0 0
  %1291 = vmatpush1.bf16.xpose.msra.mxu0 0
  %1292 = vmatprep.mubr.bf16.mxu0 0
  %1293 = vmatmul.mubr.bf16.gmra.mrb[0].mxu0 %v1255
  %v1294 = vpop.f32.mrb[0].mxu0
  %v1295 = vadd.f32 0.0, %v1294
  %v1296 = vpop.f32.mrb[0].mxu0
  %v1297 = vpop.f32.mrb[0].mxu0
  %v1298 = vpop.f32.mrb[0].mxu0
  %1299 = vdwg.mxu0
  %v1300 = vmul.f32 %v1246, 0.25
  %v1301 = vmul.f32 %v1295, 0.25
  %v1302 = vadd.f32 %v1300, %v434
  %v1303 = vadd.f32 %v1301, %v438
  %v1304 = vsel %vm443, %v1302, -inf
  %1305 = vmax.xlane.f32.xlu0 %v1304
  %v1306 = vpop.xlane.xlu0 %1305
  %v1307 = vsel %vm443, %v1303, -inf
  %1308 = vmax.xlane.f32.xlu0 %v1307
  %v1309 = vpop.xlane.xlu0 %1308
  %v1310 = vsub.f32 %v1302, %v1306
  %v1311 = vsub.f32 %v1303, %v1309
  %v1312 = vmul.f32 %v1310, 1.442695
  %v1313 = vpow.pop %v1312
  %v1314 = vmul.f32 %v1311, 1.442695
  %v1315 = vpow.pop %v1314
  %v1316 = vsel %vm443, %v1313, 0.0
  %1317 = vadd.xlane.f32.xlu0 %v1316
  %v1318 = vpop.xlane.xlu0 %1317
  %v1319 = vsel %vm443, %v1315, 0.0
  %1320 = vadd.xlane.f32.xlu0 %v1319
  %v1321 = vpop.xlane.xlu0 %1320
  %v1322 = vrcp.pop %v1318
  %v1323 = vrcp.pop %v1321
  %v1324 = vmul.f32 %v1313, %v1322
  %v1325 = vmul.f32 %v1315, %v1323
  %v1326 = vpack.c.bf16 %v1324, %v1324
  %v1327 = vpack.c.bf16 %v1325, %v1325
  %1328 = vrot.lane.b32.xlu0 %v1200, 64
  %v1329 = vpop.permute.xlu0 %1328
  %v1331 = vsel %vm443, %v1326, 0
  %v1334 = vsel %vm473, %v1329, 0
  %1336 = vmatprep.subr.bf16.mxu0 0
  %1337 = vmatpush1.bf16.msra.mxu0 %v1334
  %1338 = vmatprep.subr.bf16.mxu0 0
  %1339 = vmatpush1.bf16.msra.mxu0 0
  %1340 = vmatprep.subr.bf16.mxu0 0
  %1341 = vmatpush1.bf16.msra.mxu0 0
  %1342 = vmatprep.subr.bf16.mxu0 0
  %1343 = vmatpush1.bf16.msra.mxu0 0
  %1344 = vmatprep.subr.bf16.mxu0 0
  %1345 = vmatpush1.bf16.msra.mxu0 0
  %1346 = vmatprep.subr.bf16.mxu0 0
  %1347 = vmatpush1.bf16.msra.mxu0 0
  %1348 = vmatprep.subr.bf16.mxu0 0
  %1349 = vmatpush1.bf16.msra.mxu0 0
  %1350 = vmatprep.subr.bf16.mxu0 0
  %1351 = vmatpush1.bf16.msra.mxu0 0
  %1352 = vmatprep.subr.bf16.mxu0 0
  %1353 = vmatpush1.bf16.msra.mxu0 0
  %1354 = vmatprep.subr.bf16.mxu0 0
  %1355 = vmatpush1.bf16.msra.mxu0 0
  %1356 = vmatprep.subr.bf16.mxu0 0
  %1357 = vmatpush1.bf16.msra.mxu0 0
  %1358 = vmatprep.subr.bf16.mxu0 0
  %1359 = vmatpush1.bf16.msra.mxu0 0
  %1360 = vmatprep.subr.bf16.mxu0 0
  %1361 = vmatpush1.bf16.msra.mxu0 0
  %1362 = vmatprep.subr.bf16.mxu0 0
  %1363 = vmatpush1.bf16.msra.mxu0 0
  %1364 = vmatprep.subr.bf16.mxu0 0
  %1365 = vmatpush1.bf16.msra.mxu0 0
  %1366 = vmatprep.subr.bf16.mxu0 0
  %1367 = vmatpush1.bf16.msra.mxu0 0
  %1368 = vmatprep.mubr.bf16.mxu0 0
  %1369 = vmatmul.mubr.bf16.gmra.mrb[0].mxu0 %v1331
  %v1370 = vpop.f32.mrb[0].mxu0
  %v1371 = vadd.f32 0.0, %v1370
  %v1372 = vpop.f32.mrb[0].mxu0
  %v1373 = vpop.f32.mrb[0].mxu0
  %v1374 = vpop.f32.mrb[0].mxu0
  %1375 = vdwg.mxu0
  %1376 = vrot.lane.b32.xlu0 %v1201, 64
  %v1377 = vpop.permute.xlu0 %1376
  %v1379 = vsel %vm443, %v1327, 0
  %v1382 = vsel %vm473, %v1377, 0
  %1384 = vmatprep.subr.bf16.mxu0 0
  %1385 = vmatpush1.bf16.msra.mxu0 %v1382
  %1386 = vmatprep.subr.bf16.mxu0 0
  %1387 = vmatpush1.bf16.msra.mxu0 0
  %1388 = vmatprep.subr.bf16.mxu0 0
  %1389 = vmatpush1.bf16.msra.mxu0 0
  %1390 = vmatprep.subr.bf16.mxu0 0
  %1391 = vmatpush1.bf16.msra.mxu0 0
  %1392 = vmatprep.subr.bf16.mxu0 0
  %1393 = vmatpush1.bf16.msra.mxu0 0
  %1394 = vmatprep.subr.bf16.mxu0 0
  %1395 = vmatpush1.bf16.msra.mxu0 0
  %1396 = vmatprep.subr.bf16.mxu0 0
  %1397 = vmatpush1.bf16.msra.mxu0 0
  %1398 = vmatprep.subr.bf16.mxu0 0
  %1399 = vmatpush1.bf16.msra.mxu0 0
  %1400 = vmatprep.subr.bf16.mxu0 0
  %1401 = vmatpush1.bf16.msra.mxu0 0
  %1402 = vmatprep.subr.bf16.mxu0 0
  %1403 = vmatpush1.bf16.msra.mxu0 0
  %1404 = vmatprep.subr.bf16.mxu0 0
  %1405 = vmatpush1.bf16.msra.mxu0 0
  %1406 = vmatprep.subr.bf16.mxu0 0
  %1407 = vmatpush1.bf16.msra.mxu0 0
  %1408 = vmatprep.subr.bf16.mxu0 0
  %1409 = vmatpush1.bf16.msra.mxu0 0
  %1410 = vmatprep.subr.bf16.mxu0 0
  %1411 = vmatpush1.bf16.msra.mxu0 0
  %1412 = vmatprep.subr.bf16.mxu0 0
  %1413 = vmatpush1.bf16.msra.mxu0 0
  %1414 = vmatprep.subr.bf16.mxu0 0
  %1415 = vmatpush1.bf16.msra.mxu0 0
  %1416 = vmatprep.mubr.bf16.mxu0 0
  %1417 = vmatmul.mubr.bf16.gmra.mrb[0].mxu0 %v1379
  %v1418 = vpop.f32.mrb[0].mxu0
  %v1419 = vadd.f32 0.0, %v1418
  %v1420 = vpop.f32.mrb[0].mxu0
  %v1421 = vpop.f32.mrb[0].mxu0
  %v1422 = vpop.f32.mrb[0].mxu0
  %1423 = vdwg.mxu0
  %1424 = vrot.lane.b32.xlu0 %v1200, 112
  %v1425 = vpop.permute.xlu0 %1424
  %1426 = vrot.lane.b32.xlu0 %v1200, 80
  %v1427 = vpop.permute.xlu0 %1426
  %v1429 = vsel %vm333, %v1425, 0
  %v1432 = vsel %vm333, %v1427, 0
  %1434 = vmatprep.subr.bf16.mxu0 0
  %1435 = vmatpush1.bf16.xpose.msra.mxu0 %v1432
  %1436 = vmatprep.subr.bf16.mxu0 0
  %1437 = vmatpush1.bf16.xpose.msra.mxu0 0
  %1438 = vmatprep.subr.bf16.mxu0 0
  %1439 = vmatpush1.bf16.xpose.msra.mxu0 0
  %1440 = vmatprep.subr.bf16.mxu0 0
  %1441 = vmatpush1.bf16.xpose.msra.mxu0 0
  %1442 = vmatprep.subr.bf16.mxu0 0
  %1443 = vmatpush1.bf16.xpose.msra.mxu0 0
  %1444 = vmatprep.subr.bf16.mxu0 0
  %1445 = vmatpush1.bf16.xpose.msra.mxu0 0
  %1446 = vmatprep.subr.bf16.mxu0 0
  %1447 = vmatpush1.bf16.xpose.msra.mxu0 0
  %1448 = vmatprep.subr.bf16.mxu0 0
  %1449 = vmatpush1.bf16.xpose.msra.mxu0 0
  %1450 = vmatprep.subr.bf16.mxu0 0
  %1451 = vmatpush1.bf16.xpose.msra.mxu0 0
  %1452 = vmatprep.subr.bf16.mxu0 0
  %1453 = vmatpush1.bf16.xpose.msra.mxu0 0
  %1454 = vmatprep.subr.bf16.mxu0 0
  %1455 = vmatpush1.bf16.xpose.msra.mxu0 0
  %1456 = vmatprep.subr.bf16.mxu0 0
  %1457 = vmatpush1.bf16.xpose.msra.mxu0 0
  %1458 = vmatprep.subr.bf16.mxu0 0
  %1459 = vmatpush1.bf16.xpose.msra.mxu0 0
  %1460 = vmatprep.subr.bf16.mxu0 0
  %1461 = vmatpush1.bf16.xpose.msra.mxu0 0
  %1462 = vmatprep.subr.bf16.mxu0 0
  %1463 = vmatpush1.bf16.xpose.msra.mxu0 0
  %1464 = vmatprep.subr.bf16.mxu0 0
  %1465 = vmatpush1.bf16.xpose.msra.mxu0 0
  %1466 = vmatprep.mubr.bf16.mxu0 0
  %1467 = vmatmul.mubr.bf16.gmra.mrb[0].mxu0 %v1429
  %v1468 = vpop.f32.mrb[0].mxu0
  %v1469 = vadd.f32 0.0, %v1468
  %v1470 = vpop.f32.mrb[0].mxu0
  %v1471 = vpop.f32.mrb[0].mxu0
  %v1472 = vpop.f32.mrb[0].mxu0
  %1473 = vdwg.mxu0
  %1474 = vrot.lane.b32.xlu0 %v1201, 112
  %v1475 = vpop.permute.xlu0 %1474
  %1476 = vrot.lane.b32.xlu0 %v1201, 80
  %v1477 = vpop.permute.xlu0 %1476
  %v1479 = vsel %vm333, %v1475, 0
  %v1482 = vsel %vm333, %v1477, 0
  %1484 = vmatprep.subr.bf16.mxu0 0
  %1485 = vmatpush1.bf16.xpose.msra.mxu0 %v1482
  %1486 = vmatprep.subr.bf16.mxu0 0
  %1487 = vmatpush1.bf16.xpose.msra.mxu0 0
  %1488 = vmatprep.subr.bf16.mxu0 0
  %1489 = vmatpush1.bf16.xpose.msra.mxu0 0
  %1490 = vmatprep.subr.bf16.mxu0 0
  %1491 = vmatpush1.bf16.xpose.msra.mxu0 0
  %1492 = vmatprep.subr.bf16.mxu0 0
  %1493 = vmatpush1.bf16.xpose.msra.mxu0 0
  %1494 = vmatprep.subr.bf16.mxu0 0
  %1495 = vmatpush1.bf16.xpose.msra.mxu0 0
  %1496 = vmatprep.subr.bf16.mxu0 0
  %1497 = vmatpush1.bf16.xpose.msra.mxu0 0
  %1498 = vmatprep.subr.bf16.mxu0 0
  %1499 = vmatpush1.bf16.xpose.msra.mxu0 0
  %1500 = vmatprep.subr.bf16.mxu0 0
  %1501 = vmatpush1.bf16.xpose.msra.mxu0 0
  %1502 = vmatprep.subr.bf16.mxu0 0
  %1503 = vmatpush1.bf16.xpose.msra.mxu0 0
  %1504 = vmatprep.subr.bf16.mxu0 0
  %1505 = vmatpush1.bf16.xpose.msra.mxu0 0
  %1506 = vmatprep.subr.bf16.mxu0 0
  %1507 = vmatpush1.bf16.xpose.msra.mxu0 0
  %1508 = vmatprep.subr.bf16.mxu0 0
  %1509 = vmatpush1.bf16.xpose.msra.mxu0 0
  %1510 = vmatprep.subr.bf16.mxu0 0
  %1511 = vmatpush1.bf16.xpose.msra.mxu0 0
  %1512 = vmatprep.subr.bf16.mxu0 0
  %1513 = vmatpush1.bf16.xpose.msra.mxu0 0
  %1514 = vmatprep.subr.bf16.mxu0 0
  %1515 = vmatpush1.bf16.xpose.msra.mxu0 0
  %1516 = vmatprep.mubr.bf16.mxu0 0
  %1517 = vmatmul.mubr.bf16.gmra.mrb[0].mxu0 %v1479
  %v1518 = vpop.f32.mrb[0].mxu0
  %v1519 = vadd.f32 0.0, %v1518
  %v1520 = vpop.f32.mrb[0].mxu0
  %v1521 = vpop.f32.mrb[0].mxu0
  %v1522 = vpop.f32.mrb[0].mxu0
  %1523 = vdwg.mxu0
  %v1524 = vmul.f32 %v1469, 0.25
  %v1525 = vmul.f32 %v1519, 0.25
  %v1526 = vadd.f32 %v1524, %v434
  %v1527 = vadd.f32 %v1525, %v438
  %v1528 = vsel %vm443, %v1526, -inf
  %1529 = vmax.xlane.f32.xlu0 %v1528
  %v1530 = vpop.xlane.xlu0 %1529
  %v1531 = vsel %vm443, %v1527, -inf
  %1532 = vmax.xlane.f32.xlu0 %v1531
  %v1533 = vpop.xlane.xlu0 %1532
  %v1534 = vsub.f32 %v1526, %v1530
  %v1535 = vsub.f32 %v1527, %v1533
  %v1536 = vmul.f32 %v1534, 1.442695
  %v1537 = vpow.pop %v1536
  %v1538 = vmul.f32 %v1535, 1.442695
  %v1539 = vpow.pop %v1538
  %v1540 = vsel %vm443, %v1537, 0.0
  %1541 = vadd.xlane.f32.xlu0 %v1540
  %v1542 = vpop.xlane.xlu0 %1541
  %v1543 = vsel %vm443, %v1539, 0.0
  %1544 = vadd.xlane.f32.xlu0 %v1543
  %v1545 = vpop.xlane.xlu0 %1544
  %v1546 = vrcp.pop %v1542
  %v1547 = vrcp.pop %v1545
  %v1548 = vmul.f32 %v1537, %v1546
  %v1549 = vmul.f32 %v1539, %v1547
  %v1550 = vpack.c.bf16 %v1548, %v1548
  %v1551 = vpack.c.bf16 %v1549, %v1549
  %1552 = vrot.lane.b32.xlu0 %v1200, 48
  %v1553 = vpop.permute.xlu0 %1552
  %v1555 = vsel %vm443, %v1550, 0
  %v1558 = vsel %vm473, %v1553, 0
  %1560 = vmatprep.subr.bf16.mxu0 0
  %1561 = vmatpush1.bf16.msra.mxu0 %v1558
  %1562 = vmatprep.subr.bf16.mxu0 0
  %1563 = vmatpush1.bf16.msra.mxu0 0
  %1564 = vmatprep.subr.bf16.mxu0 0
  %1565 = vmatpush1.bf16.msra.mxu0 0
  %1566 = vmatprep.subr.bf16.mxu0 0
  %1567 = vmatpush1.bf16.msra.mxu0 0
  %1568 = vmatprep.subr.bf16.mxu0 0
  %1569 = vmatpush1.bf16.msra.mxu0 0
  %1570 = vmatprep.subr.bf16.mxu0 0
  %1571 = vmatpush1.bf16.msra.mxu0 0
  %1572 = vmatprep.subr.bf16.mxu0 0
  %1573 = vmatpush1.bf16.msra.mxu0 0
  %1574 = vmatprep.subr.bf16.mxu0 0
  %1575 = vmatpush1.bf16.msra.mxu0 0
  %1576 = vmatprep.subr.bf16.mxu0 0
  %1577 = vmatpush1.bf16.msra.mxu0 0
  %1578 = vmatprep.subr.bf16.mxu0 0
  %1579 = vmatpush1.bf16.msra.mxu0 0
  %1580 = vmatprep.subr.bf16.mxu0 0
  %1581 = vmatpush1.bf16.msra.mxu0 0
  %1582 = vmatprep.subr.bf16.mxu0 0
  %1583 = vmatpush1.bf16.msra.mxu0 0
  %1584 = vmatprep.subr.bf16.mxu0 0
  %1585 = vmatpush1.bf16.msra.mxu0 0
  %1586 = vmatprep.subr.bf16.mxu0 0
  %1587 = vmatpush1.bf16.msra.mxu0 0
  %1588 = vmatprep.subr.bf16.mxu0 0
  %1589 = vmatpush1.bf16.msra.mxu0 0
  %1590 = vmatprep.subr.bf16.mxu0 0
  %1591 = vmatpush1.bf16.msra.mxu0 0
  %1592 = vmatprep.mubr.bf16.mxu0 0
  %1593 = vmatmul.mubr.bf16.gmra.mrb[0].mxu0 %v1555
  %v1594 = vpop.f32.mrb[0].mxu0
  %v1595 = vadd.f32 0.0, %v1594
  %v1596 = vpop.f32.mrb[0].mxu0
  %v1597 = vpop.f32.mrb[0].mxu0
  %v1598 = vpop.f32.mrb[0].mxu0
  %1599 = vdwg.mxu0
  %1600 = vrot.lane.b32.xlu0 %v1201, 48
  %v1601 = vpop.permute.xlu0 %1600
  %v1603 = vsel %vm443, %v1551, 0
  %v1606 = vsel %vm473, %v1601, 0
  %1608 = vmatprep.subr.bf16.mxu0 0
  %1609 = vmatpush1.bf16.msra.mxu0 %v1606
  %1610 = vmatprep.subr.bf16.mxu0 0
  %1611 = vmatpush1.bf16.msra.mxu0 0
  %1612 = vmatprep.subr.bf16.mxu0 0
  %1613 = vmatpush1.bf16.msra.mxu0 0
  %1614 = vmatprep.subr.bf16.mxu0 0
  %1615 = vmatpush1.bf16.msra.mxu0 0
  %1616 = vmatprep.subr.bf16.mxu0 0
  %1617 = vmatpush1.bf16.msra.mxu0 0
  %1618 = vmatprep.subr.bf16.mxu0 0
  %1619 = vmatpush1.bf16.msra.mxu0 0
  %1620 = vmatprep.subr.bf16.mxu0 0
  %1621 = vmatpush1.bf16.msra.mxu0 0
  %1622 = vmatprep.subr.bf16.mxu0 0
  %1623 = vmatpush1.bf16.msra.mxu0 0
  %1624 = vmatprep.subr.bf16.mxu0 0
  %1625 = vmatpush1.bf16.msra.mxu0 0
  %1626 = vmatprep.subr.bf16.mxu0 0
  %1627 = vmatpush1.bf16.msra.mxu0 0
  %1628 = vmatprep.subr.bf16.mxu0 0
  %1629 = vmatpush1.bf16.msra.mxu0 0
  %1630 = vmatprep.subr.bf16.mxu0 0
  %1631 = vmatpush1.bf16.msra.mxu0 0
  %1632 = vmatprep.subr.bf16.mxu0 0
  %1633 = vmatpush1.bf16.msra.mxu0 0
  %1634 = vmatprep.subr.bf16.mxu0 0
  %1635 = vmatpush1.bf16.msra.mxu0 0
  %1636 = vmatprep.subr.bf16.mxu0 0
  %1637 = vmatpush1.bf16.msra.mxu0 0
  %1638 = vmatprep.subr.bf16.mxu0 0
  %1639 = vmatpush1.bf16.msra.mxu0 0
  %1640 = vmatprep.mubr.bf16.mxu0 0
  %1641 = vmatmul.mubr.bf16.gmra.mrb[0].mxu0 %v1603
  %v1642 = vpop.f32.mrb[0].mxu0
  %v1643 = vadd.f32 0.0, %v1642
  %v1644 = vpop.f32.mrb[0].mxu0
  %v1645 = vpop.f32.mrb[0].mxu0
  %v1646 = vpop.f32.mrb[0].mxu0
  %1647 = vdwg.mxu0
  %1650 = vrot.lane.b32.xlu0 %v1595, 16
  %v1651 = vpop.permute.xlu0 %1650
  %1652 = vrot.lane.b32.xlu0 %v1643, 16
  %v1653 = vpop.permute.xlu0 %1652
  %v1656 = vsel %vm333, %v1371, %v1651
  %v1657 = vsel %vm333, %v1419, %v1653
  %v1658 = vpack.c.bf16 %v1657, %v1656
  %s1659 = scalar_lea.vmem %s9, 16
  %v1660 = vld [vmem:[%s1659] sm:$0xf]
  %v1661 = vld [vmem:[%s1659 + $0x4] sm:$0xf]
  %v1662 = vld [vmem:[%s1659 + $0x8] sm:$0xf]
  %v1663 = vld [vmem:[%s1659 + $0xc] sm:$0xf]
  %s1664 = scalar_lea.vmem %s10, 1
  %v1665 = vld [vmem:[%s1664] sm:$0x1]
  %v1667 = vlaneseq
  %v1668 = vshrl.u32 %v1667, 7
  %v1669 = vsub.s32 0, %v1668
  %v1670 = vrot.slane %v1665, %v1669
  %v1676 = vunpack.c.l.b16 %v1660
  %v1677 = vunpack.c.l.b16 %v1661
  %v1678 = vunpack.c.l.b16 %v1662
  %v1679 = vunpack.c.l.b16 %v1663
  %v1680 = vpack.c.b16 %v1677, %v1676
  %v1681 = vpack.c.b16 %v1679, %v1678
  %v1685 = vsel %vm187, %v1658, 0
  %1687 = vmatprep.subr.bf16.mxu0 0
  %1688 = vmatpush1.bf16.msra.mxu0 %v1680
  %1689 = vmatprep.subr.bf16.mxu0 0
  %1690 = vmatpush1.bf16.msra.mxu0 %v1681
  %1691 = vmatprep.subr.bf16.mxu0 0
  %1692 = vmatpush1.bf16.msra.mxu0 0
  %1693 = vmatprep.subr.bf16.mxu0 0
  %1694 = vmatpush1.bf16.msra.mxu0 0
  %1695 = vmatprep.subr.bf16.mxu0 0
  %1696 = vmatpush1.bf16.msra.mxu0 0
  %1697 = vmatprep.subr.bf16.mxu0 0
  %1698 = vmatpush1.bf16.msra.mxu0 0
  %1699 = vmatprep.subr.bf16.mxu0 0
  %1700 = vmatpush1.bf16.msra.mxu0 0
  %1701 = vmatprep.subr.bf16.mxu0 0
  %1702 = vmatpush1.bf16.msra.mxu0 0
  %1703 = vmatprep.subr.bf16.mxu0 0
  %1704 = vmatpush1.bf16.msra.mxu0 0
  %1705 = vmatprep.subr.bf16.mxu0 0
  %1706 = vmatpush1.bf16.msra.mxu0 0
  %1707 = vmatprep.subr.bf16.mxu0 0
  %1708 = vmatpush1.bf16.msra.mxu0 0
  %1709 = vmatprep.subr.bf16.mxu0 0
  %1710 = vmatpush1.bf16.msra.mxu0 0
  %1711 = vmatprep.subr.bf16.mxu0 0
  %1712 = vmatpush1.bf16.msra.mxu0 0
  %1713 = vmatprep.subr.bf16.mxu0 0
  %1714 = vmatpush1.bf16.msra.mxu0 0
  %1715 = vmatprep.subr.bf16.mxu0 0
  %1716 = vmatpush1.bf16.msra.mxu0 0
  %1717 = vmatprep.subr.bf16.mxu0 0
  %1718 = vmatpush1.bf16.msra.mxu0 0
  %1719 = vmatprep.mubr.bf16.mxu0 0
  %1720 = vmatmul.mubr.bf16.gmra.mrb[0].mxu0 %v1685
  %v1721 = vpop.f32.mrb[0].mxu0
  %v1722 = vadd.f32 %v1670, %v1721
  %v1723 = vpop.f32.mrb[0].mxu0
  %v1724 = vpop.f32.mrb[0].mxu0
  %v1725 = vadd.f32 %v1670, %v1724
  %v1726 = vpop.f32.mrb[0].mxu0
  %1727 = vdwg.mxu0
  %v1728 = vadd.f32 %v1128, %v1722
  %v1729 = vadd.f32 %v1129, %v1725
  %s1730 = scalar_lea.vmem %s11, 1
  %v1731 = vld [vmem:[%s1730] sm:$0x1]
  %s1732 = scalar_lea.vmem %s12, 1
  %v1733 = vld [vmem:[%s1732] sm:$0x1]
  %v1734 = vsel %vm187, %v1728, 0.0
  %1735 = vadd.xlane.f32.xlu0 %v1734
  %v1736 = vpop.xlane.xlu0 %1735
  %v1737 = vsel %vm187, %v1729, 0.0
  %1738 = vadd.xlane.f32.xlu0 %v1737
  %v1739 = vpop.xlane.xlu0 %1738
  %v1740 = vmul.f32 %v1736, %v194
  %v1741 = vmul.f32 %v1739, %v194
  %v1742 = vsub.f32 %v1728, %v1740
  %v1743 = vsub.f32 %v1729, %v1741
  %v1744 = vmul.f32 %v1742, %v1742
  %v1745 = vmul.f32 %v1743, %v1743
  %v1746 = vsel %vm187, %v1744, 0.0
  %1747 = vadd.xlane.f32.xlu0 %v1746
  %v1748 = vpop.xlane.xlu0 %1747
  %v1749 = vsel %vm187, %v1745, 0.0
  %1750 = vadd.xlane.f32.xlu0 %v1749
  %v1751 = vpop.xlane.xlu0 %1750
  %v1752 = vmul.f32 %v1748, %v194
  %v1753 = vmul.f32 %v1751, %v194
  %v1754 = vadd.f32 %v1752, 1e-12
  %v1755 = vadd.f32 %v1753, 1e-12
  %v1756 = vrsqrt.pop %v1754
  %v1757 = vrsqrt.pop %v1755
  %v1758 = vmul.f32 %v1742, %v1756
  %v1759 = vmul.f32 %v1743, %v1757
  %v1761 = vlaneseq
  %v1762 = vshrl.u32 %v1761, 7
  %v1763 = vsub.s32 0, %v1762
  %v1764 = vrot.slane %v1731, %v1763
  %v1766 = vmul.f32 %v1758, %v1764
  %v1767 = vmul.f32 %v1759, %v1764
  %v1769 = vlaneseq
  %v1770 = vshrl.u32 %v1769, 7
  %v1771 = vsub.s32 0, %v1770
  %v1772 = vrot.slane %v1733, %v1771
  %v1774 = vadd.f32 %v1766, %v1772
  %v1775 = vadd.f32 %v1767, %v1772
  %v1776 = vpack.c.bf16 %v1775, %v1774
  %s1777 = scalar_lea.vmem %s13, 16
  %v1778 = vld [vmem:[%s1777] sm:$0xf]
  %v1779 = vld [vmem:[%s1777 + $0x4] sm:$0xf]
  %v1780 = vld [vmem:[%s1777 + $0x8] sm:$0xf]
  %v1781 = vld [vmem:[%s1777 + $0xc] sm:$0xf]
  %s1782 = scalar_lea.vmem %s14, 1
  %v1783 = vld [vmem:[%s1782] sm:$0x1]
  %v1785 = vlaneseq
  %v1786 = vshrl.u32 %v1785, 7
  %v1787 = vsub.s32 0, %v1786
  %v1788 = vrot.slane %v1783, %v1787
  %v1794 = vunpack.c.l.b16 %v1778
  %v1795 = vunpack.c.l.b16 %v1779
  %v1796 = vunpack.c.l.b16 %v1780
  %v1797 = vunpack.c.l.b16 %v1781
  %v1798 = vpack.c.b16 %v1795, %v1794
  %v1799 = vpack.c.b16 %v1797, %v1796
  %v1803 = vsel %vm187, %v1776, 0
  %1805 = vmatprep.subr.bf16.mxu0 0
  %1806 = vmatpush1.bf16.msra.mxu0 %v1798
  %1807 = vmatprep.subr.bf16.mxu0 0
  %1808 = vmatpush1.bf16.msra.mxu0 %v1799
  %1809 = vmatprep.subr.bf16.mxu0 0
  %1810 = vmatpush1.bf16.msra.mxu0 0
  %1811 = vmatprep.subr.bf16.mxu0 0
  %1812 = vmatpush1.bf16.msra.mxu0 0
  %1813 = vmatprep.subr.bf16.mxu0 0
  %1814 = vmatpush1.bf16.msra.mxu0 0
  %1815 = vmatprep.subr.bf16.mxu0 0
  %1816 = vmatpush1.bf16.msra.mxu0 0
  %1817 = vmatprep.subr.bf16.mxu0 0
  %1818 = vmatpush1.bf16.msra.mxu0 0
  %1819 = vmatprep.subr.bf16.mxu0 0
  %1820 = vmatpush1.bf16.msra.mxu0 0
  %1821 = vmatprep.subr.bf16.mxu0 0
  %1822 = vmatpush1.bf16.msra.mxu0 0
  %1823 = vmatprep.subr.bf16.mxu0 0
  %1824 = vmatpush1.bf16.msra.mxu0 0
  %1825 = vmatprep.subr.bf16.mxu0 0
  %1826 = vmatpush1.bf16.msra.mxu0 0
  %1827 = vmatprep.subr.bf16.mxu0 0
  %1828 = vmatpush1.bf16.msra.mxu0 0
  %1829 = vmatprep.subr.bf16.mxu0 0
  %1830 = vmatpush1.bf16.msra.mxu0 0
  %1831 = vmatprep.subr.bf16.mxu0 0
  %1832 = vmatpush1.bf16.msra.mxu0 0
  %1833 = vmatprep.subr.bf16.mxu0 0
  %1834 = vmatpush1.bf16.msra.mxu0 0
  %1835 = vmatprep.subr.bf16.mxu0 0
  %1836 = vmatpush1.bf16.msra.mxu0 0
  %1837 = vmatprep.mubr.bf16.mxu0 0
  %1838 = vmatmul.mubr.bf16.gmra.mrb[0].mxu0 %v1803
  %v1839 = vpop.f32.mrb[0].mxu0
  %v1840 = vadd.f32 %v1788, %v1839
  %v1841 = vpop.f32.mrb[0].mxu0
  %v1842 = vpop.f32.mrb[0].mxu0
  %v1843 = vadd.f32 %v1788, %v1842
  %v1844 = vpop.f32.mrb[0].mxu0
  %1845 = vdwg.mxu0
  %v1846 = vmul.f32 %v1840, %v1840
  %v1847 = vmul.f32 %v1843, %v1843
  %v1848 = vmul.f32 %v1840, %v1846
  %v1849 = vmul.f32 %v1843, %v1847
  %v1850 = vmul.f32 %v1848, 0.044715
  %v1851 = vmul.f32 %v1849, 0.044715
  %v1852 = vadd.f32 %v1840, %v1850
  %v1853 = vadd.f32 %v1843, %v1851
  %v1854 = vmul.f32 %v1852, 0.7978846
  %v1855 = vmul.f32 %v1853, 0.7978846
  %v1856 = vtanh.pop %v1854
  %v1857 = vtanh.pop %v1855
  %v1858 = vadd.f32 %v1856, 1.0
  %v1859 = vadd.f32 %v1857, 1.0
  %v1860 = vmul.f32 %v1858, 0.5
  %v1861 = vmul.f32 %v1859, 0.5
  %v1862 = vmul.f32 %v1840, %v1860
  %v1863 = vmul.f32 %v1843, %v1861
  %v1864 = vpack.c.bf16 %v1863, %v1862
  %s1865 = scalar_lea.vmem %s15, 32
  %v1866 = vld [vmem:[%s1865] sm:$0xf]
  %v1867 = vld [vmem:[%s1865 + $0x4] sm:$0xf]
  %v1868 = vld [vmem:[%s1865 + $0x8] sm:$0xf]
  %v1869 = vld [vmem:[%s1865 + $0xc] sm:$0xf]
  %v1870 = vld [vmem:[%s1865 + $0x10] sm:$0xf]
  %v1871 = vld [vmem:[%s1865 + $0x14] sm:$0xf]
  %v1872 = vld [vmem:[%s1865 + $0x18] sm:$0xf]
  %v1873 = vld [vmem:[%s1865 + $0x1c] sm:$0xf]
  %s1874 = scalar_lea.vmem %s16, 1
  %v1875 = vld [vmem:[%s1874] sm:$0x1]
  %v1877 = vlaneseq
  %v1878 = vshrl.u32 %v1877, 7
  %v1879 = vsub.s32 0, %v1878
  %v1880 = vrot.slane %v1875, %v1879
  %v1890 = vunpack.c.l.b16 %v1866
  %v1891 = vunpack.c.l.b16 %v1867
  %v1892 = vunpack.c.l.b16 %v1868
  %v1893 = vunpack.c.l.b16 %v1869
  %v1894 = vunpack.c.l.b16 %v1870
  %v1895 = vunpack.c.l.b16 %v1871
  %v1896 = vunpack.c.l.b16 %v1872
  %v1897 = vunpack.c.l.b16 %v1873
  %v1898 = vpack.c.b16 %v1891, %v1890
  %v1899 = vpack.c.b16 %v1893, %v1892
  %v1900 = vpack.c.b16 %v1895, %v1894
  %v1901 = vpack.c.b16 %v1897, %v1896
  %v1907 = vsel %vm1039, %v1864, 0
  %1909 = vmatprep.subr.bf16.mxu0 0
  %1910 = vmatpush1.bf16.msra.mxu0 %v1898
  %1911 = vmatprep.subr.bf16.mxu0 0
  %1912 = vmatpush1.bf16.msra.mxu0 %v1899
  %1913 = vmatprep.subr.bf16.mxu0 0
  %1914 = vmatpush1.bf16.msra.mxu0 %v1900
  %1915 = vmatprep.subr.bf16.mxu0 0
  %1916 = vmatpush1.bf16.msra.mxu0 %v1901
  %1917 = vmatprep.subr.bf16.mxu0 0
  %1918 = vmatpush1.bf16.msra.mxu0 0
  %1919 = vmatprep.subr.bf16.mxu0 0
  %1920 = vmatpush1.bf16.msra.mxu0 0
  %1921 = vmatprep.subr.bf16.mxu0 0
  %1922 = vmatpush1.bf16.msra.mxu0 0
  %1923 = vmatprep.subr.bf16.mxu0 0
  %1924 = vmatpush1.bf16.msra.mxu0 0
  %1925 = vmatprep.subr.bf16.mxu0 0
  %1926 = vmatpush1.bf16.msra.mxu0 0
  %1927 = vmatprep.subr.bf16.mxu0 0
  %1928 = vmatpush1.bf16.msra.mxu0 0
  %1929 = vmatprep.subr.bf16.mxu0 0
  %1930 = vmatpush1.bf16.msra.mxu0 0
  %1931 = vmatprep.subr.bf16.mxu0 0
  %1932 = vmatpush1.bf16.msra.mxu0 0
  %1933 = vmatprep.subr.bf16.mxu0 0
  %1934 = vmatpush1.bf16.msra.mxu0 0
  %1935 = vmatprep.subr.bf16.mxu0 0
  %1936 = vmatpush1.bf16.msra.mxu0 0
  %1937 = vmatprep.subr.bf16.mxu0 0
  %1938 = vmatpush1.bf16.msra.mxu0 0
  %1939 = vmatprep.subr.bf16.mxu0 0
  %1940 = vmatpush1.bf16.msra.mxu0 0
  %1941 = vmatprep.mubr.bf16.mxu0 0
  %1942 = vmatmul.mubr.bf16.gmra.mrb[0].mxu0 %v1907
  %v1943 = vpop.f32.mrb[0].mxu0
  %v1944 = vadd.f32 %v1880, %v1943
  %v1945 = vpop.f32.mrb[0].mxu0
  %v1946 = vpop.f32.mrb[0].mxu0
  %v1947 = vadd.f32 %v1880, %v1946
  %v1948 = vpop.f32.mrb[0].mxu0
  %1949 = vdwg.mxu0
  %v1950 = vadd.f32 %v1774, %v1944
  %v1951 = vadd.f32 %v1775, %v1947
  %s1952 = scalar_lea.vmem %s17, 1
  %v1953 = vld [vmem:[%s1952] sm:$0x1]
  %s1954 = scalar_lea.vmem %s18, 1
  %v1955 = vld [vmem:[%s1954] sm:$0x1]
  %v1956 = vsel %vm187, %v1950, 0.0
  %1957 = vadd.xlane.f32.xlu0 %v1956
  %v1958 = vpop.xlane.xlu0 %1957
  %v1959 = vsel %vm187, %v1951, 0.0
  %1960 = vadd.xlane.f32.xlu0 %v1959
  %v1961 = vpop.xlane.xlu0 %1960
  %v1962 = vmul.f32 %v1958, %v194
  %v1963 = vmul.f32 %v1961, %v194
  %v1964 = vsub.f32 %v1950, %v1962
  %v1965 = vsub.f32 %v1951, %v1963
  %v1966 = vmul.f32 %v1964, %v1964
  %v1967 = vmul.f32 %v1965, %v1965
  %v1968 = vsel %vm187, %v1966, 0.0
  %1969 = vadd.xlane.f32.xlu0 %v1968
  %v1970 = vpop.xlane.xlu0 %1969
  %v1971 = vsel %vm187, %v1967, 0.0
  %1972 = vadd.xlane.f32.xlu0 %v1971
  %v1973 = vpop.xlane.xlu0 %1972
  %v1974 = vmul.f32 %v1970, %v194
  %v1975 = vmul.f32 %v1973, %v194
  %v1976 = vadd.f32 %v1974, 1e-12
  %v1977 = vadd.f32 %v1975, 1e-12
  %v1978 = vrsqrt.pop %v1976
  %v1979 = vrsqrt.pop %v1977
  %v1980 = vmul.f32 %v1964, %v1978
  %v1981 = vmul.f32 %v1965, %v1979
  %v1983 = vlaneseq
  %v1984 = vshrl.u32 %v1983, 7
  %v1985 = vsub.s32 0, %v1984
  %v1986 = vrot.slane %v1953, %v1985
  %v1988 = vmul.f32 %v1980, %v1986
  %v1989 = vmul.f32 %v1981, %v1986
  %v1991 = vlaneseq
  %v1992 = vshrl.u32 %v1991, 7
  %v1993 = vsub.s32 0, %v1992
  %v1994 = vrot.slane %v1955, %v1993
  %v1996 = vadd.f32 %v1988, %v1994
  %v1997 = vadd.f32 %v1989, %v1994
  %v1998 = vld [vmem:[%s2] sm:$0xff]
  %v1999 = vld [vmem:[%s2 + $0x8] sm:$0xf]
  %2000 = vset.pattern.permute.xlu0 0
  %2001 = vperm.xlu0 %2000, %v1998
  %v2002 = vpop.permute.xlu0 %2001
  %2003 = vset.pattern.permute.xlu0 0
  %2004 = vperm.xlu0 %2003, %v1999
  %v2005 = vpop.permute.xlu0 %2004
  %vm2006 = vcmp.eq.s32.totalorder %v76, %v2002
  %vm2007 = vcmp.eq.s32.totalorder %v76, %v2005
  %v2008 = vsel %vm2006, 1, 0
  %v2009 = vsel %vm2007, 1, 0
  %v2010 = vcvt.s32.f32 %v2008
  %v2011 = vcvt.s32.f32 %v2009
  %v2013 = vsel %vm333, %v2010, 0
  %v2016 = vsel %vm333, %v2011, 0
  %2018 = vmatprep.subr.mxu0 0.0
  %2019 = vmatpush1.msra.mxu0 %v1996
  %2020 = vmatprep.subr.mxu0 0.0
  %2021 = vmatpush1.msra.mxu0 %v1997
  %2022 = vmatprep.subr.mxu0 0.0
  %2023 = vmatpush1.msra.mxu0 0.0
  %2024 = vmatprep.subr.mxu0 0.0
  %2025 = vmatpush1.msra.mxu0 0.0
  %2026 = vmatprep.subr.mxu0 0.0
  %2027 = vmatpush1.msra.mxu0 0.0
  %2028 = vmatprep.subr.mxu0 0.0
  %2029 = vmatpush1.msra.mxu0 0.0
  %2030 = vmatprep.subr.mxu0 0.0
  %2031 = vmatpush1.msra.mxu0 0.0
  %2032 = vmatprep.subr.mxu0 0.0
  %2033 = vmatpush1.msra.mxu0 0.0
  %2034 = vmatprep.subr.mxu0 0.0
  %2035 = vmatpush1.msra.mxu0 0.0
  %2036 = vmatprep.subr.mxu0 0.0
  %2037 = vmatpush1.msra.mxu0 0.0
  %2038 = vmatprep.subr.mxu0 0.0
  %2039 = vmatpush1.msra.mxu0 0.0
  %2040 = vmatprep.subr.mxu0 0.0
  %2041 = vmatpush1.msra.mxu0 0.0
  %2042 = vmatprep.subr.mxu0 0.0
  %2043 = vmatpush1.msra.mxu0 0.0
  %2044 = vmatprep.subr.mxu0 0.0
  %2045 = vmatpush1.msra.mxu0 0.0
  %2046 = vmatprep.subr.mxu0 0.0
  %2047 = vmatpush1.msra.mxu0 0.0
  %2048 = vmatprep.subr.mxu0 0.0
  %2049 = vmatpush1.msra.mxu0 0.0
  %2050 = vmatprep.subr.mxu0 0.0
  %2051 = vmatpush1.msra.mxu0 0.0
  %2052 = vmatprep.subr.mxu0 0.0
  %2053 = vmatpush1.msra.mxu0 0.0
  %2054 = vmatprep.subr.mxu0 0.0
  %2055 = vmatpush1.msra.mxu0 0.0
  %2056 = vmatprep.subr.mxu0 0.0
  %2057 = vmatpush1.msra.mxu0 0.0
  %2058 = vmatprep.subr.mxu0 0.0
  %2059 = vmatpush1.msra.mxu0 0.0
  %2060 = vmatprep.subr.mxu0 0.0
  %2061 = vmatpush1.msra.mxu0 0.0
  %2062 = vmatprep.subr.mxu0 0.0
  %2063 = vmatpush1.msra.mxu0 0.0
  %2064 = vmatprep.subr.mxu0 0.0
  %2065 = vmatpush1.msra.mxu0 0.0
  %2066 = vmatprep.subr.mxu0 0.0
  %2067 = vmatpush1.msra.mxu0 0.0
  %2068 = vmatprep.subr.mxu0 0.0
  %2069 = vmatpush1.msra.mxu0 0.0
  %2070 = vmatprep.subr.mxu0 0.0
  %2071 = vmatpush1.msra.mxu0 0.0
  %2072 = vmatprep.subr.mxu0 0.0
  %2073 = vmatpush1.msra.mxu0 0.0
  %2074 = vmatprep.subr.mxu0 0.0
  %2075 = vmatpush1.msra.mxu0 0.0
  %2076 = vmatprep.subr.mxu0 0.0
  %2077 = vmatpush1.msra.mxu0 0.0
  %2078 = vmatprep.subr.mxu0 0.0
  %2079 = vmatpush1.msra.mxu0 0.0
  %2080 = vmatprep.subr.mxu0 0.0
  %2081 = vmatpush1.msra.mxu0 0.0
  %2082 = vmatprep.mubr.f32.mxu0 0.0
  %2083 = vmatmul.mubr.f32.gmra.mrb[0].mxu0 %v2013
  %v2084 = vpop.f32.mrb[0].mxu0
  %v2085 = vadd.f32 0.0, %v2084
  %v2086 = vpop.f32.mrb[0].mxu0
  %2087 = vmatprep.mubr.f32.mxu0 0.0
  %2088 = vmatmul.mubr.f32.gmra.mrb[0].mxu0 %v2016
  %v2089 = vpop.f32.mrb[0].mxu0
  %v2090 = vadd.f32 0.0, %v2089
  %v2091 = vpop.f32.mrb[0].mxu0
  %2092 = vdwg.mxu0
  %v2093 = vpack.c.bf16 %v2090, %v2085
  %v2094 = vld [vmem:[%s19] sm:$0xf]
  %v2095 = vld [vmem:[%s19 + $0x4] sm:$0xf]
  %v2096 = vld [vmem:[%s19 + $0x8] sm:$0xf]
  %v2097 = vld [vmem:[%s19 + $0xc] sm:$0xf]
  %v2098 = vld [vmem:[%s20] sm:$0x1]
  %v2100 = vlaneseq
  %v2101 = vshrl.u32 %v2100, 7
  %v2102 = vsub.s32 0, %v2101
  %v2103 = vrot.slane %v2098, %v2102
  %v2109 = vunpack.c.l.b16 %v2094
  %v2110 = vunpack.c.l.b16 %v2095
  %v2111 = vunpack.c.l.b16 %v2096
  %v2112 = vunpack.c.l.b16 %v2097
  %v2113 = vpack.c.b16 %v2110, %v2109
  %v2114 = vpack.c.b16 %v2112, %v2111
  %v2118 = vsel %vm187, %v2093, 0
  %2120 = vmatprep.subr.bf16.mxu0 0
  %2121 = vmatpush1.bf16.msra.mxu0 %v2113
  %2122 = vmatprep.subr.bf16.mxu0 0
  %2123 = vmatpush1.bf16.msra.mxu0 %v2114
  %2124 = vmatprep.subr.bf16.mxu0 0
  %2125 = vmatpush1.bf16.msra.mxu0 0
  %2126 = vmatprep.subr.bf16.mxu0 0
  %2127 = vmatpush1.bf16.msra.mxu0 0
  %2128 = vmatprep.subr.bf16.mxu0 0
  %2129 = vmatpush1.bf16.msra.mxu0 0
  %2130 = vmatprep.subr.bf16.mxu0 0
  %2131 = vmatpush1.bf16.msra.mxu0 0
  %2132 = vmatprep.subr.bf16.mxu0 0
  %2133 = vmatpush1.bf16.msra.mxu0 0
  %2134 = vmatprep.subr.bf16.mxu0 0
  %2135 = vmatpush1.bf16.msra.mxu0 0
  %2136 = vmatprep.subr.bf16.mxu0 0
  %2137 = vmatpush1.bf16.msra.mxu0 0
  %2138 = vmatprep.subr.bf16.mxu0 0
  %2139 = vmatpush1.bf16.msra.mxu0 0
  %2140 = vmatprep.subr.bf16.mxu0 0
  %2141 = vmatpush1.bf16.msra.mxu0 0
  %2142 = vmatprep.subr.bf16.mxu0 0
  %2143 = vmatpush1.bf16.msra.mxu0 0
  %2144 = vmatprep.subr.bf16.mxu0 0
  %2145 = vmatpush1.bf16.msra.mxu0 0
  %2146 = vmatprep.subr.bf16.mxu0 0
  %2147 = vmatpush1.bf16.msra.mxu0 0
  %2148 = vmatprep.subr.bf16.mxu0 0
  %2149 = vmatpush1.bf16.msra.mxu0 0
  %2150 = vmatprep.subr.bf16.mxu0 0
  %2151 = vmatpush1.bf16.msra.mxu0 0
  %2152 = vmatprep.mubr.bf16.mxu0 0
  %2153 = vmatmul.mubr.bf16.gmra.mrb[0].mxu0 %v2118
  %v2154 = vpop.f32.mrb[0].mxu0
  %v2155 = vadd.f32 %v2103, %v2154
  %v2156 = vpop.f32.mrb[0].mxu0
  %v2157 = vpop.f32.mrb[0].mxu0
  %v2158 = vadd.f32 %v2103, %v2157
  %v2159 = vpop.f32.mrb[0].mxu0
  %2160 = vdwg.mxu0
  %v2161 = vpack.c.bf16 %v2158, %v2155
  %v2162 = vld [vmem:[%s21] sm:$0xf]
  %v2163 = vld [vmem:[%s21 + $0x4] sm:$0xf]
  %v2164 = vld [vmem:[%s21 + $0x8] sm:$0xf]
  %v2165 = vld [vmem:[%s21 + $0xc] sm:$0xf]
  %v2166 = vld [vmem:[%s22] sm:$0x1]
  %v2168 = vlaneseq
  %v2169 = vshrl.u32 %v2168, 7
  %v2170 = vsub.s32 0, %v2169
  %v2171 = vrot.slane %v2166, %v2170
  %v2177 = vunpack.c.l.b16 %v2162
  %v2178 = vunpack.c.l.b16 %v2163
  %v2179 = vunpack.c.l.b16 %v2164
  %v2180 = vunpack.c.l.b16 %v2165
  %v2181 = vpack.c.b16 %v2178, %v2177
  %v2182 = vpack.c.b16 %v2180, %v2179
  %v2186 = vsel %vm187, %v2161, 0
  %2188 = vmatprep.subr.bf16.mxu0 0
  %2189 = vmatpush1.bf16.msra.mxu0 %v2181
  %2190 = vmatprep.subr.bf16.mxu0 0
  %2191 = vmatpush1.bf16.msra.mxu0 %v2182
  %2192 = vmatprep.subr.bf16.mxu0 0
  %2193 = vmatpush1.bf16.msra.mxu0 0
  %2194 = vmatprep.subr.bf16.mxu0 0
  %2195 = vmatpush1.bf16.msra.mxu0 0
  %2196 = vmatprep.subr.bf16.mxu0 0
  %2197 = vmatpush1.bf16.msra.mxu0 0
  %2198 = vmatprep.subr.bf16.mxu0 0
  %2199 = vmatpush1.bf16.msra.mxu0 0
  %2200 = vmatprep.subr.bf16.mxu0 0
  %2201 = vmatpush1.bf16.msra.mxu0 0
  %2202 = vmatprep.subr.bf16.mxu0 0
  %2203 = vmatpush1.bf16.msra.mxu0 0
  %2204 = vmatprep.subr.bf16.mxu0 0
  %2205 = vmatpush1.bf16.msra.mxu0 0
  %2206 = vmatprep.subr.bf16.mxu0 0
  %2207 = vmatpush1.bf16.msra.mxu0 0
  %2208 = vmatprep.subr.bf16.mxu0 0
  %2209 = vmatpush1.bf16.msra.mxu0 0
  %2210 = vmatprep.subr.bf16.mxu0 0
  %2211 = vmatpush1.bf16.msra.mxu0 0
  %2212 = vmatprep.subr.bf16.mxu0 0
  %2213 = vmatpush1.bf16.msra.mxu0 0
  %2214 = vmatprep.subr.bf16.mxu0 0
  %2215 = vmatpush1.bf16.msra.mxu0 0
  %2216 = vmatprep.subr.bf16.mxu0 0
  %2217 = vmatpush1.bf16.msra.mxu0 0
  %2218 = vmatprep.subr.bf16.mxu0 0
  %2219 = vmatpush1.bf16.msra.mxu0 0
  %2220 = vmatprep.mubr.bf16.mxu0 0
  %2221 = vmatmul.mubr.bf16.gmra.mrb[0].mxu0 %v2186
  %v2222 = vpop.f32.mrb[0].mxu0
  %v2223 = vadd.f32 %v2171, %v2222
  %v2224 = vpop.f32.mrb[0].mxu0
  %v2225 = vpop.f32.mrb[0].mxu0
  %v2226 = vadd.f32 %v2171, %v2225
  %v2227 = vpop.f32.mrb[0].mxu0
  %2228 = vdwg.mxu0
  %2229 = vst [vmem:[%s23] sm:$0xff] %v2223
  %2230 = vst [vmem:[%s23 + $0x8] sm:$0xf] %v2226
  // Predicated region
  $region94: #{bert_ner_forward.1} parent=0 // pred_check
    _
  $region95: #{bert_ner_forward.1} parent=0 // pred_check_branch
    %2232 = sbr.rel (0) target = $region97
  $region96: #{bert_ner_forward.1} parent=0 // pred_region
    _
  $region97: #{bert_ner_forward.1} parent=0 // pred_fallthru
    _
  // Predicated region
  $region98: #{bert_ner_forward.1} parent=0 // pred_check
    _
  $region99: #{bert_ner_forward.1} parent=0 // pred_check_branch
    %2234 = sbr.rel (0) target = $region101
  $region100: #{bert_ner_forward.1} parent=0 // pred_region
    _
  $region101: #{bert_ner_forward.1} parent=0 // pred_fallthru
    _

</llo_original>
